<compile_context>
chip_gen: v7x
topology: tpu7x:2x2x1
jax: 0.10.0
libtpu: 0.0.40
codegen_flags: <defaults>
</compile_context>

<pallas_src>
import math

import numpy as np
import jax
import jax.numpy as jnp
from jax.experimental import pallas as pl
from jax.experimental.pallas import tpu as pltpu

# ---------------------------------------------------------------------------
# Model hyper-parameters (small, consistent with the module's constructor).
# ---------------------------------------------------------------------------
VOCAB_SIZE = 100
VOCAB_PAD = 128          # embedding table padded to a lane-aligned row count
D_MODEL = 32
NUM_HEADS = 4
HEAD_DIM = D_MODEL // NUM_HEADS
D_FF = 64
NUM_LAYERS = 2
MAX_LEN = 64
EPS = 1e-5               # nn.LayerNorm default eps

BATCH = 2
SEQ = 8
BS = BATCH * SEQ

SLAB_WIDTH = 128         # one f32 lane tile wide
NEG_INF = -1e9           # cross-batch score mask (exp underflows to exactly 0)


# ---------------------------------------------------------------------------
# Parameter-slab layout: every item starts at an 8-aligned row, lane offset 0.
# ---------------------------------------------------------------------------
def _build_slab_layout():
    layout = {}
    row = 0

    def add(name, nrows):
        nonlocal row
        layout[name] = row
        row += ((nrows + 7) // 8) * 8    # 8-align every section

    add("emb", VOCAB_PAD)                # (128, 32)  pre-scaled embedding
    add("pe", BS)                        # (16, 32)   tiled positional encoding
    add("head_mask", NUM_HEADS * BS)     # (64, 32)   -> (H, BS, D) 0/1 lane mask
    add("batch_bias", BS)                # (16, 16)   0 / -1e9 cross-batch mask
    for l in range(NUM_LAYERS):
        add(f"l{l}_wqkv", D_MODEL)       # (32, 96)   [wq*s | wk | wv]
        add(f"l{l}_bqkv", 1)             # (1, 96)
        add(f"l{l}_wo", D_MODEL)         # (32, 32)
        add(f"l{l}_bo", 1)               # (1, 32)
        add(f"l{l}_w1", D_MODEL)         # (32, 64)
        add(f"l{l}_b1", 1)               # (1, 64)
        add(f"l{l}_w2", D_FF)            # (64, 32)
        add(f"l{l}_b2", 1)               # (1, 32)
        add(f"l{l}_ln1_g", 1)
        add(f"l{l}_ln1_b", 1)
        add(f"l{l}_ln2_g", 1)
        add(f"l{l}_ln2_b", 1)
    add("norm_g", 1)
    add("norm_b", 1)
    return layout, row


SLAB_LAYOUT, SLAB_ROWS = _build_slab_layout()


# ---------------------------------------------------------------------------
# Shared in-kernel helpers
# ---------------------------------------------------------------------------
def _layernorm(x, gamma, beta):
    """LayerNorm over the last axis (biased variance, like nn.LayerNorm)."""
    mean = jnp.mean(x, axis=-1, keepdims=True)
    var = jnp.mean((x - mean) ** 2, axis=-1, keepdims=True)
    return (x - mean) * jax.lax.rsqrt(var + EPS) * gamma + beta


def _slab(slab_ref, name, nrows, ncols):
    """Static-sliced load of one packed parameter from the slab."""
    r = SLAB_LAYOUT[name]
    return slab_ref[r:r + nrows, 0:ncols]


# ---------------------------------------------------------------------------
# Single fused Pallas kernel: embedding -> PE -> N encoder layers -> LayerNorm
# ---------------------------------------------------------------------------
def fused_encoder_kernel(tok_ref, slab_ref, o_ref):
    # --- Embedding lookup as one-hot matmul (table pre-scaled by sqrt(D)) ---
    tok = tok_ref[...]                                              # (BS, 1) i32
    vocab_ids = jax.lax.broadcasted_iota(jnp.int32, (BS, VOCAB_PAD), 1)
    onehot = (vocab_ids == tok).astype(jnp.float32)                 # (BS, 128)
    emb = _slab(slab_ref, "emb", VOCAB_PAD, D_MODEL)                # (128, D)
    x = jnp.dot(onehot, emb, preferred_element_type=jnp.float32)    # (BS, D)

    # --- Positional encoding (pre-tiled to (BS, D) at prep time) ------------
    x = x + _slab(slab_ref, "pe", BS, D_MODEL)

    # --- Attention constants, loaded once and reused by both layers ---------
    # hm3[h, m, j] = 1.0 iff lane j belongs to head h (heads stay on lanes).
    hm3 = _slab(slab_ref, "head_mask", NUM_HEADS * BS, D_MODEL).reshape(
        NUM_HEADS, BS, D_MODEL)
    # bb[m, m'] = 0 if rows m, m' are in the same batch element, else -1e9.
    bb = _slab(slab_ref, "batch_bias", BS, BS)

    for l in range(NUM_LAYERS):                 # static unroll over layers
        pref = f"l{l}_"
        wqkv = _slab(slab_ref, pref + "wqkv", D_MODEL, 3 * D_MODEL)
        bqkv = _slab(slab_ref, pref + "bqkv", 1, 3 * D_MODEL)
        wo = _slab(slab_ref, pref + "wo", D_MODEL, D_MODEL)
        bo = _slab(slab_ref, pref + "bo", 1, D_MODEL)
        w1 = _slab(slab_ref, pref + "w1", D_MODEL, D_FF)
        b1 = _slab(slab_ref, pref + "b1", 1, D_FF)
        w2 = _slab(slab_ref, pref + "w2", D_FF, D_MODEL)
        b2 = _slab(slab_ref, pref + "b2", 1, D_MODEL)
        g1 = _slab(slab_ref, pref + "ln1_g", 1, D_MODEL)
        be1 = _slab(slab_ref, pref + "ln1_b", 1, D_MODEL)
        g2 = _slab(slab_ref, pref + "ln2_g", 1, D_MODEL)
        be2 = _slab(slab_ref, pref + "ln2_b", 1, D_MODEL)

        # --- Fused QKV projection: single MXU matmul (q pre-scaled) --------
        qkv = jnp.dot(x, wqkv, preferred_element_type=jnp.float32) + bqkv
        q = qkv[:, 0:D_MODEL]                                       # (BS, D)
        k = qkv[:, D_MODEL:2 * D_MODEL]
        v = qkv[:, 2 * D_MODEL:3 * D_MODEL]

        # --- Head-masked batched attention (no slice/concat relayouts) ------
        # Broadcast-multiply keeps heads on the lane axis; head h only sees
        # its own 8 lanes, so the per-head dot products are exact.
        qh = q * hm3                                                # (H, BS, D)
        kh = k * hm3
        vh = v * hm3
        s = jnp.einsum("hqd,hkd->hqk", qh, kh,
                       preferred_element_type=jnp.float32)          # (H, BS, BS)
        # TODO(synk): user-supplied attention mask would be added here too.
        s = s + bb                              # kill cross-batch key positions
        s = s - jnp.max(s, axis=-1, keepdims=True)
        pr = jnp.exp(s)
        pr = pr * pl.reciprocal(jnp.sum(pr, axis=-1, keepdims=True), approx=True)
        ctx = jnp.einsum("hqk,hkd->hqd", pr, vh,
                         preferred_element_type=jnp.float32)        # (H, BS, D)
        # Each head's context lives on disjoint lanes -> sum over heads is
        # exactly the head-concatenated context (no transpose/concat needed).
        ctx2 = ctx[0]
        for h in range(1, NUM_HEADS):
            ctx2 = ctx2 + ctx[h]                                    # (BS, D)

        attn = jnp.dot(ctx2, wo, preferred_element_type=jnp.float32) + bo

        # --- Residual + LayerNorm 1 (dropout = identity in eval) ------------
        h1 = _layernorm(x + attn, g1, be1)

        # --- Position-wise feed-forward --------------------------------------
        ff = jnp.dot(h1, w1, preferred_element_type=jnp.float32) + b1
        ff = jnp.maximum(ff, 0.0)
        ff = jnp.dot(ff, w2, preferred_element_type=jnp.float32) + b2

        # --- Residual + LayerNorm 2 ------------------------------------------
        x = _layernorm(h1 + ff, g2, be2)

    # --- Final LayerNorm, 2-D lane-dense store --------------------------------
    y = _layernorm(x,
                   _slab(slab_ref, "norm_g", 1, D_MODEL),
                   _slab(slab_ref, "norm_b", 1, D_MODEL))
    o_ref[...] = y                                                  # (BS, D)


# ---------------------------------------------------------------------------
# Wrapper: one pallas_call, 2 inputs, everything resident in VMEM, grid=()
# ---------------------------------------------------------------------------
def encoder_forward(tokens, slab):
    """Full Encoder.forward (mask=None) in a single fused Pallas kernel."""
    tok2d = tokens.reshape(BS, 1).astype(jnp.int32)
    out2d = pl.pallas_call(
        fused_encoder_kernel,
        out_shape=jax.ShapeDtypeStruct((BS, D_MODEL), jnp.float32),
        in_specs=[pl.BlockSpec(memory_space=pltpu.MemorySpace.VMEM),
                  pl.BlockSpec(memory_space=pltpu.MemorySpace.VMEM)],
        out_specs=pl.BlockSpec(memory_space=pltpu.MemorySpace.VMEM),
    )(tok2d, slab)
    return out2d.reshape(BATCH, SEQ, D_MODEL)    # free metadata reshape


encoder_forward_jit = jax.jit(encoder_forward)


# ---------------------------------------------------------------------------
# One-time parameter prep: fold scales, fuse QKV, pack everything into a slab.
# ---------------------------------------------------------------------------
def prepare_slab(params, pe):
    slab = np.zeros((SLAB_ROWS, SLAB_WIDTH), np.float32)

    def put(name, arr):
        arr = np.asarray(arr, np.float32)
        if arr.ndim == 1:
            arr = arr[None, :]
        r = SLAB_LAYOUT[name]
        slab[r:r + arr.shape[0], :arr.shape[1]] = arr

    # Embedding (pre-scaled by sqrt(d_model), vocab padded to 128 rows).
    emb = np.asarray(params["embedding"], np.float32) * math.sqrt(D_MODEL)
    put("emb", np.pad(emb, ((0, VOCAB_PAD - VOCAB_SIZE), (0, 0))))
    # Positional encoding tiled to (BS, D).
    put("pe", np.tile(np.asarray(pe[:SEQ], np.float32), (BATCH, 1)))

    # Head lane-masks: row h*BS + m keeps only head h's 8 lanes.
    hm = np.zeros((NUM_HEADS * BS, D_MODEL), np.float32)
    for h in range(NUM_HEADS):
        hm[h * BS:(h + 1) * BS, h * HEAD_DIM:(h + 1) * HEAD_DIM] = 1.0
    put("head_mask", hm)

    # Cross-batch score bias (0 within a batch element, -1e9 across).
    bidx = np.arange(BS) // SEQ
    bb = np.where(bidx[:, None] == bidx[None, :], 0.0, NEG_INF).astype(np.float32)
    put("batch_bias", bb)

    scale = 1.0 / math.sqrt(HEAD_DIM)
    for l, lp in enumerate(params["layers"]):
        pref = f"l{l}_"
        wq = np.asarray(lp["wq"], np.float32) * scale       # fold score scale
        bq = np.asarray(lp["bq"], np.float32) * scale
        put(pref + "wqkv",
            np.concatenate([wq, np.asarray(lp["wk"], np.float32),
                            np.asarray(lp["wv"], np.float32)], axis=1))
        put(pref + "bqkv",
            np.concatenate([bq, np.asarray(lp["bk"], np.float32),
                            np.asarray(lp["bv"], np.float32)], axis=1))
        put(pref + "wo", lp["wo"]);   put(pref + "bo", lp["bo"])
        put(pref + "w1", lp["w1"]);   put(pref + "b1", lp["b1"])
        put(pref + "w2", lp["w2"]);   put(pref + "b2", lp["b2"])
        put(pref + "ln1_g", lp["ln1_g"]); put(pref + "ln1_b", lp["ln1_b"])
        put(pref + "ln2_g", lp["ln2_g"]); put(pref + "ln2_b", lp["ln2_b"])

    put("norm_g", params["norm_g"])
    put("norm_b", params["norm_b"])
    return jnp.asarray(slab)


# ---------------------------------------------------------------------------
# Pure-JAX reference (for a correctness sanity check) — uses the RAW params.
# ---------------------------------------------------------------------------
def encoder_ref(tokens, params, pe):
    x = params["embedding"][tokens] * math.sqrt(D_MODEL) + pe[: tokens.shape[1]][None]
    for lp in params["layers"]:
        q = x @ lp["wq"] + lp["bq"]
        k = x @ lp["wk"] + lp["bk"]
        v = x @ lp["wv"] + lp["bv"]
        B, S, _ = x.shape
        qh = q.reshape(B, S, NUM_HEADS, HEAD_DIM).transpose(0, 2, 1, 3)
        kh = k.reshape(B, S, NUM_HEADS, HEAD_DIM).transpose(0, 2, 1, 3)
        vh = v.reshape(B, S, NUM_HEADS, HEAD_DIM).transpose(0, 2, 1, 3)
        s = jnp.einsum("bhqd,bhkd->bhqk", qh, kh) / math.sqrt(HEAD_DIM)
        p = jax.nn.softmax(s, axis=-1)
        o = jnp.einsum("bhqk,bhkd->bhqd", p, vh).transpose(0, 2, 1, 3).reshape(B, S, D_MODEL)
        o = o @ lp["wo"] + lp["bo"]
        h1 = _layernorm(x + o, lp["ln1_g"], lp["ln1_b"])
        ff = jnp.maximum(h1 @ lp["w1"] + lp["b1"], 0.0) @ lp["w2"] + lp["b2"]
        x = _layernorm(h1 + ff, lp["ln2_g"], lp["ln2_b"])
    return _layernorm(x, params["norm_g"], params["norm_b"])


# ---------------------------------------------------------------------------
# Deterministic parameter construction
# ---------------------------------------------------------------------------
def sinusoidal_pe(max_len, d_model):
    pos = jnp.arange(max_len, dtype=jnp.float32)[:, None]
    div = jnp.exp(jnp.arange(0, d_model, 2, dtype=jnp.float32)
                  * (-math.log(10000.0) / d_model))
    pe = jnp.zeros((max_len, d_model), jnp.float32)
    pe = pe.at[:, 0::2].set(jnp.sin(pos * div))
    pe = pe.at[:, 1::2].set(jnp.cos(pos * div))
    return pe


def init_params(key):
    def dense(k, fan_in, fan_out):
        return (jax.random.normal(k, (fan_in, fan_out), jnp.float32) * 0.02,
                jnp.zeros((1, fan_out), jnp.float32))

    keys = jax.random.split(key, 1 + NUM_LAYERS)
    params = {
        "embedding": jax.random.normal(keys[0], (VOCAB_SIZE, D_MODEL), jnp.float32) * 0.02,
        "norm_g": jnp.ones((1, D_MODEL), jnp.float32),
        "norm_b": jnp.zeros((1, D_MODEL), jnp.float32),
        "layers": [],
    }
    for l in range(NUM_LAYERS):
        lk = jax.random.split(keys[1 + l], 6)
        wq, bq = dense(lk[0], D_MODEL, D_MODEL)
        wk, bk = dense(lk[1], D_MODEL, D_MODEL)
        wv, bv = dense(lk[2], D_MODEL, D_MODEL)
        wo, bo = dense(lk[3], D_MODEL, D_MODEL)
        w1, b1 = dense(lk[4], D_MODEL, D_FF)
        w2, b2 = dense(lk[5], D_FF, D_MODEL)
        params["layers"].append({
            "wq": wq, "bq": bq, "wk": wk, "bk": bk, "wv": wv, "bv": bv,
            "wo": wo, "bo": bo, "w1": w1, "b1": b1, "w2": w2, "b2": b2,
            "ln1_g": jnp.ones((1, D_MODEL), jnp.float32),
            "ln1_b": jnp.zeros((1, D_MODEL), jnp.float32),
            "ln2_g": jnp.ones((1, D_MODEL), jnp.float32),
            "ln2_b": jnp.zeros((1, D_MODEL), jnp.float32),
        })
    return params


# ---------------------------------------------------------------------------
if __name__ == "__main__":
    key = jax.random.PRNGKey(0)
    pk, tk = jax.random.split(key)
    params = init_params(pk)
    pe = sinusoidal_pe(MAX_LEN, D_MODEL)
    tokens = jax.random.randint(tk, (BATCH, SEQ), 0, VOCAB_SIZE, dtype=jnp.int32)

    slab = prepare_slab(params, pe)        # one-time fold / fuse / pack

    out = encoder_forward_jit(tokens, slab)
    out = jax.block_until_ready(out)

    ref = jax.block_until_ready(encoder_ref(tokens, params, pe))
    assert out.shape == (BATCH, SEQ, D_MODEL)
    assert jnp.allclose(out, ref, atol=2e-3, rtol=2e-3), "mismatch vs JAX reference"

    print("KERNEL_OK")
</pallas_src>

<mosaic_0001>
module attributes {stable_mosaic.version = 11 : i64} {
  func.func @fused_encoder_kernel(%arg0: memref<16x1xi32, #tpu.memory_space<vmem>>, %arg1: memref<688x128xf32, #tpu.memory_space<vmem>>, %arg2: memref<16x32xf32, #tpu.memory_space<vmem>>) attributes {dimension_semantics = [], scalar_prefetch = 0 : i64, scratch_operands = 0 : i64, tpu.core_type = #tpu.core_type<tc>} {
    %c0 = arith.constant 0 : index
    %c0_0 = arith.constant 0 : index
    %0 = vector.load %arg0[%c0, %c0_0] : memref<16x1xi32, #tpu.memory_space<vmem>>, vector<16x1xi32>
    %1 = tpu.iota {dimensions = array<i32: 1>} : vector<16x128xi32>
    %2 = vector.broadcast %0 : vector<16x1xi32> to vector<16x128xi32>
    %3 = arith.cmpi eq, %1, %2 : vector<16x128xi32>
    %4 = arith.extui %3 : vector<16x128xi1> to vector<16x128xi32>
    %5 = arith.sitofp %4 : vector<16x128xi32> to vector<16x128xf32>
    %c0_1 = arith.constant 0 : index
    %c0_2 = arith.constant 0 : index
    %6 = vector.load %arg1[%c0_1, %c0_2] : memref<688x128xf32, #tpu.memory_space<vmem>>, vector<128x32xf32>
    %cst = arith.constant dense<0.000000e+00> : vector<16x32xf32>
    %7 = tpu.matmul %5, %6, %cst {dimension_numbers = #tpu.dot_dimension_numbers<[1], [0], [0], [1], [0, 0, 1, 1], [], []>} : vector<16x128xf32>, vector<128x32xf32>, vector<16x32xf32> -> vector<16x32xf32>
    %c128 = arith.constant 128 : index
    %c0_3 = arith.constant 0 : index
    %8 = vector.load %arg1[%c128, %c0_3] : memref<688x128xf32, #tpu.memory_space<vmem>>, vector<16x32xf32>
    %9 = arith.addf %7, %8 : vector<16x32xf32>
    %c144 = arith.constant 144 : index
    %c0_4 = arith.constant 0 : index
    %10 = vector.load %arg1[%c144, %c0_4] : memref<688x128xf32, #tpu.memory_space<vmem>>, vector<64x32xf32>
    %11 = vector.shape_cast %10 : vector<64x32xf32> to vector<4x16x32xf32>
    %c208 = arith.constant 208 : index
    %c0_5 = arith.constant 0 : index
    %12 = vector.load %arg1[%c208, %c0_5] : memref<688x128xf32, #tpu.memory_space<vmem>>, vector<16x16xf32>
    %c224 = arith.constant 224 : index
    %c0_6 = arith.constant 0 : index
    %13 = vector.load %arg1[%c224, %c0_6] : memref<688x128xf32, #tpu.memory_space<vmem>>, vector<32x96xf32>
    %c256 = arith.constant 256 : index
    %c0_7 = arith.constant 0 : index
    %14 = vector.load %arg1[%c256, %c0_7] : memref<688x128xf32, #tpu.memory_space<vmem>>, vector<1x96xf32>
    %c264 = arith.constant 264 : index
    %c0_8 = arith.constant 0 : index
    %15 = vector.load %arg1[%c264, %c0_8] : memref<688x128xf32, #tpu.memory_space<vmem>>, vector<32x32xf32>
    %c296 = arith.constant 296 : index
    %c0_9 = arith.constant 0 : index
    %16 = vector.load %arg1[%c296, %c0_9] : memref<688x128xf32, #tpu.memory_space<vmem>>, vector<1x32xf32>
    %c304 = arith.constant 304 : index
    %c0_10 = arith.constant 0 : index
    %17 = vector.load %arg1[%c304, %c0_10] : memref<688x128xf32, #tpu.memory_space<vmem>>, vector<32x64xf32>
    %c336 = arith.constant 336 : index
    %c0_11 = arith.constant 0 : index
    %18 = vector.load %arg1[%c336, %c0_11] : memref<688x128xf32, #tpu.memory_space<vmem>>, vector<1x64xf32>
    %c344 = arith.constant 344 : index
    %c0_12 = arith.constant 0 : index
    %19 = vector.load %arg1[%c344, %c0_12] : memref<688x128xf32, #tpu.memory_space<vmem>>, vector<64x32xf32>
    %c408 = arith.constant 408 : index
    %c0_13 = arith.constant 0 : index
    %20 = vector.load %arg1[%c408, %c0_13] : memref<688x128xf32, #tpu.memory_space<vmem>>, vector<1x32xf32>
    %c416 = arith.constant 416 : index
    %c0_14 = arith.constant 0 : index
    %21 = vector.load %arg1[%c416, %c0_14] : memref<688x128xf32, #tpu.memory_space<vmem>>, vector<1x32xf32>
    %c424 = arith.constant 424 : index
    %c0_15 = arith.constant 0 : index
    %22 = vector.load %arg1[%c424, %c0_15] : memref<688x128xf32, #tpu.memory_space<vmem>>, vector<1x32xf32>
    %c432 = arith.constant 432 : index
    %c0_16 = arith.constant 0 : index
    %23 = vector.load %arg1[%c432, %c0_16] : memref<688x128xf32, #tpu.memory_space<vmem>>, vector<1x32xf32>
    %c440 = arith.constant 440 : index
    %c0_17 = arith.constant 0 : index
    %24 = vector.load %arg1[%c440, %c0_17] : memref<688x128xf32, #tpu.memory_space<vmem>>, vector<1x32xf32>
    %cst_18 = arith.constant dense<0.000000e+00> : vector<16x96xf32>
    %25 = tpu.matmul %9, %13, %cst_18 {dimension_numbers = #tpu.dot_dimension_numbers<[1], [0], [0], [1], [0, 0, 1, 1], [], []>} : vector<16x32xf32>, vector<32x96xf32>, vector<16x96xf32> -> vector<16x96xf32>
    %26 = vector.broadcast %14 : vector<1x96xf32> to vector<16x96xf32>
    %27 = arith.addf %25, %26 : vector<16x96xf32>
    %28 = vector.extract_strided_slice %27 {offsets = [0, 0], sizes = [16, 32], strides = [1, 1]} : vector<16x96xf32> to vector<16x32xf32>
    %29 = vector.extract_strided_slice %27 {offsets = [0, 32], sizes = [16, 32], strides = [1, 1]} : vector<16x96xf32> to vector<16x32xf32>
    %30 = vector.extract_strided_slice %27 {offsets = [0, 64], sizes = [16, 32], strides = [1, 1]} : vector<16x96xf32> to vector<16x32xf32>
    %31 = vector.shape_cast %28 : vector<16x32xf32> to vector<1x16x32xf32>
    %32 = vector.broadcast %31 : vector<1x16x32xf32> to vector<4x16x32xf32>
    %33 = arith.mulf %32, %11 : vector<4x16x32xf32>
    %34 = vector.shape_cast %29 : vector<16x32xf32> to vector<1x16x32xf32>
    %35 = vector.broadcast %34 : vector<1x16x32xf32> to vector<4x16x32xf32>
    %36 = arith.mulf %35, %11 : vector<4x16x32xf32>
    %37 = vector.shape_cast %30 : vector<16x32xf32> to vector<1x16x32xf32>
    %38 = vector.broadcast %37 : vector<1x16x32xf32> to vector<4x16x32xf32>
    %39 = arith.mulf %38, %11 : vector<4x16x32xf32>
    "tpu.trace_start"() <{level = 10 : i32, message = "hqd,hkd->hqk"}> : () -> ()
    %cst_19 = arith.constant dense<0.000000e+00> : vector<4x16x16xf32>
    %40 = tpu.matmul %33, %36, %cst_19 {dimension_numbers = #tpu.dot_dimension_numbers<[2], [2], [1], [1], [0, 0, 0, 1, 1, 1], [0], [0]>} : vector<4x16x32xf32>, vector<4x16x32xf32>, vector<4x16x16xf32> -> vector<4x16x16xf32>
    "tpu.trace_stop"() : () -> ()
    %41 = vector.shape_cast %12 : vector<16x16xf32> to vector<1x16x16xf32>
    %42 = vector.broadcast %41 : vector<1x16x16xf32> to vector<4x16x16xf32>
    %43 = arith.addf %40, %42 : vector<4x16x16xf32>
    %cst_20 = arith.constant dense<0xFF800000> : vector<4x16xf32>
    %44 = vector.multi_reduction <maximumf>, %43, %cst_20 [2] : vector<4x16x16xf32> to vector<4x16xf32>
    %45 = vector.shape_cast %44 : vector<4x16xf32> to vector<4x16x1xf32>
    %46 = vector.broadcast %45 : vector<4x16x1xf32> to vector<4x16x16xf32>
    %47 = arith.subf %43, %46 : vector<4x16x16xf32>
    %48 = math.exp %47 : vector<4x16x16xf32>
    %cst_21 = arith.constant dense<0.000000e+00> : vector<4x16xf32>
    %49 = vector.multi_reduction <add>, %48, %cst_21 [2] : vector<4x16x16xf32> to vector<4x16xf32>
    %50 = vector.shape_cast %49 : vector<4x16xf32> to vector<4x16x1xf32>
    %51 = tpu.reciprocal %50 {approx = true} : vector<4x16x1xf32> -> vector<4x16x1xf32>
    %52 = vector.broadcast %51 : vector<4x16x1xf32> to vector<4x16x16xf32>
    %53 = arith.mulf %48, %52 : vector<4x16x16xf32>
    "tpu.trace_start"() <{level = 10 : i32, message = "hqk,hkd->hqd"}> : () -> ()
    %cst_22 = arith.constant dense<0.000000e+00> : vector<4x16x32xf32>
    %54 = tpu.matmul %53, %39, %cst_22 {dimension_numbers = #tpu.dot_dimension_numbers<[2], [1], [1], [2], [0, 0, 0, 1, 1, 2], [0], [0]>} : vector<4x16x16xf32>, vector<4x16x32xf32>, vector<4x16x32xf32> -> vector<4x16x32xf32>
    "tpu.trace_stop"() : () -> ()
    %55 = vector.extract_strided_slice %54 {offsets = [0, 0, 0], sizes = [1, 16, 32], strides = [1, 1, 1]} : vector<4x16x32xf32> to vector<1x16x32xf32>
    %56 = vector.shape_cast %55 : vector<1x16x32xf32> to vector<16x32xf32>
    %57 = vector.extract_strided_slice %54 {offsets = [1, 0, 0], sizes = [1, 16, 32], strides = [1, 1, 1]} : vector<4x16x32xf32> to vector<1x16x32xf32>
    %58 = vector.shape_cast %57 : vector<1x16x32xf32> to vector<16x32xf32>
    %59 = arith.addf %56, %58 : vector<16x32xf32>
    %60 = vector.extract_strided_slice %54 {offsets = [2, 0, 0], sizes = [1, 16, 32], strides = [1, 1, 1]} : vector<4x16x32xf32> to vector<1x16x32xf32>
    %61 = vector.shape_cast %60 : vector<1x16x32xf32> to vector<16x32xf32>
    %62 = arith.addf %59, %61 : vector<16x32xf32>
    %63 = vector.extract_strided_slice %54 {offsets = [3, 0, 0], sizes = [1, 16, 32], strides = [1, 1, 1]} : vector<4x16x32xf32> to vector<1x16x32xf32>
    %64 = vector.shape_cast %63 : vector<1x16x32xf32> to vector<16x32xf32>
    %65 = arith.addf %62, %64 : vector<16x32xf32>
    %cst_23 = arith.constant dense<0.000000e+00> : vector<16x32xf32>
    %66 = tpu.matmul %65, %15, %cst_23 {dimension_numbers = #tpu.dot_dimension_numbers<[1], [0], [0], [1], [0, 0, 1, 1], [], []>} : vector<16x32xf32>, vector<32x32xf32>, vector<16x32xf32> -> vector<16x32xf32>
    %67 = vector.broadcast %16 : vector<1x32xf32> to vector<16x32xf32>
    %68 = arith.addf %66, %67 : vector<16x32xf32>
    %69 = arith.addf %9, %68 : vector<16x32xf32>
    %cst_24 = arith.constant dense<0.000000e+00> : vector<16xf32>
    %70 = vector.multi_reduction <add>, %69, %cst_24 [1] : vector<16x32xf32> to vector<16xf32>
    %71 = vector.shape_cast %70 : vector<16xf32> to vector<16x1xf32>
    %cst_25 = arith.constant 3.200000e+01 : f32
    %72 = vector.broadcast %cst_25 : f32 to vector<16x1xf32>
    %73 = arith.divf %71, %72 : vector<16x1xf32>
    %74 = vector.broadcast %73 : vector<16x1xf32> to vector<16x32xf32>
    %75 = arith.subf %69, %74 : vector<16x32xf32>
    %76 = arith.mulf %75, %75 : vector<16x32xf32>
    %cst_26 = arith.constant dense<0.000000e+00> : vector<16xf32>
    %77 = vector.multi_reduction <add>, %76, %cst_26 [1] : vector<16x32xf32> to vector<16xf32>
    %78 = vector.shape_cast %77 : vector<16xf32> to vector<16x1xf32>
    %cst_27 = arith.constant 3.200000e+01 : f32
    %79 = vector.broadcast %cst_27 : f32 to vector<16x1xf32>
    %80 = arith.divf %78, %79 : vector<16x1xf32>
    %81 = vector.broadcast %73 : vector<16x1xf32> to vector<16x32xf32>
    %82 = arith.subf %69, %81 : vector<16x32xf32>
    %cst_28 = arith.constant 9.99999974E-6 : f32
    %83 = vector.broadcast %cst_28 : f32 to vector<16x1xf32>
    %84 = arith.addf %80, %83 : vector<16x1xf32>
    %85 = math.rsqrt %84 : vector<16x1xf32>
    %86 = vector.broadcast %85 : vector<16x1xf32> to vector<16x32xf32>
    %87 = arith.mulf %82, %86 : vector<16x32xf32>
    %88 = vector.broadcast %21 : vector<1x32xf32> to vector<16x32xf32>
    %89 = arith.mulf %87, %88 : vector<16x32xf32>
    %90 = vector.broadcast %22 : vector<1x32xf32> to vector<16x32xf32>
    %91 = arith.addf %89, %90 : vector<16x32xf32>
    %cst_29 = arith.constant dense<0.000000e+00> : vector<16x64xf32>
    %92 = tpu.matmul %91, %17, %cst_29 {dimension_numbers = #tpu.dot_dimension_numbers<[1], [0], [0], [1], [0, 0, 1, 1], [], []>} : vector<16x32xf32>, vector<32x64xf32>, vector<16x64xf32> -> vector<16x64xf32>
    %93 = vector.broadcast %18 : vector<1x64xf32> to vector<16x64xf32>
    %94 = arith.addf %92, %93 : vector<16x64xf32>
    %cst_30 = arith.constant 0.000000e+00 : f32
    %95 = vector.broadcast %cst_30 : f32 to vector<16x64xf32>
    %96 = arith.maximumf %94, %95 : vector<16x64xf32>
    %cst_31 = arith.constant dense<0.000000e+00> : vector<16x32xf32>
    %97 = tpu.matmul %96, %19, %cst_31 {dimension_numbers = #tpu.dot_dimension_numbers<[1], [0], [0], [1], [0, 0, 1, 1], [], []>} : vector<16x64xf32>, vector<64x32xf32>, vector<16x32xf32> -> vector<16x32xf32>
    %98 = vector.broadcast %20 : vector<1x32xf32> to vector<16x32xf32>
    %99 = arith.addf %97, %98 : vector<16x32xf32>
    %100 = arith.addf %91, %99 : vector<16x32xf32>
    %cst_32 = arith.constant dense<0.000000e+00> : vector<16xf32>
    %101 = vector.multi_reduction <add>, %100, %cst_32 [1] : vector<16x32xf32> to vector<16xf32>
    %102 = vector.shape_cast %101 : vector<16xf32> to vector<16x1xf32>
    %cst_33 = arith.constant 3.200000e+01 : f32
    %103 = vector.broadcast %cst_33 : f32 to vector<16x1xf32>
    %104 = arith.divf %102, %103 : vector<16x1xf32>
    %105 = vector.broadcast %104 : vector<16x1xf32> to vector<16x32xf32>
    %106 = arith.subf %100, %105 : vector<16x32xf32>
    %107 = arith.mulf %106, %106 : vector<16x32xf32>
    %cst_34 = arith.constant dense<0.000000e+00> : vector<16xf32>
    %108 = vector.multi_reduction <add>, %107, %cst_34 [1] : vector<16x32xf32> to vector<16xf32>
    %109 = vector.shape_cast %108 : vector<16xf32> to vector<16x1xf32>
    %cst_35 = arith.constant 3.200000e+01 : f32
    %110 = vector.broadcast %cst_35 : f32 to vector<16x1xf32>
    %111 = arith.divf %109, %110 : vector<16x1xf32>
    %112 = vector.broadcast %104 : vector<16x1xf32> to vector<16x32xf32>
    %113 = arith.subf %100, %112 : vector<16x32xf32>
    %cst_36 = arith.constant 9.99999974E-6 : f32
    %114 = vector.broadcast %cst_36 : f32 to vector<16x1xf32>
    %115 = arith.addf %111, %114 : vector<16x1xf32>
    %116 = math.rsqrt %115 : vector<16x1xf32>
    %117 = vector.broadcast %116 : vector<16x1xf32> to vector<16x32xf32>
    %118 = arith.mulf %113, %117 : vector<16x32xf32>
    %119 = vector.broadcast %23 : vector<1x32xf32> to vector<16x32xf32>
    %120 = arith.mulf %118, %119 : vector<16x32xf32>
    %121 = vector.broadcast %24 : vector<1x32xf32> to vector<16x32xf32>
    %122 = arith.addf %120, %121 : vector<16x32xf32>
    %c448 = arith.constant 448 : index
    %c0_37 = arith.constant 0 : index
    %123 = vector.load %arg1[%c448, %c0_37] : memref<688x128xf32, #tpu.memory_space<vmem>>, vector<32x96xf32>
    %c480 = arith.constant 480 : index
    %c0_38 = arith.constant 0 : index
    %124 = vector.load %arg1[%c480, %c0_38] : memref<688x128xf32, #tpu.memory_space<vmem>>, vector<1x96xf32>
    %c488 = arith.constant 488 : index
    %c0_39 = arith.constant 0 : index
    %125 = vector.load %arg1[%c488, %c0_39] : memref<688x128xf32, #tpu.memory_space<vmem>>, vector<32x32xf32>
    %c520 = arith.constant 520 : index
    %c0_40 = arith.constant 0 : index
    %126 = vector.load %arg1[%c520, %c0_40] : memref<688x128xf32, #tpu.memory_space<vmem>>, vector<1x32xf32>
    %c528 = arith.constant 528 : index
    %c0_41 = arith.constant 0 : index
    %127 = vector.load %arg1[%c528, %c0_41] : memref<688x128xf32, #tpu.memory_space<vmem>>, vector<32x64xf32>
    %c560 = arith.constant 560 : index
    %c0_42 = arith.constant 0 : index
    %128 = vector.load %arg1[%c560, %c0_42] : memref<688x128xf32, #tpu.memory_space<vmem>>, vector<1x64xf32>
    %c568 = arith.constant 568 : index
    %c0_43 = arith.constant 0 : index
    %129 = vector.load %arg1[%c568, %c0_43] : memref<688x128xf32, #tpu.memory_space<vmem>>, vector<64x32xf32>
    %c632 = arith.constant 632 : index
    %c0_44 = arith.constant 0 : index
    %130 = vector.load %arg1[%c632, %c0_44] : memref<688x128xf32, #tpu.memory_space<vmem>>, vector<1x32xf32>
    %c640 = arith.constant 640 : index
    %c0_45 = arith.constant 0 : index
    %131 = vector.load %arg1[%c640, %c0_45] : memref<688x128xf32, #tpu.memory_space<vmem>>, vector<1x32xf32>
    %c648 = arith.constant 648 : index
    %c0_46 = arith.constant 0 : index
    %132 = vector.load %arg1[%c648, %c0_46] : memref<688x128xf32, #tpu.memory_space<vmem>>, vector<1x32xf32>
    %c656 = arith.constant 656 : index
    %c0_47 = arith.constant 0 : index
    %133 = vector.load %arg1[%c656, %c0_47] : memref<688x128xf32, #tpu.memory_space<vmem>>, vector<1x32xf32>
    %c664 = arith.constant 664 : index
    %c0_48 = arith.constant 0 : index
    %134 = vector.load %arg1[%c664, %c0_48] : memref<688x128xf32, #tpu.memory_space<vmem>>, vector<1x32xf32>
    %cst_49 = arith.constant dense<0.000000e+00> : vector<16x96xf32>
    %135 = tpu.matmul %122, %123, %cst_49 {dimension_numbers = #tpu.dot_dimension_numbers<[1], [0], [0], [1], [0, 0, 1, 1], [], []>} : vector<16x32xf32>, vector<32x96xf32>, vector<16x96xf32> -> vector<16x96xf32>
    %136 = vector.broadcast %124 : vector<1x96xf32> to vector<16x96xf32>
    %137 = arith.addf %135, %136 : vector<16x96xf32>
    %138 = vector.extract_strided_slice %137 {offsets = [0, 0], sizes = [16, 32], strides = [1, 1]} : vector<16x96xf32> to vector<16x32xf32>
    %139 = vector.extract_strided_slice %137 {offsets = [0, 32], sizes = [16, 32], strides = [1, 1]} : vector<16x96xf32> to vector<16x32xf32>
    %140 = vector.extract_strided_slice %137 {offsets = [0, 64], sizes = [16, 32], strides = [1, 1]} : vector<16x96xf32> to vector<16x32xf32>
    %141 = vector.shape_cast %138 : vector<16x32xf32> to vector<1x16x32xf32>
    %142 = vector.broadcast %141 : vector<1x16x32xf32> to vector<4x16x32xf32>
    %143 = arith.mulf %142, %11 : vector<4x16x32xf32>
    %144 = vector.shape_cast %139 : vector<16x32xf32> to vector<1x16x32xf32>
    %145 = vector.broadcast %144 : vector<1x16x32xf32> to vector<4x16x32xf32>
    %146 = arith.mulf %145, %11 : vector<4x16x32xf32>
    %147 = vector.shape_cast %140 : vector<16x32xf32> to vector<1x16x32xf32>
    %148 = vector.broadcast %147 : vector<1x16x32xf32> to vector<4x16x32xf32>
    %149 = arith.mulf %148, %11 : vector<4x16x32xf32>
    "tpu.trace_start"() <{level = 10 : i32, message = "hqd,hkd->hqk"}> : () -> ()
    %cst_50 = arith.constant dense<0.000000e+00> : vector<4x16x16xf32>
    %150 = tpu.matmul %143, %146, %cst_50 {dimension_numbers = #tpu.dot_dimension_numbers<[2], [2], [1], [1], [0, 0, 0, 1, 1, 1], [0], [0]>} : vector<4x16x32xf32>, vector<4x16x32xf32>, vector<4x16x16xf32> -> vector<4x16x16xf32>
    "tpu.trace_stop"() : () -> ()
    %151 = vector.shape_cast %12 : vector<16x16xf32> to vector<1x16x16xf32>
    %152 = vector.broadcast %151 : vector<1x16x16xf32> to vector<4x16x16xf32>
    %153 = arith.addf %150, %152 : vector<4x16x16xf32>
    %cst_51 = arith.constant dense<0xFF800000> : vector<4x16xf32>
    %154 = vector.multi_reduction <maximumf>, %153, %cst_51 [2] : vector<4x16x16xf32> to vector<4x16xf32>
    %155 = vector.shape_cast %154 : vector<4x16xf32> to vector<4x16x1xf32>
    %156 = vector.broadcast %155 : vector<4x16x1xf32> to vector<4x16x16xf32>
    %157 = arith.subf %153, %156 : vector<4x16x16xf32>
    %158 = math.exp %157 : vector<4x16x16xf32>
    %cst_52 = arith.constant dense<0.000000e+00> : vector<4x16xf32>
    %159 = vector.multi_reduction <add>, %158, %cst_52 [2] : vector<4x16x16xf32> to vector<4x16xf32>
    %160 = vector.shape_cast %159 : vector<4x16xf32> to vector<4x16x1xf32>
    %161 = tpu.reciprocal %160 {approx = true} : vector<4x16x1xf32> -> vector<4x16x1xf32>
    %162 = vector.broadcast %161 : vector<4x16x1xf32> to vector<4x16x16xf32>
    %163 = arith.mulf %158, %162 : vector<4x16x16xf32>
    "tpu.trace_start"() <{level = 10 : i32, message = "hqk,hkd->hqd"}> : () -> ()
    %cst_53 = arith.constant dense<0.000000e+00> : vector<4x16x32xf32>
    %164 = tpu.matmul %163, %149, %cst_53 {dimension_numbers = #tpu.dot_dimension_numbers<[2], [1], [1], [2], [0, 0, 0, 1, 1, 2], [0], [0]>} : vector<4x16x16xf32>, vector<4x16x32xf32>, vector<4x16x32xf32> -> vector<4x16x32xf32>
    "tpu.trace_stop"() : () -> ()
    %165 = vector.extract_strided_slice %164 {offsets = [0, 0, 0], sizes = [1, 16, 32], strides = [1, 1, 1]} : vector<4x16x32xf32> to vector<1x16x32xf32>
    %166 = vector.shape_cast %165 : vector<1x16x32xf32> to vector<16x32xf32>
    %167 = vector.extract_strided_slice %164 {offsets = [1, 0, 0], sizes = [1, 16, 32], strides = [1, 1, 1]} : vector<4x16x32xf32> to vector<1x16x32xf32>
    %168 = vector.shape_cast %167 : vector<1x16x32xf32> to vector<16x32xf32>
    %169 = arith.addf %166, %168 : vector<16x32xf32>
    %170 = vector.extract_strided_slice %164 {offsets = [2, 0, 0], sizes = [1, 16, 32], strides = [1, 1, 1]} : vector<4x16x32xf32> to vector<1x16x32xf32>
    %171 = vector.shape_cast %170 : vector<1x16x32xf32> to vector<16x32xf32>
    %172 = arith.addf %169, %171 : vector<16x32xf32>
    %173 = vector.extract_strided_slice %164 {offsets = [3, 0, 0], sizes = [1, 16, 32], strides = [1, 1, 1]} : vector<4x16x32xf32> to vector<1x16x32xf32>
    %174 = vector.shape_cast %173 : vector<1x16x32xf32> to vector<16x32xf32>
    %175 = arith.addf %172, %174 : vector<16x32xf32>
    %cst_54 = arith.constant dense<0.000000e+00> : vector<16x32xf32>
    %176 = tpu.matmul %175, %125, %cst_54 {dimension_numbers = #tpu.dot_dimension_numbers<[1], [0], [0], [1], [0, 0, 1, 1], [], []>} : vector<16x32xf32>, vector<32x32xf32>, vector<16x32xf32> -> vector<16x32xf32>
    %177 = vector.broadcast %126 : vector<1x32xf32> to vector<16x32xf32>
    %178 = arith.addf %176, %177 : vector<16x32xf32>
    %179 = arith.addf %122, %178 : vector<16x32xf32>
    %cst_55 = arith.constant dense<0.000000e+00> : vector<16xf32>
    %180 = vector.multi_reduction <add>, %179, %cst_55 [1] : vector<16x32xf32> to vector<16xf32>
    %181 = vector.shape_cast %180 : vector<16xf32> to vector<16x1xf32>
    %cst_56 = arith.constant 3.200000e+01 : f32
    %182 = vector.broadcast %cst_56 : f32 to vector<16x1xf32>
    %183 = arith.divf %181, %182 : vector<16x1xf32>
    %184 = vector.broadcast %183 : vector<16x1xf32> to vector<16x32xf32>
    %185 = arith.subf %179, %184 : vector<16x32xf32>
    %186 = arith.mulf %185, %185 : vector<16x32xf32>
    %cst_57 = arith.constant dense<0.000000e+00> : vector<16xf32>
    %187 = vector.multi_reduction <add>, %186, %cst_57 [1] : vector<16x32xf32> to vector<16xf32>
    %188 = vector.shape_cast %187 : vector<16xf32> to vector<16x1xf32>
    %cst_58 = arith.constant 3.200000e+01 : f32
    %189 = vector.broadcast %cst_58 : f32 to vector<16x1xf32>
    %190 = arith.divf %188, %189 : vector<16x1xf32>
    %191 = vector.broadcast %183 : vector<16x1xf32> to vector<16x32xf32>
    %192 = arith.subf %179, %191 : vector<16x32xf32>
    %cst_59 = arith.constant 9.99999974E-6 : f32
    %193 = vector.broadcast %cst_59 : f32 to vector<16x1xf32>
    %194 = arith.addf %190, %193 : vector<16x1xf32>
    %195 = math.rsqrt %194 : vector<16x1xf32>
    %196 = vector.broadcast %195 : vector<16x1xf32> to vector<16x32xf32>
    %197 = arith.mulf %192, %196 : vector<16x32xf32>
    %198 = vector.broadcast %131 : vector<1x32xf32> to vector<16x32xf32>
    %199 = arith.mulf %197, %198 : vector<16x32xf32>
    %200 = vector.broadcast %132 : vector<1x32xf32> to vector<16x32xf32>
    %201 = arith.addf %199, %200 : vector<16x32xf32>
    %cst_60 = arith.constant dense<0.000000e+00> : vector<16x64xf32>
    %202 = tpu.matmul %201, %127, %cst_60 {dimension_numbers = #tpu.dot_dimension_numbers<[1], [0], [0], [1], [0, 0, 1, 1], [], []>} : vector<16x32xf32>, vector<32x64xf32>, vector<16x64xf32> -> vector<16x64xf32>
    %203 = vector.broadcast %128 : vector<1x64xf32> to vector<16x64xf32>
    %204 = arith.addf %202, %203 : vector<16x64xf32>
    %cst_61 = arith.constant 0.000000e+00 : f32
    %205 = vector.broadcast %cst_61 : f32 to vector<16x64xf32>
    %206 = arith.maximumf %204, %205 : vector<16x64xf32>
    %cst_62 = arith.constant dense<0.000000e+00> : vector<16x32xf32>
    %207 = tpu.matmul %206, %129, %cst_62 {dimension_numbers = #tpu.dot_dimension_numbers<[1], [0], [0], [1], [0, 0, 1, 1], [], []>} : vector<16x64xf32>, vector<64x32xf32>, vector<16x32xf32> -> vector<16x32xf32>
    %208 = vector.broadcast %130 : vector<1x32xf32> to vector<16x32xf32>
    %209 = arith.addf %207, %208 : vector<16x32xf32>
    %210 = arith.addf %201, %209 : vector<16x32xf32>
    %cst_63 = arith.constant dense<0.000000e+00> : vector<16xf32>
    %211 = vector.multi_reduction <add>, %210, %cst_63 [1] : vector<16x32xf32> to vector<16xf32>
    %212 = vector.shape_cast %211 : vector<16xf32> to vector<16x1xf32>
    %cst_64 = arith.constant 3.200000e+01 : f32
    %213 = vector.broadcast %cst_64 : f32 to vector<16x1xf32>
    %214 = arith.divf %212, %213 : vector<16x1xf32>
    %215 = vector.broadcast %214 : vector<16x1xf32> to vector<16x32xf32>
    %216 = arith.subf %210, %215 : vector<16x32xf32>
    %217 = arith.mulf %216, %216 : vector<16x32xf32>
    %cst_65 = arith.constant dense<0.000000e+00> : vector<16xf32>
    %218 = vector.multi_reduction <add>, %217, %cst_65 [1] : vector<16x32xf32> to vector<16xf32>
    %219 = vector.shape_cast %218 : vector<16xf32> to vector<16x1xf32>
    %cst_66 = arith.constant 3.200000e+01 : f32
    %220 = vector.broadcast %cst_66 : f32 to vector<16x1xf32>
    %221 = arith.divf %219, %220 : vector<16x1xf32>
    %222 = vector.broadcast %214 : vector<16x1xf32> to vector<16x32xf32>
    %223 = arith.subf %210, %222 : vector<16x32xf32>
    %cst_67 = arith.constant 9.99999974E-6 : f32
    %224 = vector.broadcast %cst_67 : f32 to vector<16x1xf32>
    %225 = arith.addf %221, %224 : vector<16x1xf32>
    %226 = math.rsqrt %225 : vector<16x1xf32>
    %227 = vector.broadcast %226 : vector<16x1xf32> to vector<16x32xf32>
    %228 = arith.mulf %223, %227 : vector<16x32xf32>
    %229 = vector.broadcast %133 : vector<1x32xf32> to vector<16x32xf32>
    %230 = arith.mulf %228, %229 : vector<16x32xf32>
    %231 = vector.broadcast %134 : vector<1x32xf32> to vector<16x32xf32>
    %232 = arith.addf %230, %231 : vector<16x32xf32>
    %c672 = arith.constant 672 : index
    %c0_68 = arith.constant 0 : index
    %233 = vector.load %arg1[%c672, %c0_68] : memref<688x128xf32, #tpu.memory_space<vmem>>, vector<1x32xf32>
    %c680 = arith.constant 680 : index
    %c0_69 = arith.constant 0 : index
    %234 = vector.load %arg1[%c680, %c0_69] : memref<688x128xf32, #tpu.memory_space<vmem>>, vector<1x32xf32>
    %cst_70 = arith.constant dense<0.000000e+00> : vector<16xf32>
    %235 = vector.multi_reduction <add>, %232, %cst_70 [1] : vector<16x32xf32> to vector<16xf32>
    %236 = vector.shape_cast %235 : vector<16xf32> to vector<16x1xf32>
    %cst_71 = arith.constant 3.200000e+01 : f32
    %237 = vector.broadcast %cst_71 : f32 to vector<16x1xf32>
    %238 = arith.divf %236, %237 : vector<16x1xf32>
    %239 = vector.broadcast %238 : vector<16x1xf32> to vector<16x32xf32>
    %240 = arith.subf %232, %239 : vector<16x32xf32>
    %241 = arith.mulf %240, %240 : vector<16x32xf32>
    %cst_72 = arith.constant dense<0.000000e+00> : vector<16xf32>
    %242 = vector.multi_reduction <add>, %241, %cst_72 [1] : vector<16x32xf32> to vector<16xf32>
    %243 = vector.shape_cast %242 : vector<16xf32> to vector<16x1xf32>
    %cst_73 = arith.constant 3.200000e+01 : f32
    %244 = vector.broadcast %cst_73 : f32 to vector<16x1xf32>
    %245 = arith.divf %243, %244 : vector<16x1xf32>
    %246 = vector.broadcast %238 : vector<16x1xf32> to vector<16x32xf32>
    %247 = arith.subf %232, %246 : vector<16x32xf32>
    %cst_74 = arith.constant 9.99999974E-6 : f32
    %248 = vector.broadcast %cst_74 : f32 to vector<16x1xf32>
    %249 = arith.addf %245, %248 : vector<16x1xf32>
    %250 = math.rsqrt %249 : vector<16x1xf32>
    %251 = vector.broadcast %250 : vector<16x1xf32> to vector<16x32xf32>
    %252 = arith.mulf %247, %251 : vector<16x32xf32>
    %253 = vector.broadcast %233 : vector<1x32xf32> to vector<16x32xf32>
    %254 = arith.mulf %252, %253 : vector<16x32xf32>
    %255 = vector.broadcast %234 : vector<1x32xf32> to vector<16x32xf32>
    %256 = arith.addf %254, %255 : vector<16x32xf32>
    %c0_75 = arith.constant 0 : index
    %c0_76 = arith.constant 0 : index
    %257 = vector.load %arg2[%c0_75, %c0_76] : memref<16x32xf32, #tpu.memory_space<vmem>>, vector<16x32xf32>
    tpu.vector_store %arg2[%c0_75, %c0_76], %256 {strides = array<i32>} : memref<16x32xf32, #tpu.memory_space<vmem>>, vector<16x32xf32>,
    return
  }
}

</mosaic_0001>

<llo_original>
// kernel: encoder_forward.1
$region0: #{encoder_forward.1}
  #allocation0 [shape = 'u32[]', space=smem, size = 0x4, offset = 0x4, fixed_abs, tag = 'smem constant byte address 0x4 - core index']
  #allocation1 [shape = 'u32[144,128]{1,0:T(1,128)}', space=vmem, size = 0x12000, scoped, tag = 'internal scratch']
  %s0 = inlined_call_operand.vmem [shape: s32[16,1], index: 0, kind: input, shape index: {}]
  %s1 = inlined_call_operand.hbm [shape: f32[688,128], index: 1, kind: input, shape index: {}]
  %s2 = inlined_call_operand.hbm [shape: f32[16,32], index: 2, kind: output, shape index: {}]
  %s3 = sld [smem:[#allocation0]]
  $region22: #{encoder_forward.1} parent=0
    _
  %s5 = ssub.s32 1, %s3
  %s6 = scalar_select 0, %s5, %s3
  $region1: #{encoder_forward.1} parent=0
    #allocation2 [shape = 'u8[352256]{0}', space=vmem, size = 0x56000, scoped, tag = 'input window, operand 1, single buffered']
    #allocation3 [shape = 's32[1]{0}', space=sflag, size = 0x4, scoped, tag = 'scoped memory for encoder_forward.1']
    #allocation4 [shape = 's32[1]{0}', space=sflag, size = 0x4, scoped, tag = 'scoped memory for encoder_forward.1']
    #allocation5 [shape = 'u8[8192]{0}', space=vmem, size = 0x2000, scoped, tag = 'output window, operand 0, single buffered']
    %7 = vsyncpa [#allocation3], 0
    %8 = vsyncpa [#allocation4], 0
    // Predicated region
    $region2: #{encoder_forward.1} parent=1 // pred_check
      _
    $region3: #{encoder_forward.1} parent=1 // pred_check_branch
      %10 = sbr.rel (0) target = $region5
    $region4: #{encoder_forward.1} parent=1 // pred_region
      _
    $region5: #{encoder_forward.1} parent=1 // pred_fallthru
      _
    // Predicated region
    $region6: #{encoder_forward.1} parent=1 // pred_check
      _
    $region7: #{encoder_forward.1} parent=1 // pred_check_branch
      %12 = sbr.rel (0) target = $region9
    $region8: #{encoder_forward.1} parent=1 // pred_region
      %s14 = ssub.s32 11008, 11008
      %15 = vsyncadd [#allocation3], %s14
      %s16 = sshll.u32 [#allocation2], 4
      %s17 = int_to_ptr.vmem [resolvable:$true] %s16
      %22 = dma.hbm_to_vmem [thread:$0]  %s1, 11008, %s17, [#allocation3], 128, 128, 8
    $region9: #{encoder_forward.1} parent=1 // pred_fallthru
      _
    // Predicated region
    $region10: #{encoder_forward.1} parent=1 // pred_check
      _
    $region11: #{encoder_forward.1} parent=1 // pred_check_branch
      %24 = sbr.rel (0) target = $region13
    $region12: #{encoder_forward.1} parent=1 // pred_region
      %25 = dma.done [#allocation3], 11008
    $region13: #{encoder_forward.1} parent=1 // pred_fallthru
      _
    %v26 = vld [vmem:[%s0] sm:$0xff]
    %v27 = vld [vmem:[%s0 + $0x8] sm:$0xff]
    %v28 = vlaneseq
    %v29 = vand.u32 %v28, 127
    %30 = vset.pattern.permute.xlu0 0
    %31 = vperm.xlu0 %30, %v26
    %v32 = vpop.permute.xlu0 %31
    %33 = vset.pattern.permute.xlu0 0
    %34 = vperm.xlu0 %33, %v27
    %v35 = vpop.permute.xlu0 %34
    %vm36 = vcmp.eq.s32.totalorder %v29, %v32
    %vm37 = vcmp.eq.s32.totalorder %v29, %v35
    %v38 = vsel %vm36, 1, 0
    %v39 = vsel %vm37, 1, 0
    %v40 = vcvt.s32.f32 %v38
    %v41 = vcvt.s32.f32 %v39
    %v42 = vld [vmem:[#allocation2] sm:$0xff]
    %v43 = vld [vmem:[#allocation2 + $0x8] sm:$0xff]
    %v44 = vld [vmem:[#allocation2 + $0x10] sm:$0xff]
    %v45 = vld [vmem:[#allocation2 + $0x18] sm:$0xff]
    %v46 = vld [vmem:[#allocation2 + $0x20] sm:$0xff]
    %v47 = vld [vmem:[#allocation2 + $0x28] sm:$0xff]
    %v48 = vld [vmem:[#allocation2 + $0x30] sm:$0xff]
    %v49 = vld [vmem:[#allocation2 + $0x38] sm:$0xff]
    %v50 = vld [vmem:[#allocation2 + $0x40] sm:$0xff]
    %v51 = vld [vmem:[#allocation2 + $0x48] sm:$0xff]
    %v52 = vld [vmem:[#allocation2 + $0x50] sm:$0xff]
    %v53 = vld [vmem:[#allocation2 + $0x58] sm:$0xff]
    %v54 = vld [vmem:[#allocation2 + $0x60] sm:$0xff]
    %v55 = vld [vmem:[#allocation2 + $0x68] sm:$0xff]
    %v56 = vld [vmem:[#allocation2 + $0x70] sm:$0xff]
    %v57 = vld [vmem:[#allocation2 + $0x78] sm:$0xff]
    %v58 = vld [vmem:[#allocation2 + $0x80] sm:$0xff]
    %v59 = vld [vmem:[#allocation2 + $0x88] sm:$0xff]
    %60 = vmatprep.subr.mxu0 0.0
    %61 = vmatpush1.msra.mxu0 %v42
    %62 = vmatprep.subr.mxu0 0.0
    %63 = vmatpush1.msra.mxu0 %v43
    %64 = vmatprep.subr.mxu0 0.0
    %65 = vmatpush1.msra.mxu0 %v44
    %66 = vmatprep.subr.mxu0 0.0
    %67 = vmatpush1.msra.mxu0 %v45
    %68 = vmatprep.subr.mxu0 0.0
    %69 = vmatpush1.msra.mxu0 %v46
    %70 = vmatprep.subr.mxu0 0.0
    %71 = vmatpush1.msra.mxu0 %v47
    %72 = vmatprep.subr.mxu0 0.0
    %73 = vmatpush1.msra.mxu0 %v48
    %74 = vmatprep.subr.mxu0 0.0
    %75 = vmatpush1.msra.mxu0 %v49
    %76 = vmatprep.subr.mxu0 0.0
    %77 = vmatpush1.msra.mxu0 %v50
    %78 = vmatprep.subr.mxu0 0.0
    %79 = vmatpush1.msra.mxu0 %v51
    %80 = vmatprep.subr.mxu0 0.0
    %81 = vmatpush1.msra.mxu0 %v52
    %82 = vmatprep.subr.mxu0 0.0
    %83 = vmatpush1.msra.mxu0 %v53
    %84 = vmatprep.subr.mxu0 0.0
    %85 = vmatpush1.msra.mxu0 %v54
    %86 = vmatprep.subr.mxu0 0.0
    %87 = vmatpush1.msra.mxu0 %v55
    %88 = vmatprep.subr.mxu0 0.0
    %89 = vmatpush1.msra.mxu0 %v56
    %90 = vmatprep.subr.mxu0 0.0
    %91 = vmatpush1.msra.mxu0 %v57
    %92 = vmatprep.subr.mxu0 0.0
    %93 = vmatpush1.msra.mxu0 0.0
    %94 = vmatprep.subr.mxu0 0.0
    %95 = vmatpush1.msra.mxu0 0.0
    %96 = vmatprep.subr.mxu0 0.0
    %97 = vmatpush1.msra.mxu0 0.0
    %98 = vmatprep.subr.mxu0 0.0
    %99 = vmatpush1.msra.mxu0 0.0
    %100 = vmatprep.subr.mxu0 0.0
    %101 = vmatpush1.msra.mxu0 0.0
    %102 = vmatprep.subr.mxu0 0.0
    %103 = vmatpush1.msra.mxu0 0.0
    %104 = vmatprep.subr.mxu0 0.0
    %105 = vmatpush1.msra.mxu0 0.0
    %106 = vmatprep.subr.mxu0 0.0
    %107 = vmatpush1.msra.mxu0 0.0
    %108 = vmatprep.subr.mxu0 0.0
    %109 = vmatpush1.msra.mxu0 0.0
    %110 = vmatprep.subr.mxu0 0.0
    %111 = vmatpush1.msra.mxu0 0.0
    %112 = vmatprep.subr.mxu0 0.0
    %113 = vmatpush1.msra.mxu0 0.0
    %114 = vmatprep.subr.mxu0 0.0
    %115 = vmatpush1.msra.mxu0 0.0
    %116 = vmatprep.subr.mxu0 0.0
    %117 = vmatpush1.msra.mxu0 0.0
    %118 = vmatprep.subr.mxu0 0.0
    %119 = vmatpush1.msra.mxu0 0.0
    %120 = vmatprep.subr.mxu0 0.0
    %121 = vmatpush1.msra.mxu0 0.0
    %122 = vmatprep.subr.mxu0 0.0
    %123 = vmatpush1.msra.mxu0 0.0
    %124 = vmatprep.mubr.f32.mxu0 0.0
    %125 = vmatmul.mubr.f32.gmra.mrb[0].mxu0 %v40
    %v126 = vpop.f32.mrb[0].mxu0
    %v127 = vadd.f32 %v58, %v126
    %v128 = vpop.f32.mrb[0].mxu0
    %129 = vmatprep.mubr.f32.mxu0 0.0
    %130 = vmatmul.mubr.f32.gmra.mrb[0].mxu0 %v41
    %v131 = vpop.f32.mrb[0].mxu0
    %v132 = vadd.f32 %v59, %v131
    %v133 = vpop.f32.mrb[0].mxu0
    %134 = vdwg.mxu0
    %v135 = vld [vmem:[#allocation2 + $0x90] sm:$0xff]
    %v136 = vld [vmem:[#allocation2 + $0x98] sm:$0xff]
    %v137 = vld [vmem:[#allocation2 + $0xa0] sm:$0xff]
    %v138 = vld [vmem:[#allocation2 + $0xa8] sm:$0xff]
    %v139 = vld [vmem:[#allocation2 + $0xb0] sm:$0xff]
    %v140 = vld [vmem:[#allocation2 + $0xb8] sm:$0xff]
    %v141 = vld [vmem:[#allocation2 + $0xc0] sm:$0xff]
    %v142 = vld [vmem:[#allocation2 + $0xc8] sm:$0xff]
    %v143 = vld [vmem:[#allocation2 + $0xd0] sm:$0xff]
    %v144 = vld [vmem:[#allocation2 + $0xd8] sm:$0xff]
    %v145 = vld [vmem:[#allocation2 + $0xe0] sm:$0xff]
    %v146 = vld [vmem:[#allocation2 + $0xe8] sm:$0xff]
    %v147 = vld [vmem:[#allocation2 + $0xf0] sm:$0xff]
    %v148 = vld [vmem:[#allocation2 + $0xf8] sm:$0xff]
    %v149 = vld [vmem:[#allocation2 + $0x100] sm:$0x1]
    %v150 = vld [vmem:[#allocation2 + $0x108] sm:$0xff]
    %v151 = vld [vmem:[#allocation2 + $0x110] sm:$0xff]
    %v152 = vld [vmem:[#allocation2 + $0x118] sm:$0xff]
    %v153 = vld [vmem:[#allocation2 + $0x120] sm:$0xff]
    %v154 = vld [vmem:[#allocation2 + $0x128] sm:$0x1]
    %v155 = vld [vmem:[#allocation2 + $0x130] sm:$0xff]
    %v156 = vld [vmem:[#allocation2 + $0x138] sm:$0xff]
    %v157 = vld [vmem:[#allocation2 + $0x140] sm:$0xff]
    %v158 = vld [vmem:[#allocation2 + $0x148] sm:$0xff]
    %v159 = vld [vmem:[#allocation2 + $0x150] sm:$0x1]
    %v160 = vld [vmem:[#allocation2 + $0x158] sm:$0xff]
    %v161 = vld [vmem:[#allocation2 + $0x160] sm:$0xff]
    %v162 = vld [vmem:[#allocation2 + $0x168] sm:$0xff]
    %v163 = vld [vmem:[#allocation2 + $0x170] sm:$0xff]
    %v164 = vld [vmem:[#allocation2 + $0x178] sm:$0xff]
    %v165 = vld [vmem:[#allocation2 + $0x180] sm:$0xff]
    %v166 = vld [vmem:[#allocation2 + $0x188] sm:$0xff]
    %v167 = vld [vmem:[#allocation2 + $0x190] sm:$0xff]
    %v168 = vld [vmem:[#allocation2 + $0x198] sm:$0x1]
    %v169 = vld [vmem:[#allocation2 + $0x1a0] sm:$0x1]
    %v170 = vld [vmem:[#allocation2 + $0x1a8] sm:$0x1]
    %v171 = vld [vmem:[#allocation2 + $0x1b0] sm:$0x1]
    %v172 = vld [vmem:[#allocation2 + $0x1b8] sm:$0x1]
    %v173 = vlaneseq
    %v174 = vshrl.u32 %v173, 7
    %v175 = vsub.s32 0, %v174
    %v176 = vrot.slane %v149, %v175
    %vm177 = vcmask 261120
    %v179 = vsel %vm177, %v127, 0
    %v182 = vsel %vm177, %v132, 0
    %184 = vmatprep.subr.mxu0 0.0
    %185 = vmatpush1.msra.mxu0 %v145
    %186 = vmatprep.subr.mxu0 0.0
    %187 = vmatpush1.msra.mxu0 %v146
    %188 = vmatprep.subr.mxu0 0.0
    %189 = vmatpush1.msra.mxu0 %v147
    %190 = vmatprep.subr.mxu0 0.0
    %191 = vmatpush1.msra.mxu0 %v148
    %192 = vmatprep.subr.mxu0 0.0
    %193 = vmatpush1.msra.mxu0 0.0
    %194 = vmatprep.subr.mxu0 0.0
    %195 = vmatpush1.msra.mxu0 0.0
    %196 = vmatprep.subr.mxu0 0.0
    %197 = vmatpush1.msra.mxu0 0.0
    %198 = vmatprep.subr.mxu0 0.0
    %199 = vmatpush1.msra.mxu0 0.0
    %200 = vmatprep.subr.mxu0 0.0
    %201 = vmatpush1.msra.mxu0 0.0
    %202 = vmatprep.subr.mxu0 0.0
    %203 = vmatpush1.msra.mxu0 0.0
    %204 = vmatprep.subr.mxu0 0.0
    %205 = vmatpush1.msra.mxu0 0.0
    %206 = vmatprep.subr.mxu0 0.0
    %207 = vmatpush1.msra.mxu0 0.0
    %208 = vmatprep.subr.mxu0 0.0
    %209 = vmatpush1.msra.mxu0 0.0
    %210 = vmatprep.subr.mxu0 0.0
    %211 = vmatpush1.msra.mxu0 0.0
    %212 = vmatprep.subr.mxu0 0.0
    %213 = vmatpush1.msra.mxu0 0.0
    %214 = vmatprep.subr.mxu0 0.0
    %215 = vmatpush1.msra.mxu0 0.0
    %216 = vmatprep.subr.mxu0 0.0
    %217 = vmatpush1.msra.mxu0 0.0
    %218 = vmatprep.subr.mxu0 0.0
    %219 = vmatpush1.msra.mxu0 0.0
    %220 = vmatprep.subr.mxu0 0.0
    %221 = vmatpush1.msra.mxu0 0.0
    %222 = vmatprep.subr.mxu0 0.0
    %223 = vmatpush1.msra.mxu0 0.0
    %224 = vmatprep.subr.mxu0 0.0
    %225 = vmatpush1.msra.mxu0 0.0
    %226 = vmatprep.subr.mxu0 0.0
    %227 = vmatpush1.msra.mxu0 0.0
    %228 = vmatprep.subr.mxu0 0.0
    %229 = vmatpush1.msra.mxu0 0.0
    %230 = vmatprep.subr.mxu0 0.0
    %231 = vmatpush1.msra.mxu0 0.0
    %232 = vmatprep.subr.mxu0 0.0
    %233 = vmatpush1.msra.mxu0 0.0
    %234 = vmatprep.subr.mxu0 0.0
    %235 = vmatpush1.msra.mxu0 0.0
    %236 = vmatprep.subr.mxu0 0.0
    %237 = vmatpush1.msra.mxu0 0.0
    %238 = vmatprep.subr.mxu0 0.0
    %239 = vmatpush1.msra.mxu0 0.0
    %240 = vmatprep.subr.mxu0 0.0
    %241 = vmatpush1.msra.mxu0 0.0
    %242 = vmatprep.subr.mxu0 0.0
    %243 = vmatpush1.msra.mxu0 0.0
    %244 = vmatprep.subr.mxu0 0.0
    %245 = vmatpush1.msra.mxu0 0.0
    %246 = vmatprep.subr.mxu0 0.0
    %247 = vmatpush1.msra.mxu0 0.0
    %248 = vmatprep.mubr.f32.mxu0 0.0
    %249 = vmatmul.mubr.f32.gmra.mrb[0].mxu0 %v179
    %v250 = vpop.f32.mrb[0].mxu0
    %v251 = vadd.f32 %v176, %v250
    %v252 = vpop.f32.mrb[0].mxu0
    %253 = vmatprep.mubr.f32.mxu0 0.0
    %254 = vmatmul.mubr.f32.gmra.mrb[0].mxu0 %v182
    %v255 = vpop.f32.mrb[0].mxu0
    %v256 = vadd.f32 %v176, %v255
    %v257 = vpop.f32.mrb[0].mxu0
    %258 = vdwg.mxu0
    %v259 = vmul.f32 %v251, %v135
    %v260 = vmul.f32 %v256, %v136
    %v261 = vmul.f32 %v251, %v137
    %v262 = vmul.f32 %v256, %v138
    %v263 = vmul.f32 %v251, %v139
    %v264 = vmul.f32 %v256, %v140
    %v265 = vmul.f32 %v251, %v141
    %v266 = vmul.f32 %v256, %v142
    %275 = vrot.lane.b32.xlu0 %v135, 32
    %v276 = vpop.permute.xlu0 %275
    %277 = vrot.lane.b32.xlu0 %v136, 32
    %v278 = vpop.permute.xlu0 %277
    %279 = vrot.lane.b32.xlu0 %v137, 32
    %v280 = vpop.permute.xlu0 %279
    %281 = vrot.lane.b32.xlu0 %v138, 32
    %v282 = vpop.permute.xlu0 %281
    %283 = vrot.lane.b32.xlu0 %v139, 32
    %v284 = vpop.permute.xlu0 %283
    %285 = vrot.lane.b32.xlu0 %v140, 32
    %v286 = vpop.permute.xlu0 %285
    %287 = vrot.lane.b32.xlu0 %v141, 32
    %v288 = vpop.permute.xlu0 %287
    %289 = vrot.lane.b32.xlu0 %v142, 32
    %v290 = vpop.permute.xlu0 %289
    %v299 = vmul.f32 %v251, %v276
    %v300 = vmul.f32 %v256, %v278
    %v301 = vmul.f32 %v251, %v280
    %v302 = vmul.f32 %v256, %v282
    %v303 = vmul.f32 %v251, %v284
    %v304 = vmul.f32 %v256, %v286
    %v305 = vmul.f32 %v251, %v288
    %v306 = vmul.f32 %v256, %v290
    %307 = vrot.lane.b32.xlu0 %v135, 64
    %v308 = vpop.permute.xlu0 %307
    %309 = vrot.lane.b32.xlu0 %v136, 64
    %v310 = vpop.permute.xlu0 %309
    %311 = vrot.lane.b32.xlu0 %v137, 64
    %v312 = vpop.permute.xlu0 %311
    %313 = vrot.lane.b32.xlu0 %v138, 64
    %v314 = vpop.permute.xlu0 %313
    %315 = vrot.lane.b32.xlu0 %v139, 64
    %v316 = vpop.permute.xlu0 %315
    %317 = vrot.lane.b32.xlu0 %v140, 64
    %v318 = vpop.permute.xlu0 %317
    %319 = vrot.lane.b32.xlu0 %v141, 64
    %v320 = vpop.permute.xlu0 %319
    %321 = vrot.lane.b32.xlu0 %v142, 64
    %v322 = vpop.permute.xlu0 %321
    %v331 = vmul.f32 %v251, %v308
    %v332 = vmul.f32 %v256, %v310
    %v333 = vmul.f32 %v251, %v312
    %v334 = vmul.f32 %v256, %v314
    %v335 = vmul.f32 %v251, %v316
    %v336 = vmul.f32 %v256, %v318
    %v337 = vmul.f32 %v251, %v320
    %v338 = vmul.f32 %v256, %v322
    %341 = vrot.lane.b32.xlu0 %v299, 96
    %v342 = vpop.permute.xlu0 %341
    %343 = vrot.lane.b32.xlu0 %v300, 96
    %v344 = vpop.permute.xlu0 %343
    %v346 = vsel %vm177, %v259, 0
    %v349 = vsel %vm177, %v260, 0
    %v351 = vsel %vm177, %v342, 0
    %v353 = vsel %vm177, %v344, 0
    %355 = vmatprep.subr.mxu0 0.0
    %356 = vmatpush1.xpose.msra.mxu0 %v351
    %357 = vmatprep.subr.mxu0 0.0
    %358 = vmatpush1.xpose.msra.mxu0 %v353
    %359 = vmatprep.subr.mxu0 0.0
    %360 = vmatpush1.xpose.msra.mxu0 0.0
    %361 = vmatprep.subr.mxu0 0.0
    %362 = vmatpush1.xpose.msra.mxu0 0.0
    %363 = vmatprep.subr.mxu0 0.0
    %364 = vmatpush1.xpose.msra.mxu0 0.0
    %365 = vmatprep.subr.mxu0 0.0
    %366 = vmatpush1.xpose.msra.mxu0 0.0
    %367 = vmatprep.subr.mxu0 0.0
    %368 = vmatpush1.xpose.msra.mxu0 0.0
    %369 = vmatprep.subr.mxu0 0.0
    %370 = vmatpush1.xpose.msra.mxu0 0.0
    %371 = vmatprep.subr.mxu0 0.0
    %372 = vmatpush1.xpose.msra.mxu0 0.0
    %373 = vmatprep.subr.mxu0 0.0
    %374 = vmatpush1.xpose.msra.mxu0 0.0
    %375 = vmatprep.subr.mxu0 0.0
    %376 = vmatpush1.xpose.msra.mxu0 0.0
    %377 = vmatprep.subr.mxu0 0.0
    %378 = vmatpush1.xpose.msra.mxu0 0.0
    %379 = vmatprep.subr.mxu0 0.0
    %380 = vmatpush1.xpose.msra.mxu0 0.0
    %381 = vmatprep.subr.mxu0 0.0
    %382 = vmatpush1.xpose.msra.mxu0 0.0
    %383 = vmatprep.subr.mxu0 0.0
    %384 = vmatpush1.xpose.msra.mxu0 0.0
    %385 = vmatprep.subr.mxu0 0.0
    %386 = vmatpush1.xpose.msra.mxu0 0.0
    %387 = vmatprep.subr.mxu0 0.0
    %388 = vmatpush1.xpose.msra.mxu0 0.0
    %389 = vmatprep.subr.mxu0 0.0
    %390 = vmatpush1.xpose.msra.mxu0 0.0
    %391 = vmatprep.subr.mxu0 0.0
    %392 = vmatpush1.xpose.msra.mxu0 0.0
    %393 = vmatprep.subr.mxu0 0.0
    %394 = vmatpush1.xpose.msra.mxu0 0.0
    %395 = vmatprep.subr.mxu0 0.0
    %396 = vmatpush1.xpose.msra.mxu0 0.0
    %397 = vmatprep.subr.mxu0 0.0
    %398 = vmatpush1.xpose.msra.mxu0 0.0
    %399 = vmatprep.subr.mxu0 0.0
    %400 = vmatpush1.xpose.msra.mxu0 0.0
    %401 = vmatprep.subr.mxu0 0.0
    %402 = vmatpush1.xpose.msra.mxu0 0.0
    %403 = vmatprep.subr.mxu0 0.0
    %404 = vmatpush1.xpose.msra.mxu0 0.0
    %405 = vmatprep.subr.mxu0 0.0
    %406 = vmatpush1.xpose.msra.mxu0 0.0
    %407 = vmatprep.subr.mxu0 0.0
    %408 = vmatpush1.xpose.msra.mxu0 0.0
    %409 = vmatprep.subr.mxu0 0.0
    %410 = vmatpush1.xpose.msra.mxu0 0.0
    %411 = vmatprep.subr.mxu0 0.0
    %412 = vmatpush1.xpose.msra.mxu0 0.0
    %413 = vmatprep.subr.mxu0 0.0
    %414 = vmatpush1.xpose.msra.mxu0 0.0
    %415 = vmatprep.subr.mxu0 0.0
    %416 = vmatpush1.xpose.msra.mxu0 0.0
    %417 = vmatprep.subr.mxu0 0.0
    %418 = vmatpush1.xpose.msra.mxu0 0.0
    %419 = vmatprep.mubr.f32.mxu0 0.0
    %420 = vmatmul.mubr.f32.gmra.mrb[0].mxu0 %v346
    %v421 = vpop.f32.mrb[0].mxu0
    %v422 = vadd.f32 %v143, %v421
    %v423 = vpop.f32.mrb[0].mxu0
    %424 = vmatprep.mubr.f32.mxu0 0.0
    %425 = vmatmul.mubr.f32.gmra.mrb[0].mxu0 %v349
    %v426 = vpop.f32.mrb[0].mxu0
    %v427 = vadd.f32 %v144, %v426
    %v428 = vpop.f32.mrb[0].mxu0
    %429 = vdwg.mxu0
    %432 = vrot.lane.b32.xlu0 %v301, 96
    %v433 = vpop.permute.xlu0 %432
    %434 = vrot.lane.b32.xlu0 %v302, 96
    %v435 = vpop.permute.xlu0 %434
    %v437 = vsel %vm177, %v261, 0
    %v440 = vsel %vm177, %v262, 0
    %v442 = vsel %vm177, %v433, 0
    %v444 = vsel %vm177, %v435, 0
    %446 = vmatprep.subr.mxu0 0.0
    %447 = vmatpush1.xpose.msra.mxu0 %v442
    %448 = vmatprep.subr.mxu0 0.0
    %449 = vmatpush1.xpose.msra.mxu0 %v444
    %450 = vmatprep.subr.mxu0 0.0
    %451 = vmatpush1.xpose.msra.mxu0 0.0
    %452 = vmatprep.subr.mxu0 0.0
    %453 = vmatpush1.xpose.msra.mxu0 0.0
    %454 = vmatprep.subr.mxu0 0.0
    %455 = vmatpush1.xpose.msra.mxu0 0.0
    %456 = vmatprep.subr.mxu0 0.0
    %457 = vmatpush1.xpose.msra.mxu0 0.0
    %458 = vmatprep.subr.mxu0 0.0
    %459 = vmatpush1.xpose.msra.mxu0 0.0
    %460 = vmatprep.subr.mxu0 0.0
    %461 = vmatpush1.xpose.msra.mxu0 0.0
    %462 = vmatprep.subr.mxu0 0.0
    %463 = vmatpush1.xpose.msra.mxu0 0.0
    %464 = vmatprep.subr.mxu0 0.0
    %465 = vmatpush1.xpose.msra.mxu0 0.0
    %466 = vmatprep.subr.mxu0 0.0
    %467 = vmatpush1.xpose.msra.mxu0 0.0
    %468 = vmatprep.subr.mxu0 0.0
    %469 = vmatpush1.xpose.msra.mxu0 0.0
    %470 = vmatprep.subr.mxu0 0.0
    %471 = vmatpush1.xpose.msra.mxu0 0.0
    %472 = vmatprep.subr.mxu0 0.0
    %473 = vmatpush1.xpose.msra.mxu0 0.0
    %474 = vmatprep.subr.mxu0 0.0
    %475 = vmatpush1.xpose.msra.mxu0 0.0
    %476 = vmatprep.subr.mxu0 0.0
    %477 = vmatpush1.xpose.msra.mxu0 0.0
    %478 = vmatprep.subr.mxu0 0.0
    %479 = vmatpush1.xpose.msra.mxu0 0.0
    %480 = vmatprep.subr.mxu0 0.0
    %481 = vmatpush1.xpose.msra.mxu0 0.0
    %482 = vmatprep.subr.mxu0 0.0
    %483 = vmatpush1.xpose.msra.mxu0 0.0
    %484 = vmatprep.subr.mxu0 0.0
    %485 = vmatpush1.xpose.msra.mxu0 0.0
    %486 = vmatprep.subr.mxu0 0.0
    %487 = vmatpush1.xpose.msra.mxu0 0.0
    %488 = vmatprep.subr.mxu0 0.0
    %489 = vmatpush1.xpose.msra.mxu0 0.0
    %490 = vmatprep.subr.mxu0 0.0
    %491 = vmatpush1.xpose.msra.mxu0 0.0
    %492 = vmatprep.subr.mxu0 0.0
    %493 = vmatpush1.xpose.msra.mxu0 0.0
    %494 = vmatprep.subr.mxu0 0.0
    %495 = vmatpush1.xpose.msra.mxu0 0.0
    %496 = vmatprep.subr.mxu0 0.0
    %497 = vmatpush1.xpose.msra.mxu0 0.0
    %498 = vmatprep.subr.mxu0 0.0
    %499 = vmatpush1.xpose.msra.mxu0 0.0
    %500 = vmatprep.subr.mxu0 0.0
    %501 = vmatpush1.xpose.msra.mxu0 0.0
    %502 = vmatprep.subr.mxu0 0.0
    %503 = vmatpush1.xpose.msra.mxu0 0.0
    %504 = vmatprep.subr.mxu0 0.0
    %505 = vmatpush1.xpose.msra.mxu0 0.0
    %506 = vmatprep.subr.mxu0 0.0
    %507 = vmatpush1.xpose.msra.mxu0 0.0
    %508 = vmatprep.subr.mxu0 0.0
    %509 = vmatpush1.xpose.msra.mxu0 0.0
    %510 = vmatprep.mubr.f32.mxu0 0.0
    %511 = vmatmul.mubr.f32.gmra.mrb[0].mxu0 %v437
    %v512 = vpop.f32.mrb[0].mxu0
    %v513 = vadd.f32 %v143, %v512
    %v514 = vpop.f32.mrb[0].mxu0
    %515 = vmatprep.mubr.f32.mxu0 0.0
    %516 = vmatmul.mubr.f32.gmra.mrb[0].mxu0 %v440
    %v517 = vpop.f32.mrb[0].mxu0
    %v518 = vadd.f32 %v144, %v517
    %v519 = vpop.f32.mrb[0].mxu0
    %520 = vdwg.mxu0
    %523 = vrot.lane.b32.xlu0 %v303, 96
    %v524 = vpop.permute.xlu0 %523
    %525 = vrot.lane.b32.xlu0 %v304, 96
    %v526 = vpop.permute.xlu0 %525
    %v528 = vsel %vm177, %v263, 0
    %v531 = vsel %vm177, %v264, 0
    %v533 = vsel %vm177, %v524, 0
    %v535 = vsel %vm177, %v526, 0
    %537 = vmatprep.subr.mxu0 0.0
    %538 = vmatpush1.xpose.msra.mxu0 %v533
    %539 = vmatprep.subr.mxu0 0.0
    %540 = vmatpush1.xpose.msra.mxu0 %v535
    %541 = vmatprep.subr.mxu0 0.0
    %542 = vmatpush1.xpose.msra.mxu0 0.0
    %543 = vmatprep.subr.mxu0 0.0
    %544 = vmatpush1.xpose.msra.mxu0 0.0
    %545 = vmatprep.subr.mxu0 0.0
    %546 = vmatpush1.xpose.msra.mxu0 0.0
    %547 = vmatprep.subr.mxu0 0.0
    %548 = vmatpush1.xpose.msra.mxu0 0.0
    %549 = vmatprep.subr.mxu0 0.0
    %550 = vmatpush1.xpose.msra.mxu0 0.0
    %551 = vmatprep.subr.mxu0 0.0
    %552 = vmatpush1.xpose.msra.mxu0 0.0
    %553 = vmatprep.subr.mxu0 0.0
    %554 = vmatpush1.xpose.msra.mxu0 0.0
    %555 = vmatprep.subr.mxu0 0.0
    %556 = vmatpush1.xpose.msra.mxu0 0.0
    %557 = vmatprep.subr.mxu0 0.0
    %558 = vmatpush1.xpose.msra.mxu0 0.0
    %559 = vmatprep.subr.mxu0 0.0
    %560 = vmatpush1.xpose.msra.mxu0 0.0
    %561 = vmatprep.subr.mxu0 0.0
    %562 = vmatpush1.xpose.msra.mxu0 0.0
    %563 = vmatprep.subr.mxu0 0.0
    %564 = vmatpush1.xpose.msra.mxu0 0.0
    %565 = vmatprep.subr.mxu0 0.0
    %566 = vmatpush1.xpose.msra.mxu0 0.0
    %567 = vmatprep.subr.mxu0 0.0
    %568 = vmatpush1.xpose.msra.mxu0 0.0
    %569 = vmatprep.subr.mxu0 0.0
    %570 = vmatpush1.xpose.msra.mxu0 0.0
    %571 = vmatprep.subr.mxu0 0.0
    %572 = vmatpush1.xpose.msra.mxu0 0.0
    %573 = vmatprep.subr.mxu0 0.0
    %574 = vmatpush1.xpose.msra.mxu0 0.0
    %575 = vmatprep.subr.mxu0 0.0
    %576 = vmatpush1.xpose.msra.mxu0 0.0
    %577 = vmatprep.subr.mxu0 0.0
    %578 = vmatpush1.xpose.msra.mxu0 0.0
    %579 = vmatprep.subr.mxu0 0.0
    %580 = vmatpush1.xpose.msra.mxu0 0.0
    %581 = vmatprep.subr.mxu0 0.0
    %582 = vmatpush1.xpose.msra.mxu0 0.0
    %583 = vmatprep.subr.mxu0 0.0
    %584 = vmatpush1.xpose.msra.mxu0 0.0
    %585 = vmatprep.subr.mxu0 0.0
    %586 = vmatpush1.xpose.msra.mxu0 0.0
    %587 = vmatprep.subr.mxu0 0.0
    %588 = vmatpush1.xpose.msra.mxu0 0.0
    %589 = vmatprep.subr.mxu0 0.0
    %590 = vmatpush1.xpose.msra.mxu0 0.0
    %591 = vmatprep.subr.mxu0 0.0
    %592 = vmatpush1.xpose.msra.mxu0 0.0
    %593 = vmatprep.subr.mxu0 0.0
    %594 = vmatpush1.xpose.msra.mxu0 0.0
    %595 = vmatprep.subr.mxu0 0.0
    %596 = vmatpush1.xpose.msra.mxu0 0.0
    %597 = vmatprep.subr.mxu0 0.0
    %598 = vmatpush1.xpose.msra.mxu0 0.0
    %599 = vmatprep.subr.mxu0 0.0
    %600 = vmatpush1.xpose.msra.mxu0 0.0
    %601 = vmatprep.mubr.f32.mxu0 0.0
    %602 = vmatmul.mubr.f32.gmra.mrb[0].mxu0 %v528
    %v603 = vpop.f32.mrb[0].mxu0
    %v604 = vadd.f32 %v143, %v603
    %v605 = vpop.f32.mrb[0].mxu0
    %606 = vmatprep.mubr.f32.mxu0 0.0
    %607 = vmatmul.mubr.f32.gmra.mrb[0].mxu0 %v531
    %v608 = vpop.f32.mrb[0].mxu0
    %v609 = vadd.f32 %v144, %v608
    %v610 = vpop.f32.mrb[0].mxu0
    %611 = vdwg.mxu0
    %614 = vrot.lane.b32.xlu0 %v305, 96
    %v615 = vpop.permute.xlu0 %614
    %616 = vrot.lane.b32.xlu0 %v306, 96
    %v617 = vpop.permute.xlu0 %616
    %v619 = vsel %vm177, %v265, 0
    %v622 = vsel %vm177, %v266, 0
    %v624 = vsel %vm177, %v615, 0
    %v626 = vsel %vm177, %v617, 0
    %628 = vmatprep.subr.mxu0 0.0
    %629 = vmatpush1.xpose.msra.mxu0 %v624
    %630 = vmatprep.subr.mxu0 0.0
    %631 = vmatpush1.xpose.msra.mxu0 %v626
    %632 = vmatprep.subr.mxu0 0.0
    %633 = vmatpush1.xpose.msra.mxu0 0.0
    %634 = vmatprep.subr.mxu0 0.0
    %635 = vmatpush1.xpose.msra.mxu0 0.0
    %636 = vmatprep.subr.mxu0 0.0
    %637 = vmatpush1.xpose.msra.mxu0 0.0
    %638 = vmatprep.subr.mxu0 0.0
    %639 = vmatpush1.xpose.msra.mxu0 0.0
    %640 = vmatprep.subr.mxu0 0.0
    %641 = vmatpush1.xpose.msra.mxu0 0.0
    %642 = vmatprep.subr.mxu0 0.0
    %643 = vmatpush1.xpose.msra.mxu0 0.0
    %644 = vmatprep.subr.mxu0 0.0
    %645 = vmatpush1.xpose.msra.mxu0 0.0
    %646 = vmatprep.subr.mxu0 0.0
    %647 = vmatpush1.xpose.msra.mxu0 0.0
    %648 = vmatprep.subr.mxu0 0.0
    %649 = vmatpush1.xpose.msra.mxu0 0.0
    %650 = vmatprep.subr.mxu0 0.0
    %651 = vmatpush1.xpose.msra.mxu0 0.0
    %652 = vmatprep.subr.mxu0 0.0
    %653 = vmatpush1.xpose.msra.mxu0 0.0
    %654 = vmatprep.subr.mxu0 0.0
    %655 = vmatpush1.xpose.msra.mxu0 0.0
    %656 = vmatprep.subr.mxu0 0.0
    %657 = vmatpush1.xpose.msra.mxu0 0.0
    %658 = vmatprep.subr.mxu0 0.0
    %659 = vmatpush1.xpose.msra.mxu0 0.0
    %660 = vmatprep.subr.mxu0 0.0
    %661 = vmatpush1.xpose.msra.mxu0 0.0
    %662 = vmatprep.subr.mxu0 0.0
    %663 = vmatpush1.xpose.msra.mxu0 0.0
    %664 = vmatprep.subr.mxu0 0.0
    %665 = vmatpush1.xpose.msra.mxu0 0.0
    %666 = vmatprep.subr.mxu0 0.0
    %667 = vmatpush1.xpose.msra.mxu0 0.0
    %668 = vmatprep.subr.mxu0 0.0
    %669 = vmatpush1.xpose.msra.mxu0 0.0
    %670 = vmatprep.subr.mxu0 0.0
    %671 = vmatpush1.xpose.msra.mxu0 0.0
    %672 = vmatprep.subr.mxu0 0.0
    %673 = vmatpush1.xpose.msra.mxu0 0.0
    %674 = vmatprep.subr.mxu0 0.0
    %675 = vmatpush1.xpose.msra.mxu0 0.0
    %676 = vmatprep.subr.mxu0 0.0
    %677 = vmatpush1.xpose.msra.mxu0 0.0
    %678 = vmatprep.subr.mxu0 0.0
    %679 = vmatpush1.xpose.msra.mxu0 0.0
    %680 = vmatprep.subr.mxu0 0.0
    %681 = vmatpush1.xpose.msra.mxu0 0.0
    %682 = vmatprep.subr.mxu0 0.0
    %683 = vmatpush1.xpose.msra.mxu0 0.0
    %684 = vmatprep.subr.mxu0 0.0
    %685 = vmatpush1.xpose.msra.mxu0 0.0
    %686 = vmatprep.subr.mxu0 0.0
    %687 = vmatpush1.xpose.msra.mxu0 0.0
    %688 = vmatprep.subr.mxu0 0.0
    %689 = vmatpush1.xpose.msra.mxu0 0.0
    %690 = vmatprep.subr.mxu0 0.0
    %691 = vmatpush1.xpose.msra.mxu0 0.0
    %692 = vmatprep.mubr.f32.mxu0 0.0
    %693 = vmatmul.mubr.f32.gmra.mrb[0].mxu0 %v619
    %v694 = vpop.f32.mrb[0].mxu0
    %v695 = vadd.f32 %v143, %v694
    %v696 = vpop.f32.mrb[0].mxu0
    %697 = vmatprep.mubr.f32.mxu0 0.0
    %698 = vmatmul.mubr.f32.gmra.mrb[0].mxu0 %v622
    %v699 = vpop.f32.mrb[0].mxu0
    %v700 = vadd.f32 %v144, %v699
    %v701 = vpop.f32.mrb[0].mxu0
    %702 = vdwg.mxu0
    %vm703 = vcmask 130048
    %v704 = vsel %vm703, %v422, -inf
    %705 = vmax.xlane.f32.xlu0 %v704
    %v706 = vpop.xlane.xlu0 %705
    %v707 = vsel %vm703, %v427, -inf
    %708 = vmax.xlane.f32.xlu0 %v707
    %v709 = vpop.xlane.xlu0 %708
    %v710 = vsel %vm703, %v513, -inf
    %711 = vmax.xlane.f32.xlu0 %v710
    %v712 = vpop.xlane.xlu0 %711
    %v713 = vsel %vm703, %v518, -inf
    %714 = vmax.xlane.f32.xlu0 %v713
    %v715 = vpop.xlane.xlu0 %714
    %v716 = vsel %vm703, %v604, -inf
    %717 = vmax.xlane.f32.xlu0 %v716
    %v718 = vpop.xlane.xlu0 %717
    %v719 = vsel %vm703, %v609, -inf
    %720 = vmax.xlane.f32.xlu0 %v719
    %v721 = vpop.xlane.xlu0 %720
    %v722 = vsel %vm703, %v695, -inf
    %723 = vmax.xlane.f32.xlu0 %v722
    %v724 = vpop.xlane.xlu0 %723
    %v725 = vsel %vm703, %v700, -inf
    %726 = vmax.xlane.f32.xlu0 %v725
    %v727 = vpop.xlane.xlu0 %726
    %v728 = vsub.f32 %v422, %v706
    %v729 = vsub.f32 %v427, %v709
    %v730 = vsub.f32 %v513, %v712
    %v731 = vsub.f32 %v518, %v715
    %v732 = vsub.f32 %v604, %v718
    %v733 = vsub.f32 %v609, %v721
    %v734 = vsub.f32 %v695, %v724
    %v735 = vsub.f32 %v700, %v727
    %v736 = vmul.f32 %v728, 1.442695
    %v737 = vpow.pop %v736
    %v738 = vmul.f32 %v729, 1.442695
    %v739 = vpow.pop %v738
    %v740 = vmul.f32 %v730, 1.442695
    %v741 = vpow.pop %v740
    %v742 = vmul.f32 %v731, 1.442695
    %v743 = vpow.pop %v742
    %v744 = vmul.f32 %v732, 1.442695
    %v745 = vpow.pop %v744
    %v746 = vmul.f32 %v733, 1.442695
    %v747 = vpow.pop %v746
    %v748 = vmul.f32 %v734, 1.442695
    %v749 = vpow.pop %v748
    %v750 = vmul.f32 %v735, 1.442695
    %v751 = vpow.pop %v750
    %v752 = vsel %vm703, %v737, 0.0
    %753 = vadd.xlane.f32.xlu0 %v752
    %v754 = vpop.xlane.xlu0 %753
    %v755 = vsel %vm703, %v739, 0.0
    %756 = vadd.xlane.f32.xlu0 %v755
    %v757 = vpop.xlane.xlu0 %756
    %v758 = vsel %vm703, %v741, 0.0
    %759 = vadd.xlane.f32.xlu0 %v758
    %v760 = vpop.xlane.xlu0 %759
    %v761 = vsel %vm703, %v743, 0.0
    %762 = vadd.xlane.f32.xlu0 %v761
    %v763 = vpop.xlane.xlu0 %762
    %v764 = vsel %vm703, %v745, 0.0
    %765 = vadd.xlane.f32.xlu0 %v764
    %v766 = vpop.xlane.xlu0 %765
    %v767 = vsel %vm703, %v747, 0.0
    %768 = vadd.xlane.f32.xlu0 %v767
    %v769 = vpop.xlane.xlu0 %768
    %v770 = vsel %vm703, %v749, 0.0
    %771 = vadd.xlane.f32.xlu0 %v770
    %v772 = vpop.xlane.xlu0 %771
    %v773 = vsel %vm703, %v751, 0.0
    %774 = vadd.xlane.f32.xlu0 %v773
    %v775 = vpop.xlane.xlu0 %774
    %v776 = vrcp.pop %v754
    %v777 = vrcp.pop %v757
    %v778 = vrcp.pop %v760
    %v779 = vrcp.pop %v763
    %v780 = vrcp.pop %v766
    %v781 = vrcp.pop %v769
    %v782 = vrcp.pop %v772
    %v783 = vrcp.pop %v775
    %v784 = vmul.f32 %v737, %v776
    %v785 = vmul.f32 %v739, %v777
    %v786 = vmul.f32 %v741, %v778
    %v787 = vmul.f32 %v743, %v779
    %v788 = vmul.f32 %v745, %v780
    %v789 = vmul.f32 %v747, %v781
    %v790 = vmul.f32 %v749, %v782
    %v791 = vmul.f32 %v751, %v783
    %794 = vrot.lane.b32.xlu0 %v331, 64
    %v795 = vpop.permute.xlu0 %794
    %796 = vrot.lane.b32.xlu0 %v332, 64
    %v797 = vpop.permute.xlu0 %796
    %v801 = vsel %vm703, %v784, 0
    %v804 = vsel %vm703, %v785, 0
    %806 = vmatprep.subr.mxu0 0.0
    %807 = vmatpush1.msra.mxu0 %v795
    %808 = vmatprep.subr.mxu0 0.0
    %809 = vmatpush1.msra.mxu0 %v797
    %810 = vmatprep.subr.mxu0 0.0
    %811 = vmatpush1.msra.mxu0 0.0
    %812 = vmatprep.subr.mxu0 0.0
    %813 = vmatpush1.msra.mxu0 0.0
    %814 = vmatprep.subr.mxu0 0.0
    %815 = vmatpush1.msra.mxu0 0.0
    %816 = vmatprep.subr.mxu0 0.0
    %817 = vmatpush1.msra.mxu0 0.0
    %818 = vmatprep.subr.mxu0 0.0
    %819 = vmatpush1.msra.mxu0 0.0
    %820 = vmatprep.subr.mxu0 0.0
    %821 = vmatpush1.msra.mxu0 0.0
    %822 = vmatprep.subr.mxu0 0.0
    %823 = vmatpush1.msra.mxu0 0.0
    %824 = vmatprep.subr.mxu0 0.0
    %825 = vmatpush1.msra.mxu0 0.0
    %826 = vmatprep.subr.mxu0 0.0
    %827 = vmatpush1.msra.mxu0 0.0
    %828 = vmatprep.subr.mxu0 0.0
    %829 = vmatpush1.msra.mxu0 0.0
    %830 = vmatprep.subr.mxu0 0.0
    %831 = vmatpush1.msra.mxu0 0.0
    %832 = vmatprep.subr.mxu0 0.0
    %833 = vmatpush1.msra.mxu0 0.0
    %834 = vmatprep.subr.mxu0 0.0
    %835 = vmatpush1.msra.mxu0 0.0
    %836 = vmatprep.subr.mxu0 0.0
    %837 = vmatpush1.msra.mxu0 0.0
    %838 = vmatprep.subr.mxu0 0.0
    %839 = vmatpush1.msra.mxu0 0.0
    %840 = vmatprep.subr.mxu0 0.0
    %841 = vmatpush1.msra.mxu0 0.0
    %842 = vmatprep.subr.mxu0 0.0
    %843 = vmatpush1.msra.mxu0 0.0
    %844 = vmatprep.subr.mxu0 0.0
    %845 = vmatpush1.msra.mxu0 0.0
    %846 = vmatprep.subr.mxu0 0.0
    %847 = vmatpush1.msra.mxu0 0.0
    %848 = vmatprep.subr.mxu0 0.0
    %849 = vmatpush1.msra.mxu0 0.0
    %850 = vmatprep.subr.mxu0 0.0
    %851 = vmatpush1.msra.mxu0 0.0
    %852 = vmatprep.subr.mxu0 0.0
    %853 = vmatpush1.msra.mxu0 0.0
    %854 = vmatprep.subr.mxu0 0.0
    %855 = vmatpush1.msra.mxu0 0.0
    %856 = vmatprep.subr.mxu0 0.0
    %857 = vmatpush1.msra.mxu0 0.0
    %858 = vmatprep.subr.mxu0 0.0
    %859 = vmatpush1.msra.mxu0 0.0
    %860 = vmatprep.subr.mxu0 0.0
    %861 = vmatpush1.msra.mxu0 0.0
    %862 = vmatprep.subr.mxu0 0.0
    %863 = vmatpush1.msra.mxu0 0.0
    %864 = vmatprep.subr.mxu0 0.0
    %865 = vmatpush1.msra.mxu0 0.0
    %866 = vmatprep.subr.mxu0 0.0
    %867 = vmatpush1.msra.mxu0 0.0
    %868 = vmatprep.subr.mxu0 0.0
    %869 = vmatpush1.msra.mxu0 0.0
    %870 = vmatprep.mubr.f32.mxu0 0.0
    %871 = vmatmul.mubr.f32.gmra.mrb[0].mxu0 %v801
    %v872 = vpop.f32.mrb[0].mxu0
    %v873 = vadd.f32 0.0, %v872
    %v874 = vpop.f32.mrb[0].mxu0
    %875 = vmatprep.mubr.f32.mxu0 0.0
    %876 = vmatmul.mubr.f32.gmra.mrb[0].mxu0 %v804
    %v877 = vpop.f32.mrb[0].mxu0
    %v878 = vadd.f32 0.0, %v877
    %v879 = vpop.f32.mrb[0].mxu0
    %880 = vdwg.mxu0
    %883 = vrot.lane.b32.xlu0 %v333, 64
    %v884 = vpop.permute.xlu0 %883
    %885 = vrot.lane.b32.xlu0 %v334, 64
    %v886 = vpop.permute.xlu0 %885
    %v890 = vsel %vm703, %v786, 0
    %v893 = vsel %vm703, %v787, 0
    %895 = vmatprep.subr.mxu0 0.0
    %896 = vmatpush1.msra.mxu0 %v884
    %897 = vmatprep.subr.mxu0 0.0
    %898 = vmatpush1.msra.mxu0 %v886
    %899 = vmatprep.subr.mxu0 0.0
    %900 = vmatpush1.msra.mxu0 0.0
    %901 = vmatprep.subr.mxu0 0.0
    %902 = vmatpush1.msra.mxu0 0.0
    %903 = vmatprep.subr.mxu0 0.0
    %904 = vmatpush1.msra.mxu0 0.0
    %905 = vmatprep.subr.mxu0 0.0
    %906 = vmatpush1.msra.mxu0 0.0
    %907 = vmatprep.subr.mxu0 0.0
    %908 = vmatpush1.msra.mxu0 0.0
    %909 = vmatprep.subr.mxu0 0.0
    %910 = vmatpush1.msra.mxu0 0.0
    %911 = vmatprep.subr.mxu0 0.0
    %912 = vmatpush1.msra.mxu0 0.0
    %913 = vmatprep.subr.mxu0 0.0
    %914 = vmatpush1.msra.mxu0 0.0
    %915 = vmatprep.subr.mxu0 0.0
    %916 = vmatpush1.msra.mxu0 0.0
    %917 = vmatprep.subr.mxu0 0.0
    %918 = vmatpush1.msra.mxu0 0.0
    %919 = vmatprep.subr.mxu0 0.0
    %920 = vmatpush1.msra.mxu0 0.0
    %921 = vmatprep.subr.mxu0 0.0
    %922 = vmatpush1.msra.mxu0 0.0
    %923 = vmatprep.subr.mxu0 0.0
    %924 = vmatpush1.msra.mxu0 0.0
    %925 = vmatprep.subr.mxu0 0.0
    %926 = vmatpush1.msra.mxu0 0.0
    %927 = vmatprep.subr.mxu0 0.0
    %928 = vmatpush1.msra.mxu0 0.0
    %929 = vmatprep.subr.mxu0 0.0
    %930 = vmatpush1.msra.mxu0 0.0
    %931 = vmatprep.subr.mxu0 0.0
    %932 = vmatpush1.msra.mxu0 0.0
    %933 = vmatprep.subr.mxu0 0.0
    %934 = vmatpush1.msra.mxu0 0.0
    %935 = vmatprep.subr.mxu0 0.0
    %936 = vmatpush1.msra.mxu0 0.0
    %937 = vmatprep.subr.mxu0 0.0
    %938 = vmatpush1.msra.mxu0 0.0
    %939 = vmatprep.subr.mxu0 0.0
    %940 = vmatpush1.msra.mxu0 0.0
    %941 = vmatprep.subr.mxu0 0.0
    %942 = vmatpush1.msra.mxu0 0.0
    %943 = vmatprep.subr.mxu0 0.0
    %944 = vmatpush1.msra.mxu0 0.0
    %945 = vmatprep.subr.mxu0 0.0
    %946 = vmatpush1.msra.mxu0 0.0
    %947 = vmatprep.subr.mxu0 0.0
    %948 = vmatpush1.msra.mxu0 0.0
    %949 = vmatprep.subr.mxu0 0.0
    %950 = vmatpush1.msra.mxu0 0.0
    %951 = vmatprep.subr.mxu0 0.0
    %952 = vmatpush1.msra.mxu0 0.0
    %953 = vmatprep.subr.mxu0 0.0
    %954 = vmatpush1.msra.mxu0 0.0
    %955 = vmatprep.subr.mxu0 0.0
    %956 = vmatpush1.msra.mxu0 0.0
    %957 = vmatprep.subr.mxu0 0.0
    %958 = vmatpush1.msra.mxu0 0.0
    %959 = vmatprep.mubr.f32.mxu0 0.0
    %960 = vmatmul.mubr.f32.gmra.mrb[0].mxu0 %v890
    %v961 = vpop.f32.mrb[0].mxu0
    %v962 = vadd.f32 0.0, %v961
    %v963 = vpop.f32.mrb[0].mxu0
    %964 = vmatprep.mubr.f32.mxu0 0.0
    %965 = vmatmul.mubr.f32.gmra.mrb[0].mxu0 %v893
    %v966 = vpop.f32.mrb[0].mxu0
    %v967 = vadd.f32 0.0, %v966
    %v968 = vpop.f32.mrb[0].mxu0
    %969 = vdwg.mxu0
    %972 = vrot.lane.b32.xlu0 %v335, 64
    %v973 = vpop.permute.xlu0 %972
    %974 = vrot.lane.b32.xlu0 %v336, 64
    %v975 = vpop.permute.xlu0 %974
    %v979 = vsel %vm703, %v788, 0
    %v982 = vsel %vm703, %v789, 0
    %984 = vmatprep.subr.mxu0 0.0
    %985 = vmatpush1.msra.mxu0 %v973
    %986 = vmatprep.subr.mxu0 0.0
    %987 = vmatpush1.msra.mxu0 %v975
    %988 = vmatprep.subr.mxu0 0.0
    %989 = vmatpush1.msra.mxu0 0.0
    %990 = vmatprep.subr.mxu0 0.0
    %991 = vmatpush1.msra.mxu0 0.0
    %992 = vmatprep.subr.mxu0 0.0
    %993 = vmatpush1.msra.mxu0 0.0
    %994 = vmatprep.subr.mxu0 0.0
    %995 = vmatpush1.msra.mxu0 0.0
    %996 = vmatprep.subr.mxu0 0.0
    %997 = vmatpush1.msra.mxu0 0.0
    %998 = vmatprep.subr.mxu0 0.0
    %999 = vmatpush1.msra.mxu0 0.0
    %1000 = vmatprep.subr.mxu0 0.0
    %1001 = vmatpush1.msra.mxu0 0.0
    %1002 = vmatprep.subr.mxu0 0.0
    %1003 = vmatpush1.msra.mxu0 0.0
    %1004 = vmatprep.subr.mxu0 0.0
    %1005 = vmatpush1.msra.mxu0 0.0
    %1006 = vmatprep.subr.mxu0 0.0
    %1007 = vmatpush1.msra.mxu0 0.0
    %1008 = vmatprep.subr.mxu0 0.0
    %1009 = vmatpush1.msra.mxu0 0.0
    %1010 = vmatprep.subr.mxu0 0.0
    %1011 = vmatpush1.msra.mxu0 0.0
    %1012 = vmatprep.subr.mxu0 0.0
    %1013 = vmatpush1.msra.mxu0 0.0
    %1014 = vmatprep.subr.mxu0 0.0
    %1015 = vmatpush1.msra.mxu0 0.0
    %1016 = vmatprep.subr.mxu0 0.0
    %1017 = vmatpush1.msra.mxu0 0.0
    %1018 = vmatprep.subr.mxu0 0.0
    %1019 = vmatpush1.msra.mxu0 0.0
    %1020 = vmatprep.subr.mxu0 0.0
    %1021 = vmatpush1.msra.mxu0 0.0
    %1022 = vmatprep.subr.mxu0 0.0
    %1023 = vmatpush1.msra.mxu0 0.0
    %1024 = vmatprep.subr.mxu0 0.0
    %1025 = vmatpush1.msra.mxu0 0.0
    %1026 = vmatprep.subr.mxu0 0.0
    %1027 = vmatpush1.msra.mxu0 0.0
    %1028 = vmatprep.subr.mxu0 0.0
    %1029 = vmatpush1.msra.mxu0 0.0
    %1030 = vmatprep.subr.mxu0 0.0
    %1031 = vmatpush1.msra.mxu0 0.0
    %1032 = vmatprep.subr.mxu0 0.0
    %1033 = vmatpush1.msra.mxu0 0.0
    %1034 = vmatprep.subr.mxu0 0.0
    %1035 = vmatpush1.msra.mxu0 0.0
    %1036 = vmatprep.subr.mxu0 0.0
    %1037 = vmatpush1.msra.mxu0 0.0
    %1038 = vmatprep.subr.mxu0 0.0
    %1039 = vmatpush1.msra.mxu0 0.0
    %1040 = vmatprep.subr.mxu0 0.0
    %1041 = vmatpush1.msra.mxu0 0.0
    %1042 = vmatprep.subr.mxu0 0.0
    %1043 = vmatpush1.msra.mxu0 0.0
    %1044 = vmatprep.subr.mxu0 0.0
    %1045 = vmatpush1.msra.mxu0 0.0
    %1046 = vmatprep.subr.mxu0 0.0
    %1047 = vmatpush1.msra.mxu0 0.0
    %1048 = vmatprep.mubr.f32.mxu0 0.0
    %1049 = vmatmul.mubr.f32.gmra.mrb[0].mxu0 %v979
    %v1050 = vpop.f32.mrb[0].mxu0
    %v1051 = vadd.f32 0.0, %v1050
    %v1052 = vpop.f32.mrb[0].mxu0
    %1053 = vmatprep.mubr.f32.mxu0 0.0
    %1054 = vmatmul.mubr.f32.gmra.mrb[0].mxu0 %v982
    %v1055 = vpop.f32.mrb[0].mxu0
    %v1056 = vadd.f32 0.0, %v1055
    %v1057 = vpop.f32.mrb[0].mxu0
    %1058 = vdwg.mxu0
    %1061 = vrot.lane.b32.xlu0 %v337, 64
    %v1062 = vpop.permute.xlu0 %1061
    %1063 = vrot.lane.b32.xlu0 %v338, 64
    %v1064 = vpop.permute.xlu0 %1063
    %v1068 = vsel %vm703, %v790, 0
    %v1071 = vsel %vm703, %v791, 0
    %1073 = vmatprep.subr.mxu0 0.0
    %1074 = vmatpush1.msra.mxu0 %v1062
    %1075 = vmatprep.subr.mxu0 0.0
    %1076 = vmatpush1.msra.mxu0 %v1064
    %1077 = vmatprep.subr.mxu0 0.0
    %1078 = vmatpush1.msra.mxu0 0.0
    %1079 = vmatprep.subr.mxu0 0.0
    %1080 = vmatpush1.msra.mxu0 0.0
    %1081 = vmatprep.subr.mxu0 0.0
    %1082 = vmatpush1.msra.mxu0 0.0
    %1083 = vmatprep.subr.mxu0 0.0
    %1084 = vmatpush1.msra.mxu0 0.0
    %1085 = vmatprep.subr.mxu0 0.0
    %1086 = vmatpush1.msra.mxu0 0.0
    %1087 = vmatprep.subr.mxu0 0.0
    %1088 = vmatpush1.msra.mxu0 0.0
    %1089 = vmatprep.subr.mxu0 0.0
    %1090 = vmatpush1.msra.mxu0 0.0
    %1091 = vmatprep.subr.mxu0 0.0
    %1092 = vmatpush1.msra.mxu0 0.0
    %1093 = vmatprep.subr.mxu0 0.0
    %1094 = vmatpush1.msra.mxu0 0.0
    %1095 = vmatprep.subr.mxu0 0.0
    %1096 = vmatpush1.msra.mxu0 0.0
    %1097 = vmatprep.subr.mxu0 0.0
    %1098 = vmatpush1.msra.mxu0 0.0
    %1099 = vmatprep.subr.mxu0 0.0
    %1100 = vmatpush1.msra.mxu0 0.0
    %1101 = vmatprep.subr.mxu0 0.0
    %1102 = vmatpush1.msra.mxu0 0.0
    %1103 = vmatprep.subr.mxu0 0.0
    %1104 = vmatpush1.msra.mxu0 0.0
    %1105 = vmatprep.subr.mxu0 0.0
    %1106 = vmatpush1.msra.mxu0 0.0
    %1107 = vmatprep.subr.mxu0 0.0
    %1108 = vmatpush1.msra.mxu0 0.0
    %1109 = vmatprep.subr.mxu0 0.0
    %1110 = vmatpush1.msra.mxu0 0.0
    %1111 = vmatprep.subr.mxu0 0.0
    %1112 = vmatpush1.msra.mxu0 0.0
    %1113 = vmatprep.subr.mxu0 0.0
    %1114 = vmatpush1.msra.mxu0 0.0
    %1115 = vmatprep.subr.mxu0 0.0
    %1116 = vmatpush1.msra.mxu0 0.0
    %1117 = vmatprep.subr.mxu0 0.0
    %1118 = vmatpush1.msra.mxu0 0.0
    %1119 = vmatprep.subr.mxu0 0.0
    %1120 = vmatpush1.msra.mxu0 0.0
    %1121 = vmatprep.subr.mxu0 0.0
    %1122 = vmatpush1.msra.mxu0 0.0
    %1123 = vmatprep.subr.mxu0 0.0
    %1124 = vmatpush1.msra.mxu0 0.0
    %1125 = vmatprep.subr.mxu0 0.0
    %1126 = vmatpush1.msra.mxu0 0.0
    %1127 = vmatprep.subr.mxu0 0.0
    %1128 = vmatpush1.msra.mxu0 0.0
    %1129 = vmatprep.subr.mxu0 0.0
    %1130 = vmatpush1.msra.mxu0 0.0
    %1131 = vmatprep.subr.mxu0 0.0
    %1132 = vmatpush1.msra.mxu0 0.0
    %1133 = vmatprep.subr.mxu0 0.0
    %1134 = vmatpush1.msra.mxu0 0.0
    %1135 = vmatprep.subr.mxu0 0.0
    %1136 = vmatpush1.msra.mxu0 0.0
    %1137 = vmatprep.mubr.f32.mxu0 0.0
    %1138 = vmatmul.mubr.f32.gmra.mrb[0].mxu0 %v1068
    %v1139 = vpop.f32.mrb[0].mxu0
    %v1140 = vadd.f32 0.0, %v1139
    %v1141 = vpop.f32.mrb[0].mxu0
    %1142 = vmatprep.mubr.f32.mxu0 0.0
    %1143 = vmatmul.mubr.f32.gmra.mrb[0].mxu0 %v1071
    %v1144 = vpop.f32.mrb[0].mxu0
    %v1145 = vadd.f32 0.0, %v1144
    %v1146 = vpop.f32.mrb[0].mxu0
    %1147 = vdwg.mxu0
    %v1148 = vadd.f32 %v873, %v962
    %v1149 = vadd.f32 %v878, %v967
    %v1150 = vadd.f32 %v1148, %v1051
    %v1151 = vadd.f32 %v1149, %v1056
    %v1152 = vadd.f32 %v1150, %v1140
    %v1153 = vadd.f32 %v1151, %v1145
    %v1154 = vlaneseq
    %v1155 = vshrl.u32 %v1154, 7
    %v1156 = vsub.s32 0, %v1155
    %v1157 = vrot.slane %v154, %v1156
    %v1159 = vsel %vm177, %v1152, 0
    %v1162 = vsel %vm177, %v1153, 0
    %1164 = vmatprep.subr.mxu0 0.0
    %1165 = vmatpush1.msra.mxu0 %v150
    %1166 = vmatprep.subr.mxu0 0.0
    %1167 = vmatpush1.msra.mxu0 %v151
    %1168 = vmatprep.subr.mxu0 0.0
    %1169 = vmatpush1.msra.mxu0 %v152
    %1170 = vmatprep.subr.mxu0 0.0
    %1171 = vmatpush1.msra.mxu0 %v153
    %1172 = vmatprep.subr.mxu0 0.0
    %1173 = vmatpush1.msra.mxu0 0.0
    %1174 = vmatprep.subr.mxu0 0.0
    %1175 = vmatpush1.msra.mxu0 0.0
    %1176 = vmatprep.subr.mxu0 0.0
    %1177 = vmatpush1.msra.mxu0 0.0
    %1178 = vmatprep.subr.mxu0 0.0
    %1179 = vmatpush1.msra.mxu0 0.0
    %1180 = vmatprep.subr.mxu0 0.0
    %1181 = vmatpush1.msra.mxu0 0.0
    %1182 = vmatprep.subr.mxu0 0.0
    %1183 = vmatpush1.msra.mxu0 0.0
    %1184 = vmatprep.subr.mxu0 0.0
    %1185 = vmatpush1.msra.mxu0 0.0
    %1186 = vmatprep.subr.mxu0 0.0
    %1187 = vmatpush1.msra.mxu0 0.0
    %1188 = vmatprep.subr.mxu0 0.0
    %1189 = vmatpush1.msra.mxu0 0.0
    %1190 = vmatprep.subr.mxu0 0.0
    %1191 = vmatpush1.msra.mxu0 0.0
    %1192 = vmatprep.subr.mxu0 0.0
    %1193 = vmatpush1.msra.mxu0 0.0
    %1194 = vmatprep.subr.mxu0 0.0
    %1195 = vmatpush1.msra.mxu0 0.0
    %1196 = vmatprep.subr.mxu0 0.0
    %1197 = vmatpush1.msra.mxu0 0.0
    %1198 = vmatprep.subr.mxu0 0.0
    %1199 = vmatpush1.msra.mxu0 0.0
    %1200 = vmatprep.subr.mxu0 0.0
    %1201 = vmatpush1.msra.mxu0 0.0
    %1202 = vmatprep.subr.mxu0 0.0
    %1203 = vmatpush1.msra.mxu0 0.0
    %1204 = vmatprep.subr.mxu0 0.0
    %1205 = vmatpush1.msra.mxu0 0.0
    %1206 = vmatprep.subr.mxu0 0.0
    %1207 = vmatpush1.msra.mxu0 0.0
    %1208 = vmatprep.subr.mxu0 0.0
    %1209 = vmatpush1.msra.mxu0 0.0
    %1210 = vmatprep.subr.mxu0 0.0
    %1211 = vmatpush1.msra.mxu0 0.0
    %1212 = vmatprep.subr.mxu0 0.0
    %1213 = vmatpush1.msra.mxu0 0.0
    %1214 = vmatprep.subr.mxu0 0.0
    %1215 = vmatpush1.msra.mxu0 0.0
    %1216 = vmatprep.subr.mxu0 0.0
    %1217 = vmatpush1.msra.mxu0 0.0
    %1218 = vmatprep.subr.mxu0 0.0
    %1219 = vmatpush1.msra.mxu0 0.0
    %1220 = vmatprep.subr.mxu0 0.0
    %1221 = vmatpush1.msra.mxu0 0.0
    %1222 = vmatprep.subr.mxu0 0.0
    %1223 = vmatpush1.msra.mxu0 0.0
    %1224 = vmatprep.subr.mxu0 0.0
    %1225 = vmatpush1.msra.mxu0 0.0
    %1226 = vmatprep.subr.mxu0 0.0
    %1227 = vmatpush1.msra.mxu0 0.0
    %1228 = vmatprep.mubr.f32.mxu0 0.0
    %1229 = vmatmul.mubr.f32.gmra.mrb[0].mxu0 %v1159
    %v1230 = vpop.f32.mrb[0].mxu0
    %v1231 = vadd.f32 %v1157, %v1230
    %v1232 = vpop.f32.mrb[0].mxu0
    %1233 = vmatprep.mubr.f32.mxu0 0.0
    %1234 = vmatmul.mubr.f32.gmra.mrb[0].mxu0 %v1162
    %v1235 = vpop.f32.mrb[0].mxu0
    %v1236 = vadd.f32 %v1157, %v1235
    %v1237 = vpop.f32.mrb[0].mxu0
    %1238 = vdwg.mxu0
    %v1239 = vadd.f32 %v127, %v1231
    %v1240 = vadd.f32 %v132, %v1236
    %v1241 = vsel %vm177, %v1239, 0.0
    %1242 = vadd.xlane.f32.xlu0 %v1241
    %v1243 = vpop.xlane.xlu0 %1242
    %v1244 = vsel %vm177, %v1240, 0.0
    %1245 = vadd.xlane.f32.xlu0 %v1244
    %v1246 = vpop.xlane.xlu0 %1245
    %v1247 = vrcp.pop 32.0
    %v1248 = vmul.f32 %v1243, %v1247
    %v1249 = vmul.f32 %v1246, %v1247
    %v1250 = vsub.f32 %v1239, %v1248
    %v1251 = vsub.f32 %v1240, %v1249
    %v1252 = vmul.f32 %v1250, %v1250
    %v1253 = vmul.f32 %v1251, %v1251
    %v1254 = vsel %vm177, %v1252, 0.0
    %1255 = vadd.xlane.f32.xlu0 %v1254
    %v1256 = vpop.xlane.xlu0 %1255
    %v1257 = vsel %vm177, %v1253, 0.0
    %1258 = vadd.xlane.f32.xlu0 %v1257
    %v1259 = vpop.xlane.xlu0 %1258
    %v1260 = vmul.f32 %v1256, %v1247
    %v1261 = vmul.f32 %v1259, %v1247
    %v1262 = vadd.f32 %v1260, 1e-05
    %v1263 = vadd.f32 %v1261, 1e-05
    %v1264 = vrsqrt.pop %v1262
    %v1265 = vrsqrt.pop %v1263
    %v1266 = vmul.f32 %v1250, %v1264
    %v1267 = vmul.f32 %v1251, %v1265
    %v1268 = vlaneseq
    %v1269 = vshrl.u32 %v1268, 7
    %v1270 = vsub.s32 0, %v1269
    %v1271 = vrot.slane %v169, %v1270
    %v1272 = vmul.f32 %v1266, %v1271
    %v1273 = vmul.f32 %v1267, %v1271
    %v1274 = vlaneseq
    %v1275 = vshrl.u32 %v1274, 7
    %v1276 = vsub.s32 0, %v1275
    %v1277 = vrot.slane %v170, %v1276
    %v1278 = vadd.f32 %v1272, %v1277
    %v1279 = vadd.f32 %v1273, %v1277
    %v1280 = vlaneseq
    %v1281 = vshrl.u32 %v1280, 7
    %v1282 = vsub.s32 0, %v1281
    %v1283 = vrot.slane %v159, %v1282
    %v1285 = vsel %vm177, %v1278, 0
    %v1288 = vsel %vm177, %v1279, 0
    %1290 = vmatprep.subr.mxu0 0.0
    %1291 = vmatpush1.msra.mxu0 %v155
    %1292 = vmatprep.subr.mxu0 0.0
    %1293 = vmatpush1.msra.mxu0 %v156
    %1294 = vmatprep.subr.mxu0 0.0
    %1295 = vmatpush1.msra.mxu0 %v157
    %1296 = vmatprep.subr.mxu0 0.0
    %1297 = vmatpush1.msra.mxu0 %v158
    %1298 = vmatprep.subr.mxu0 0.0
    %1299 = vmatpush1.msra.mxu0 0.0
    %1300 = vmatprep.subr.mxu0 0.0
    %1301 = vmatpush1.msra.mxu0 0.0
    %1302 = vmatprep.subr.mxu0 0.0
    %1303 = vmatpush1.msra.mxu0 0.0
    %1304 = vmatprep.subr.mxu0 0.0
    %1305 = vmatpush1.msra.mxu0 0.0
    %1306 = vmatprep.subr.mxu0 0.0
    %1307 = vmatpush1.msra.mxu0 0.0
    %1308 = vmatprep.subr.mxu0 0.0
    %1309 = vmatpush1.msra.mxu0 0.0
    %1310 = vmatprep.subr.mxu0 0.0
    %1311 = vmatpush1.msra.mxu0 0.0
    %1312 = vmatprep.subr.mxu0 0.0
    %1313 = vmatpush1.msra.mxu0 0.0
    %1314 = vmatprep.subr.mxu0 0.0
    %1315 = vmatpush1.msra.mxu0 0.0
    %1316 = vmatprep.subr.mxu0 0.0
    %1317 = vmatpush1.msra.mxu0 0.0
    %1318 = vmatprep.subr.mxu0 0.0
    %1319 = vmatpush1.msra.mxu0 0.0
    %1320 = vmatprep.subr.mxu0 0.0
    %1321 = vmatpush1.msra.mxu0 0.0
    %1322 = vmatprep.subr.mxu0 0.0
    %1323 = vmatpush1.msra.mxu0 0.0
    %1324 = vmatprep.subr.mxu0 0.0
    %1325 = vmatpush1.msra.mxu0 0.0
    %1326 = vmatprep.subr.mxu0 0.0
    %1327 = vmatpush1.msra.mxu0 0.0
    %1328 = vmatprep.subr.mxu0 0.0
    %1329 = vmatpush1.msra.mxu0 0.0
    %1330 = vmatprep.subr.mxu0 0.0
    %1331 = vmatpush1.msra.mxu0 0.0
    %1332 = vmatprep.subr.mxu0 0.0
    %1333 = vmatpush1.msra.mxu0 0.0
    %1334 = vmatprep.subr.mxu0 0.0
    %1335 = vmatpush1.msra.mxu0 0.0
    %1336 = vmatprep.subr.mxu0 0.0
    %1337 = vmatpush1.msra.mxu0 0.0
    %1338 = vmatprep.subr.mxu0 0.0
    %1339 = vmatpush1.msra.mxu0 0.0
    %1340 = vmatprep.subr.mxu0 0.0
    %1341 = vmatpush1.msra.mxu0 0.0
    %1342 = vmatprep.subr.mxu0 0.0
    %1343 = vmatpush1.msra.mxu0 0.0
    %1344 = vmatprep.subr.mxu0 0.0
    %1345 = vmatpush1.msra.mxu0 0.0
    %1346 = vmatprep.subr.mxu0 0.0
    %1347 = vmatpush1.msra.mxu0 0.0
    %1348 = vmatprep.subr.mxu0 0.0
    %1349 = vmatpush1.msra.mxu0 0.0
    %1350 = vmatprep.subr.mxu0 0.0
    %1351 = vmatpush1.msra.mxu0 0.0
    %1352 = vmatprep.subr.mxu0 0.0
    %1353 = vmatpush1.msra.mxu0 0.0
    %1354 = vmatprep.mubr.f32.mxu0 0.0
    %1355 = vmatmul.mubr.f32.gmra.mrb[0].mxu0 %v1285
    %v1356 = vpop.f32.mrb[0].mxu0
    %v1357 = vadd.f32 %v1283, %v1356
    %v1358 = vpop.f32.mrb[0].mxu0
    %1359 = vmatprep.mubr.f32.mxu0 0.0
    %1360 = vmatmul.mubr.f32.gmra.mrb[0].mxu0 %v1288
    %v1361 = vpop.f32.mrb[0].mxu0
    %v1362 = vadd.f32 %v1283, %v1361
    %v1363 = vpop.f32.mrb[0].mxu0
    %1364 = vdwg.mxu0
    %v1365 = vmax.f32 %v1357, 0.0
    %v1366 = vmax.f32 %v1362, 0.0
    %v1367 = vlaneseq
    %v1368 = vshrl.u32 %v1367, 7
    %v1369 = vsub.s32 0, %v1368
    %v1370 = vrot.slane %v168, %v1369
    %vm1371 = vcmask 523264
    %v1373 = vsel %vm1371, %v1365, 0
    %v1376 = vsel %vm1371, %v1366, 0
    %1378 = vmatprep.subr.mxu0 0.0
    %1379 = vmatpush1.msra.mxu0 %v160
    %1380 = vmatprep.subr.mxu0 0.0
    %1381 = vmatpush1.msra.mxu0 %v161
    %1382 = vmatprep.subr.mxu0 0.0
    %1383 = vmatpush1.msra.mxu0 %v162
    %1384 = vmatprep.subr.mxu0 0.0
    %1385 = vmatpush1.msra.mxu0 %v163
    %1386 = vmatprep.subr.mxu0 0.0
    %1387 = vmatpush1.msra.mxu0 %v164
    %1388 = vmatprep.subr.mxu0 0.0
    %1389 = vmatpush1.msra.mxu0 %v165
    %1390 = vmatprep.subr.mxu0 0.0
    %1391 = vmatpush1.msra.mxu0 %v166
    %1392 = vmatprep.subr.mxu0 0.0
    %1393 = vmatpush1.msra.mxu0 %v167
    %1394 = vmatprep.subr.mxu0 0.0
    %1395 = vmatpush1.msra.mxu0 0.0
    %1396 = vmatprep.subr.mxu0 0.0
    %1397 = vmatpush1.msra.mxu0 0.0
    %1398 = vmatprep.subr.mxu0 0.0
    %1399 = vmatpush1.msra.mxu0 0.0
    %1400 = vmatprep.subr.mxu0 0.0
    %1401 = vmatpush1.msra.mxu0 0.0
    %1402 = vmatprep.subr.mxu0 0.0
    %1403 = vmatpush1.msra.mxu0 0.0
    %1404 = vmatprep.subr.mxu0 0.0
    %1405 = vmatpush1.msra.mxu0 0.0
    %1406 = vmatprep.subr.mxu0 0.0
    %1407 = vmatpush1.msra.mxu0 0.0
    %1408 = vmatprep.subr.mxu0 0.0
    %1409 = vmatpush1.msra.mxu0 0.0
    %1410 = vmatprep.subr.mxu0 0.0
    %1411 = vmatpush1.msra.mxu0 0.0
    %1412 = vmatprep.subr.mxu0 0.0
    %1413 = vmatpush1.msra.mxu0 0.0
    %1414 = vmatprep.subr.mxu0 0.0
    %1415 = vmatpush1.msra.mxu0 0.0
    %1416 = vmatprep.subr.mxu0 0.0
    %1417 = vmatpush1.msra.mxu0 0.0
    %1418 = vmatprep.subr.mxu0 0.0
    %1419 = vmatpush1.msra.mxu0 0.0
    %1420 = vmatprep.subr.mxu0 0.0
    %1421 = vmatpush1.msra.mxu0 0.0
    %1422 = vmatprep.subr.mxu0 0.0
    %1423 = vmatpush1.msra.mxu0 0.0
    %1424 = vmatprep.subr.mxu0 0.0
    %1425 = vmatpush1.msra.mxu0 0.0
    %1426 = vmatprep.subr.mxu0 0.0
    %1427 = vmatpush1.msra.mxu0 0.0
    %1428 = vmatprep.subr.mxu0 0.0
    %1429 = vmatpush1.msra.mxu0 0.0
    %1430 = vmatprep.subr.mxu0 0.0
    %1431 = vmatpush1.msra.mxu0 0.0
    %1432 = vmatprep.subr.mxu0 0.0
    %1433 = vmatpush1.msra.mxu0 0.0
    %1434 = vmatprep.subr.mxu0 0.0
    %1435 = vmatpush1.msra.mxu0 0.0
    %1436 = vmatprep.subr.mxu0 0.0
    %1437 = vmatpush1.msra.mxu0 0.0
    %1438 = vmatprep.subr.mxu0 0.0
    %1439 = vmatpush1.msra.mxu0 0.0
    %1440 = vmatprep.subr.mxu0 0.0
    %1441 = vmatpush1.msra.mxu0 0.0
    %1442 = vmatprep.mubr.f32.mxu0 0.0
    %1443 = vmatmul.mubr.f32.gmra.mrb[0].mxu0 %v1373
    %v1444 = vpop.f32.mrb[0].mxu0
    %v1445 = vadd.f32 %v1370, %v1444
    %v1446 = vpop.f32.mrb[0].mxu0
    %1447 = vmatprep.mubr.f32.mxu0 0.0
    %1448 = vmatmul.mubr.f32.gmra.mrb[0].mxu0 %v1376
    %v1449 = vpop.f32.mrb[0].mxu0
    %v1450 = vadd.f32 %v1370, %v1449
    %v1451 = vpop.f32.mrb[0].mxu0
    %1452 = vdwg.mxu0
    %v1453 = vadd.f32 %v1278, %v1445
    %v1454 = vadd.f32 %v1279, %v1450
    %v1455 = vsel %vm177, %v1453, 0.0
    %1456 = vadd.xlane.f32.xlu0 %v1455
    %v1457 = vpop.xlane.xlu0 %1456
    %v1458 = vsel %vm177, %v1454, 0.0
    %1459 = vadd.xlane.f32.xlu0 %v1458
    %v1460 = vpop.xlane.xlu0 %1459
    %v1461 = vmul.f32 %v1457, %v1247
    %v1462 = vmul.f32 %v1460, %v1247
    %v1463 = vsub.f32 %v1453, %v1461
    %v1464 = vsub.f32 %v1454, %v1462
    %v1465 = vmul.f32 %v1463, %v1463
    %v1466 = vmul.f32 %v1464, %v1464
    %v1467 = vsel %vm177, %v1465, 0.0
    %1468 = vadd.xlane.f32.xlu0 %v1467
    %v1469 = vpop.xlane.xlu0 %1468
    %v1470 = vsel %vm177, %v1466, 0.0
    %1471 = vadd.xlane.f32.xlu0 %v1470
    %v1472 = vpop.xlane.xlu0 %1471
    %v1473 = vmul.f32 %v1469, %v1247
    %v1474 = vmul.f32 %v1472, %v1247
    %v1475 = vadd.f32 %v1473, 1e-05
    %v1476 = vadd.f32 %v1474, 1e-05
    %v1477 = vrsqrt.pop %v1475
    %v1478 = vrsqrt.pop %v1476
    %v1479 = vmul.f32 %v1463, %v1477
    %v1480 = vmul.f32 %v1464, %v1478
    %v1481 = vlaneseq
    %v1482 = vshrl.u32 %v1481, 7
    %v1483 = vsub.s32 0, %v1482
    %v1484 = vrot.slane %v171, %v1483
    %v1485 = vmul.f32 %v1479, %v1484
    %v1486 = vmul.f32 %v1480, %v1484
    %v1487 = vlaneseq
    %v1488 = vshrl.u32 %v1487, 7
    %v1489 = vsub.s32 0, %v1488
    %v1490 = vrot.slane %v172, %v1489
    %v1491 = vadd.f32 %v1485, %v1490
    %v1492 = vadd.f32 %v1486, %v1490
    %v1493 = vld [vmem:[#allocation2 + $0x1c0] sm:$0xff]
    %v1494 = vld [vmem:[#allocation2 + $0x1c8] sm:$0xff]
    %v1495 = vld [vmem:[#allocation2 + $0x1d0] sm:$0xff]
    %v1496 = vld [vmem:[#allocation2 + $0x1d8] sm:$0xff]
    %v1497 = vld [vmem:[#allocation2 + $0x1e0] sm:$0x1]
    %v1498 = vld [vmem:[#allocation2 + $0x1e8] sm:$0xff]
    %v1499 = vld [vmem:[#allocation2 + $0x1f0] sm:$0xff]
    %v1500 = vld [vmem:[#allocation2 + $0x1f8] sm:$0xff]
    %v1501 = vld [vmem:[#allocation2 + $0x200] sm:$0xff]
    %v1502 = vld [vmem:[#allocation2 + $0x208] sm:$0x1]
    %v1503 = vld [vmem:[#allocation2 + $0x210] sm:$0xff]
    %v1504 = vld [vmem:[#allocation2 + $0x218] sm:$0xff]
    %v1505 = vld [vmem:[#allocation2 + $0x220] sm:$0xff]
    %v1506 = vld [vmem:[#allocation2 + $0x228] sm:$0xff]
    %v1507 = vld [vmem:[#allocation2 + $0x230] sm:$0x1]
    %v1508 = vld [vmem:[#allocation2 + $0x238] sm:$0xff]
    %v1509 = vld [vmem:[#allocation2 + $0x240] sm:$0xff]
    %v1510 = vld [vmem:[#allocation2 + $0x248] sm:$0xff]
    %v1511 = vld [vmem:[#allocation2 + $0x250] sm:$0xff]
    %v1512 = vld [vmem:[#allocation2 + $0x258] sm:$0xff]
    %v1513 = vld [vmem:[#allocation2 + $0x260] sm:$0xff]
    %v1514 = vld [vmem:[#allocation2 + $0x268] sm:$0xff]
    %v1515 = vld [vmem:[#allocation2 + $0x270] sm:$0xff]
    %v1516 = vld [vmem:[#allocation2 + $0x278] sm:$0x1]
    %v1517 = vld [vmem:[#allocation2 + $0x280] sm:$0x1]
    %v1518 = vld [vmem:[#allocation2 + $0x288] sm:$0x1]
    %v1519 = vld [vmem:[#allocation2 + $0x290] sm:$0x1]
    %v1520 = vld [vmem:[#allocation2 + $0x298] sm:$0x1]
    %v1521 = vlaneseq
    %v1522 = vshrl.u32 %v1521, 7
    %v1523 = vsub.s32 0, %v1522
    %v1524 = vrot.slane %v1497, %v1523
    %v1526 = vsel %vm177, %v1491, 0
    %v1529 = vsel %vm177, %v1492, 0
    %1531 = vmatprep.subr.mxu0 0.0
    %1532 = vmatpush1.msra.mxu0 %v1493
    %1533 = vmatprep.subr.mxu0 0.0
    %1534 = vmatpush1.msra.mxu0 %v1494
    %1535 = vmatprep.subr.mxu0 0.0
    %1536 = vmatpush1.msra.mxu0 %v1495
    %1537 = vmatprep.subr.mxu0 0.0
    %1538 = vmatpush1.msra.mxu0 %v1496
    %1539 = vmatprep.subr.mxu0 0.0
    %1540 = vmatpush1.msra.mxu0 0.0
    %1541 = vmatprep.subr.mxu0 0.0
    %1542 = vmatpush1.msra.mxu0 0.0
    %1543 = vmatprep.subr.mxu0 0.0
    %1544 = vmatpush1.msra.mxu0 0.0
    %1545 = vmatprep.subr.mxu0 0.0
    %1546 = vmatpush1.msra.mxu0 0.0
    %1547 = vmatprep.subr.mxu0 0.0
    %1548 = vmatpush1.msra.mxu0 0.0
    %1549 = vmatprep.subr.mxu0 0.0
    %1550 = vmatpush1.msra.mxu0 0.0
    %1551 = vmatprep.subr.mxu0 0.0
    %1552 = vmatpush1.msra.mxu0 0.0
    %1553 = vmatprep.subr.mxu0 0.0
    %1554 = vmatpush1.msra.mxu0 0.0
    %1555 = vmatprep.subr.mxu0 0.0
    %1556 = vmatpush1.msra.mxu0 0.0
    %1557 = vmatprep.subr.mxu0 0.0
    %1558 = vmatpush1.msra.mxu0 0.0
    %1559 = vmatprep.subr.mxu0 0.0
    %1560 = vmatpush1.msra.mxu0 0.0
    %1561 = vmatprep.subr.mxu0 0.0
    %1562 = vmatpush1.msra.mxu0 0.0
    %1563 = vmatprep.subr.mxu0 0.0
    %1564 = vmatpush1.msra.mxu0 0.0
    %1565 = vmatprep.subr.mxu0 0.0
    %1566 = vmatpush1.msra.mxu0 0.0
    %1567 = vmatprep.subr.mxu0 0.0
    %1568 = vmatpush1.msra.mxu0 0.0
    %1569 = vmatprep.subr.mxu0 0.0
    %1570 = vmatpush1.msra.mxu0 0.0
    %1571 = vmatprep.subr.mxu0 0.0
    %1572 = vmatpush1.msra.mxu0 0.0
    %1573 = vmatprep.subr.mxu0 0.0
    %1574 = vmatpush1.msra.mxu0 0.0
    %1575 = vmatprep.subr.mxu0 0.0
    %1576 = vmatpush1.msra.mxu0 0.0
    %1577 = vmatprep.subr.mxu0 0.0
    %1578 = vmatpush1.msra.mxu0 0.0
    %1579 = vmatprep.subr.mxu0 0.0
    %1580 = vmatpush1.msra.mxu0 0.0
    %1581 = vmatprep.subr.mxu0 0.0
    %1582 = vmatpush1.msra.mxu0 0.0
    %1583 = vmatprep.subr.mxu0 0.0
    %1584 = vmatpush1.msra.mxu0 0.0
    %1585 = vmatprep.subr.mxu0 0.0
    %1586 = vmatpush1.msra.mxu0 0.0
    %1587 = vmatprep.subr.mxu0 0.0
    %1588 = vmatpush1.msra.mxu0 0.0
    %1589 = vmatprep.subr.mxu0 0.0
    %1590 = vmatpush1.msra.mxu0 0.0
    %1591 = vmatprep.subr.mxu0 0.0
    %1592 = vmatpush1.msra.mxu0 0.0
    %1593 = vmatprep.subr.mxu0 0.0
    %1594 = vmatpush1.msra.mxu0 0.0
    %1595 = vmatprep.mubr.f32.mxu0 0.0
    %1596 = vmatmul.mubr.f32.gmra.mrb[0].mxu0 %v1526
    %v1597 = vpop.f32.mrb[0].mxu0
    %v1598 = vadd.f32 %v1524, %v1597
    %v1599 = vpop.f32.mrb[0].mxu0
    %1600 = vmatprep.mubr.f32.mxu0 0.0
    %1601 = vmatmul.mubr.f32.gmra.mrb[0].mxu0 %v1529
    %v1602 = vpop.f32.mrb[0].mxu0
    %v1603 = vadd.f32 %v1524, %v1602
    %v1604 = vpop.f32.mrb[0].mxu0
    %1605 = vdwg.mxu0
    %v1606 = vmul.f32 %v1598, %v135
    %v1607 = vmul.f32 %v1603, %v136
    %v1608 = vmul.f32 %v1598, %v137
    %v1609 = vmul.f32 %v1603, %v138
    %v1610 = vmul.f32 %v1598, %v139
    %v1611 = vmul.f32 %v1603, %v140
    %v1612 = vmul.f32 %v1598, %v141
    %v1613 = vmul.f32 %v1603, %v142
    %v1614 = vmul.f32 %v1598, %v276
    %v1615 = vmul.f32 %v1603, %v278
    %v1616 = vmul.f32 %v1598, %v280
    %v1617 = vmul.f32 %v1603, %v282
    %v1618 = vmul.f32 %v1598, %v284
    %v1619 = vmul.f32 %v1603, %v286
    %v1620 = vmul.f32 %v1598, %v288
    %v1621 = vmul.f32 %v1603, %v290
    %v1622 = vmul.f32 %v1598, %v308
    %v1623 = vmul.f32 %v1603, %v310
    %v1624 = vmul.f32 %v1598, %v312
    %v1625 = vmul.f32 %v1603, %v314
    %v1626 = vmul.f32 %v1598, %v316
    %v1627 = vmul.f32 %v1603, %v318
    %v1628 = vmul.f32 %v1598, %v320
    %v1629 = vmul.f32 %v1603, %v322
    %1632 = vrot.lane.b32.xlu0 %v1614, 96
    %v1633 = vpop.permute.xlu0 %1632
    %1634 = vrot.lane.b32.xlu0 %v1615, 96
    %v1635 = vpop.permute.xlu0 %1634
    %v1637 = vsel %vm177, %v1606, 0
    %v1640 = vsel %vm177, %v1607, 0
    %v1642 = vsel %vm177, %v1633, 0
    %v1644 = vsel %vm177, %v1635, 0
    %1646 = vmatprep.subr.mxu0 0.0
    %1647 = vmatpush1.xpose.msra.mxu0 %v1642
    %1648 = vmatprep.subr.mxu0 0.0
    %1649 = vmatpush1.xpose.msra.mxu0 %v1644
    %1650 = vmatprep.subr.mxu0 0.0
    %1651 = vmatpush1.xpose.msra.mxu0 0.0
    %1652 = vmatprep.subr.mxu0 0.0
    %1653 = vmatpush1.xpose.msra.mxu0 0.0
    %1654 = vmatprep.subr.mxu0 0.0
    %1655 = vmatpush1.xpose.msra.mxu0 0.0
    %1656 = vmatprep.subr.mxu0 0.0
    %1657 = vmatpush1.xpose.msra.mxu0 0.0
    %1658 = vmatprep.subr.mxu0 0.0
    %1659 = vmatpush1.xpose.msra.mxu0 0.0
    %1660 = vmatprep.subr.mxu0 0.0
    %1661 = vmatpush1.xpose.msra.mxu0 0.0
    %1662 = vmatprep.subr.mxu0 0.0
    %1663 = vmatpush1.xpose.msra.mxu0 0.0
    %1664 = vmatprep.subr.mxu0 0.0
    %1665 = vmatpush1.xpose.msra.mxu0 0.0
    %1666 = vmatprep.subr.mxu0 0.0
    %1667 = vmatpush1.xpose.msra.mxu0 0.0
    %1668 = vmatprep.subr.mxu0 0.0
    %1669 = vmatpush1.xpose.msra.mxu0 0.0
    %1670 = vmatprep.subr.mxu0 0.0
    %1671 = vmatpush1.xpose.msra.mxu0 0.0
    %1672 = vmatprep.subr.mxu0 0.0
    %1673 = vmatpush1.xpose.msra.mxu0 0.0
    %1674 = vmatprep.subr.mxu0 0.0
    %1675 = vmatpush1.xpose.msra.mxu0 0.0
    %1676 = vmatprep.subr.mxu0 0.0
    %1677 = vmatpush1.xpose.msra.mxu0 0.0
    %1678 = vmatprep.subr.mxu0 0.0
    %1679 = vmatpush1.xpose.msra.mxu0 0.0
    %1680 = vmatprep.subr.mxu0 0.0
    %1681 = vmatpush1.xpose.msra.mxu0 0.0
    %1682 = vmatprep.subr.mxu0 0.0
    %1683 = vmatpush1.xpose.msra.mxu0 0.0
    %1684 = vmatprep.subr.mxu0 0.0
    %1685 = vmatpush1.xpose.msra.mxu0 0.0
    %1686 = vmatprep.subr.mxu0 0.0
    %1687 = vmatpush1.xpose.msra.mxu0 0.0
    %1688 = vmatprep.subr.mxu0 0.0
    %1689 = vmatpush1.xpose.msra.mxu0 0.0
    %1690 = vmatprep.subr.mxu0 0.0
    %1691 = vmatpush1.xpose.msra.mxu0 0.0
    %1692 = vmatprep.subr.mxu0 0.0
    %1693 = vmatpush1.xpose.msra.mxu0 0.0
    %1694 = vmatprep.subr.mxu0 0.0
    %1695 = vmatpush1.xpose.msra.mxu0 0.0
    %1696 = vmatprep.subr.mxu0 0.0
    %1697 = vmatpush1.xpose.msra.mxu0 0.0
    %1698 = vmatprep.subr.mxu0 0.0
    %1699 = vmatpush1.xpose.msra.mxu0 0.0
    %1700 = vmatprep.subr.mxu0 0.0
    %1701 = vmatpush1.xpose.msra.mxu0 0.0
    %1702 = vmatprep.subr.mxu0 0.0
    %1703 = vmatpush1.xpose.msra.mxu0 0.0
    %1704 = vmatprep.subr.mxu0 0.0
    %1705 = vmatpush1.xpose.msra.mxu0 0.0
    %1706 = vmatprep.subr.mxu0 0.0
    %1707 = vmatpush1.xpose.msra.mxu0 0.0
    %1708 = vmatprep.subr.mxu0 0.0
    %1709 = vmatpush1.xpose.msra.mxu0 0.0
    %1710 = vmatprep.mubr.f32.mxu0 0.0
    %1711 = vmatmul.mubr.f32.gmra.mrb[0].mxu0 %v1637
    %v1712 = vpop.f32.mrb[0].mxu0
    %v1713 = vadd.f32 %v143, %v1712
    %v1714 = vpop.f32.mrb[0].mxu0
    %1715 = vmatprep.mubr.f32.mxu0 0.0
    %1716 = vmatmul.mubr.f32.gmra.mrb[0].mxu0 %v1640
    %v1717 = vpop.f32.mrb[0].mxu0
    %v1718 = vadd.f32 %v144, %v1717
    %v1719 = vpop.f32.mrb[0].mxu0
    %1720 = vdwg.mxu0
    %1723 = vrot.lane.b32.xlu0 %v1616, 96
    %v1724 = vpop.permute.xlu0 %1723
    %1725 = vrot.lane.b32.xlu0 %v1617, 96
    %v1726 = vpop.permute.xlu0 %1725
    %v1728 = vsel %vm177, %v1608, 0
    %v1731 = vsel %vm177, %v1609, 0
    %v1733 = vsel %vm177, %v1724, 0
    %v1735 = vsel %vm177, %v1726, 0
    %1737 = vmatprep.subr.mxu0 0.0
    %1738 = vmatpush1.xpose.msra.mxu0 %v1733
    %1739 = vmatprep.subr.mxu0 0.0
    %1740 = vmatpush1.xpose.msra.mxu0 %v1735
    %1741 = vmatprep.subr.mxu0 0.0
    %1742 = vmatpush1.xpose.msra.mxu0 0.0
    %1743 = vmatprep.subr.mxu0 0.0
    %1744 = vmatpush1.xpose.msra.mxu0 0.0
    %1745 = vmatprep.subr.mxu0 0.0
    %1746 = vmatpush1.xpose.msra.mxu0 0.0
    %1747 = vmatprep.subr.mxu0 0.0
    %1748 = vmatpush1.xpose.msra.mxu0 0.0
    %1749 = vmatprep.subr.mxu0 0.0
    %1750 = vmatpush1.xpose.msra.mxu0 0.0
    %1751 = vmatprep.subr.mxu0 0.0
    %1752 = vmatpush1.xpose.msra.mxu0 0.0
    %1753 = vmatprep.subr.mxu0 0.0
    %1754 = vmatpush1.xpose.msra.mxu0 0.0
    %1755 = vmatprep.subr.mxu0 0.0
    %1756 = vmatpush1.xpose.msra.mxu0 0.0
    %1757 = vmatprep.subr.mxu0 0.0
    %1758 = vmatpush1.xpose.msra.mxu0 0.0
    %1759 = vmatprep.subr.mxu0 0.0
    %1760 = vmatpush1.xpose.msra.mxu0 0.0
    %1761 = vmatprep.subr.mxu0 0.0
    %1762 = vmatpush1.xpose.msra.mxu0 0.0
    %1763 = vmatprep.subr.mxu0 0.0
    %1764 = vmatpush1.xpose.msra.mxu0 0.0
    %1765 = vmatprep.subr.mxu0 0.0
    %1766 = vmatpush1.xpose.msra.mxu0 0.0
    %1767 = vmatprep.subr.mxu0 0.0
    %1768 = vmatpush1.xpose.msra.mxu0 0.0
    %1769 = vmatprep.subr.mxu0 0.0
    %1770 = vmatpush1.xpose.msra.mxu0 0.0
    %1771 = vmatprep.subr.mxu0 0.0
    %1772 = vmatpush1.xpose.msra.mxu0 0.0
    %1773 = vmatprep.subr.mxu0 0.0
    %1774 = vmatpush1.xpose.msra.mxu0 0.0
    %1775 = vmatprep.subr.mxu0 0.0
    %1776 = vmatpush1.xpose.msra.mxu0 0.0
    %1777 = vmatprep.subr.mxu0 0.0
    %1778 = vmatpush1.xpose.msra.mxu0 0.0
    %1779 = vmatprep.subr.mxu0 0.0
    %1780 = vmatpush1.xpose.msra.mxu0 0.0
    %1781 = vmatprep.subr.mxu0 0.0
    %1782 = vmatpush1.xpose.msra.mxu0 0.0
    %1783 = vmatprep.subr.mxu0 0.0
    %1784 = vmatpush1.xpose.msra.mxu0 0.0
    %1785 = vmatprep.subr.mxu0 0.0
    %1786 = vmatpush1.xpose.msra.mxu0 0.0
    %1787 = vmatprep.subr.mxu0 0.0
    %1788 = vmatpush1.xpose.msra.mxu0 0.0
    %1789 = vmatprep.subr.mxu0 0.0
    %1790 = vmatpush1.xpose.msra.mxu0 0.0
    %1791 = vmatprep.subr.mxu0 0.0
    %1792 = vmatpush1.xpose.msra.mxu0 0.0
    %1793 = vmatprep.subr.mxu0 0.0
    %1794 = vmatpush1.xpose.msra.mxu0 0.0
    %1795 = vmatprep.subr.mxu0 0.0
    %1796 = vmatpush1.xpose.msra.mxu0 0.0
    %1797 = vmatprep.subr.mxu0 0.0
    %1798 = vmatpush1.xpose.msra.mxu0 0.0
    %1799 = vmatprep.subr.mxu0 0.0
    %1800 = vmatpush1.xpose.msra.mxu0 0.0
    %1801 = vmatprep.mubr.f32.mxu0 0.0
    %1802 = vmatmul.mubr.f32.gmra.mrb[0].mxu0 %v1728
    %v1803 = vpop.f32.mrb[0].mxu0
    %v1804 = vadd.f32 %v143, %v1803
    %v1805 = vpop.f32.mrb[0].mxu0
    %1806 = vmatprep.mubr.f32.mxu0 0.0
    %1807 = vmatmul.mubr.f32.gmra.mrb[0].mxu0 %v1731
    %v1808 = vpop.f32.mrb[0].mxu0
    %v1809 = vadd.f32 %v144, %v1808
    %v1810 = vpop.f32.mrb[0].mxu0
    %1811 = vdwg.mxu0
    %1814 = vrot.lane.b32.xlu0 %v1618, 96
    %v1815 = vpop.permute.xlu0 %1814
    %1816 = vrot.lane.b32.xlu0 %v1619, 96
    %v1817 = vpop.permute.xlu0 %1816
    %v1819 = vsel %vm177, %v1610, 0
    %v1822 = vsel %vm177, %v1611, 0
    %v1824 = vsel %vm177, %v1815, 0
    %v1826 = vsel %vm177, %v1817, 0
    %1828 = vmatprep.subr.mxu0 0.0
    %1829 = vmatpush1.xpose.msra.mxu0 %v1824
    %1830 = vmatprep.subr.mxu0 0.0
    %1831 = vmatpush1.xpose.msra.mxu0 %v1826
    %1832 = vmatprep.subr.mxu0 0.0
    %1833 = vmatpush1.xpose.msra.mxu0 0.0
    %1834 = vmatprep.subr.mxu0 0.0
    %1835 = vmatpush1.xpose.msra.mxu0 0.0
    %1836 = vmatprep.subr.mxu0 0.0
    %1837 = vmatpush1.xpose.msra.mxu0 0.0
    %1838 = vmatprep.subr.mxu0 0.0
    %1839 = vmatpush1.xpose.msra.mxu0 0.0
    %1840 = vmatprep.subr.mxu0 0.0
    %1841 = vmatpush1.xpose.msra.mxu0 0.0
    %1842 = vmatprep.subr.mxu0 0.0
    %1843 = vmatpush1.xpose.msra.mxu0 0.0
    %1844 = vmatprep.subr.mxu0 0.0
    %1845 = vmatpush1.xpose.msra.mxu0 0.0
    %1846 = vmatprep.subr.mxu0 0.0
    %1847 = vmatpush1.xpose.msra.mxu0 0.0
    %1848 = vmatprep.subr.mxu0 0.0
    %1849 = vmatpush1.xpose.msra.mxu0 0.0
    %1850 = vmatprep.subr.mxu0 0.0
    %1851 = vmatpush1.xpose.msra.mxu0 0.0
    %1852 = vmatprep.subr.mxu0 0.0
    %1853 = vmatpush1.xpose.msra.mxu0 0.0
    %1854 = vmatprep.subr.mxu0 0.0
    %1855 = vmatpush1.xpose.msra.mxu0 0.0
    %1856 = vmatprep.subr.mxu0 0.0
    %1857 = vmatpush1.xpose.msra.mxu0 0.0
    %1858 = vmatprep.subr.mxu0 0.0
    %1859 = vmatpush1.xpose.msra.mxu0 0.0
    %1860 = vmatprep.subr.mxu0 0.0
    %1861 = vmatpush1.xpose.msra.mxu0 0.0
    %1862 = vmatprep.subr.mxu0 0.0
    %1863 = vmatpush1.xpose.msra.mxu0 0.0
    %1864 = vmatprep.subr.mxu0 0.0
    %1865 = vmatpush1.xpose.msra.mxu0 0.0
    %1866 = vmatprep.subr.mxu0 0.0
    %1867 = vmatpush1.xpose.msra.mxu0 0.0
    %1868 = vmatprep.subr.mxu0 0.0
    %1869 = vmatpush1.xpose.msra.mxu0 0.0
    %1870 = vmatprep.subr.mxu0 0.0
    %1871 = vmatpush1.xpose.msra.mxu0 0.0
    %1872 = vmatprep.subr.mxu0 0.0
    %1873 = vmatpush1.xpose.msra.mxu0 0.0
    %1874 = vmatprep.subr.mxu0 0.0
    %1875 = vmatpush1.xpose.msra.mxu0 0.0
    %1876 = vmatprep.subr.mxu0 0.0
    %1877 = vmatpush1.xpose.msra.mxu0 0.0
    %1878 = vmatprep.subr.mxu0 0.0
    %1879 = vmatpush1.xpose.msra.mxu0 0.0
    %1880 = vmatprep.subr.mxu0 0.0
    %1881 = vmatpush1.xpose.msra.mxu0 0.0
    %1882 = vmatprep.subr.mxu0 0.0
    %1883 = vmatpush1.xpose.msra.mxu0 0.0
    %1884 = vmatprep.subr.mxu0 0.0
    %1885 = vmatpush1.xpose.msra.mxu0 0.0
    %1886 = vmatprep.subr.mxu0 0.0
    %1887 = vmatpush1.xpose.msra.mxu0 0.0
    %1888 = vmatprep.subr.mxu0 0.0
    %1889 = vmatpush1.xpose.msra.mxu0 0.0
    %1890 = vmatprep.subr.mxu0 0.0
    %1891 = vmatpush1.xpose.msra.mxu0 0.0
    %1892 = vmatprep.mubr.f32.mxu0 0.0
    %1893 = vmatmul.mubr.f32.gmra.mrb[0].mxu0 %v1819
    %v1894 = vpop.f32.mrb[0].mxu0
    %v1895 = vadd.f32 %v143, %v1894
    %v1896 = vpop.f32.mrb[0].mxu0
    %1897 = vmatprep.mubr.f32.mxu0 0.0
    %1898 = vmatmul.mubr.f32.gmra.mrb[0].mxu0 %v1822
    %v1899 = vpop.f32.mrb[0].mxu0
    %v1900 = vadd.f32 %v144, %v1899
    %v1901 = vpop.f32.mrb[0].mxu0
    %1902 = vdwg.mxu0
    %1905 = vrot.lane.b32.xlu0 %v1620, 96
    %v1906 = vpop.permute.xlu0 %1905
    %1907 = vrot.lane.b32.xlu0 %v1621, 96
    %v1908 = vpop.permute.xlu0 %1907
    %v1910 = vsel %vm177, %v1612, 0
    %v1913 = vsel %vm177, %v1613, 0
    %v1915 = vsel %vm177, %v1906, 0
    %v1917 = vsel %vm177, %v1908, 0
    %1919 = vmatprep.subr.mxu0 0.0
    %1920 = vmatpush1.xpose.msra.mxu0 %v1915
    %1921 = vmatprep.subr.mxu0 0.0
    %1922 = vmatpush1.xpose.msra.mxu0 %v1917
    %1923 = vmatprep.subr.mxu0 0.0
    %1924 = vmatpush1.xpose.msra.mxu0 0.0
    %1925 = vmatprep.subr.mxu0 0.0
    %1926 = vmatpush1.xpose.msra.mxu0 0.0
    %1927 = vmatprep.subr.mxu0 0.0
    %1928 = vmatpush1.xpose.msra.mxu0 0.0
    %1929 = vmatprep.subr.mxu0 0.0
    %1930 = vmatpush1.xpose.msra.mxu0 0.0
    %1931 = vmatprep.subr.mxu0 0.0
    %1932 = vmatpush1.xpose.msra.mxu0 0.0
    %1933 = vmatprep.subr.mxu0 0.0
    %1934 = vmatpush1.xpose.msra.mxu0 0.0
    %1935 = vmatprep.subr.mxu0 0.0
    %1936 = vmatpush1.xpose.msra.mxu0 0.0
    %1937 = vmatprep.subr.mxu0 0.0
    %1938 = vmatpush1.xpose.msra.mxu0 0.0
    %1939 = vmatprep.subr.mxu0 0.0
    %1940 = vmatpush1.xpose.msra.mxu0 0.0
    %1941 = vmatprep.subr.mxu0 0.0
    %1942 = vmatpush1.xpose.msra.mxu0 0.0
    %1943 = vmatprep.subr.mxu0 0.0
    %1944 = vmatpush1.xpose.msra.mxu0 0.0
    %1945 = vmatprep.subr.mxu0 0.0
    %1946 = vmatpush1.xpose.msra.mxu0 0.0
    %1947 = vmatprep.subr.mxu0 0.0
    %1948 = vmatpush1.xpose.msra.mxu0 0.0
    %1949 = vmatprep.subr.mxu0 0.0
    %1950 = vmatpush1.xpose.msra.mxu0 0.0
    %1951 = vmatprep.subr.mxu0 0.0
    %1952 = vmatpush1.xpose.msra.mxu0 0.0
    %1953 = vmatprep.subr.mxu0 0.0
    %1954 = vmatpush1.xpose.msra.mxu0 0.0
    %1955 = vmatprep.subr.mxu0 0.0
    %1956 = vmatpush1.xpose.msra.mxu0 0.0
    %1957 = vmatprep.subr.mxu0 0.0
    %1958 = vmatpush1.xpose.msra.mxu0 0.0
    %1959 = vmatprep.subr.mxu0 0.0
    %1960 = vmatpush1.xpose.msra.mxu0 0.0
    %1961 = vmatprep.subr.mxu0 0.0
    %1962 = vmatpush1.xpose.msra.mxu0 0.0
    %1963 = vmatprep.subr.mxu0 0.0
    %1964 = vmatpush1.xpose.msra.mxu0 0.0
    %1965 = vmatprep.subr.mxu0 0.0
    %1966 = vmatpush1.xpose.msra.mxu0 0.0
    %1967 = vmatprep.subr.mxu0 0.0
    %1968 = vmatpush1.xpose.msra.mxu0 0.0
    %1969 = vmatprep.subr.mxu0 0.0
    %1970 = vmatpush1.xpose.msra.mxu0 0.0
    %1971 = vmatprep.subr.mxu0 0.0
    %1972 = vmatpush1.xpose.msra.mxu0 0.0
    %1973 = vmatprep.subr.mxu0 0.0
    %1974 = vmatpush1.xpose.msra.mxu0 0.0
    %1975 = vmatprep.subr.mxu0 0.0
    %1976 = vmatpush1.xpose.msra.mxu0 0.0
    %1977 = vmatprep.subr.mxu0 0.0
    %1978 = vmatpush1.xpose.msra.mxu0 0.0
    %1979 = vmatprep.subr.mxu0 0.0
    %1980 = vmatpush1.xpose.msra.mxu0 0.0
    %1981 = vmatprep.subr.mxu0 0.0
    %1982 = vmatpush1.xpose.msra.mxu0 0.0
    %1983 = vmatprep.mubr.f32.mxu0 0.0
    %1984 = vmatmul.mubr.f32.gmra.mrb[0].mxu0 %v1910
    %v1985 = vpop.f32.mrb[0].mxu0
    %v1986 = vadd.f32 %v143, %v1985
    %v1987 = vpop.f32.mrb[0].mxu0
    %1988 = vmatprep.mubr.f32.mxu0 0.0
    %1989 = vmatmul.mubr.f32.gmra.mrb[0].mxu0 %v1913
    %v1990 = vpop.f32.mrb[0].mxu0
    %v1991 = vadd.f32 %v144, %v1990
    %v1992 = vpop.f32.mrb[0].mxu0
    %1993 = vdwg.mxu0
    %v1994 = vsel %vm703, %v1713, -inf
    %1995 = vmax.xlane.f32.xlu0 %v1994
    %v1996 = vpop.xlane.xlu0 %1995
    %v1997 = vsel %vm703, %v1718, -inf
    %1998 = vmax.xlane.f32.xlu0 %v1997
    %v1999 = vpop.xlane.xlu0 %1998
    %v2000 = vsel %vm703, %v1804, -inf
    %2001 = vmax.xlane.f32.xlu0 %v2000
    %v2002 = vpop.xlane.xlu0 %2001
    %v2003 = vsel %vm703, %v1809, -inf
    %2004 = vmax.xlane.f32.xlu0 %v2003
    %v2005 = vpop.xlane.xlu0 %2004
    %v2006 = vsel %vm703, %v1895, -inf
    %2007 = vmax.xlane.f32.xlu0 %v2006
    %v2008 = vpop.xlane.xlu0 %2007
    %v2009 = vsel %vm703, %v1900, -inf
    %2010 = vmax.xlane.f32.xlu0 %v2009
    %v2011 = vpop.xlane.xlu0 %2010
    %v2012 = vsel %vm703, %v1986, -inf
    %2013 = vmax.xlane.f32.xlu0 %v2012
    %v2014 = vpop.xlane.xlu0 %2013
    %v2015 = vsel %vm703, %v1991, -inf
    %2016 = vmax.xlane.f32.xlu0 %v2015
    %v2017 = vpop.xlane.xlu0 %2016
    %v2018 = vsub.f32 %v1713, %v1996
    %v2019 = vsub.f32 %v1718, %v1999
    %v2020 = vsub.f32 %v1804, %v2002
    %v2021 = vsub.f32 %v1809, %v2005
    %v2022 = vsub.f32 %v1895, %v2008
    %v2023 = vsub.f32 %v1900, %v2011
    %v2024 = vsub.f32 %v1986, %v2014
    %v2025 = vsub.f32 %v1991, %v2017
    %v2026 = vmul.f32 %v2018, 1.442695
    %v2027 = vpow.pop %v2026
    %v2028 = vmul.f32 %v2019, 1.442695
    %v2029 = vpow.pop %v2028
    %v2030 = vmul.f32 %v2020, 1.442695
    %v2031 = vpow.pop %v2030
    %v2032 = vmul.f32 %v2021, 1.442695
    %v2033 = vpow.pop %v2032
    %v2034 = vmul.f32 %v2022, 1.442695
    %v2035 = vpow.pop %v2034
    %v2036 = vmul.f32 %v2023, 1.442695
    %v2037 = vpow.pop %v2036
    %v2038 = vmul.f32 %v2024, 1.442695
    %v2039 = vpow.pop %v2038
    %v2040 = vmul.f32 %v2025, 1.442695
    %v2041 = vpow.pop %v2040
    %v2042 = vsel %vm703, %v2027, 0.0
    %2043 = vadd.xlane.f32.xlu0 %v2042
    %v2044 = vpop.xlane.xlu0 %2043
    %v2045 = vsel %vm703, %v2029, 0.0
    %2046 = vadd.xlane.f32.xlu0 %v2045
    %v2047 = vpop.xlane.xlu0 %2046
    %v2048 = vsel %vm703, %v2031, 0.0
    %2049 = vadd.xlane.f32.xlu0 %v2048
    %v2050 = vpop.xlane.xlu0 %2049
    %v2051 = vsel %vm703, %v2033, 0.0
    %2052 = vadd.xlane.f32.xlu0 %v2051
    %v2053 = vpop.xlane.xlu0 %2052
    %v2054 = vsel %vm703, %v2035, 0.0
    %2055 = vadd.xlane.f32.xlu0 %v2054
    %v2056 = vpop.xlane.xlu0 %2055
    %v2057 = vsel %vm703, %v2037, 0.0
    %2058 = vadd.xlane.f32.xlu0 %v2057
    %v2059 = vpop.xlane.xlu0 %2058
    %v2060 = vsel %vm703, %v2039, 0.0
    %2061 = vadd.xlane.f32.xlu0 %v2060
    %v2062 = vpop.xlane.xlu0 %2061
    %v2063 = vsel %vm703, %v2041, 0.0
    %2064 = vadd.xlane.f32.xlu0 %v2063
    %v2065 = vpop.xlane.xlu0 %2064
    %v2066 = vrcp.pop %v2044
    %v2067 = vrcp.pop %v2047
    %v2068 = vrcp.pop %v2050
    %v2069 = vrcp.pop %v2053
    %v2070 = vrcp.pop %v2056
    %v2071 = vrcp.pop %v2059
    %v2072 = vrcp.pop %v2062
    %v2073 = vrcp.pop %v2065
    %v2074 = vmul.f32 %v2027, %v2066
    %v2075 = vmul.f32 %v2029, %v2067
    %v2076 = vmul.f32 %v2031, %v2068
    %v2077 = vmul.f32 %v2033, %v2069
    %v2078 = vmul.f32 %v2035, %v2070
    %v2079 = vmul.f32 %v2037, %v2071
    %v2080 = vmul.f32 %v2039, %v2072
    %v2081 = vmul.f32 %v2041, %v2073
    %2084 = vrot.lane.b32.xlu0 %v1622, 64
    %v2085 = vpop.permute.xlu0 %2084
    %2086 = vrot.lane.b32.xlu0 %v1623, 64
    %v2087 = vpop.permute.xlu0 %2086
    %v2091 = vsel %vm703, %v2074, 0
    %v2094 = vsel %vm703, %v2075, 0
    %2096 = vmatprep.subr.mxu0 0.0
    %2097 = vmatpush1.msra.mxu0 %v2085
    %2098 = vmatprep.subr.mxu0 0.0
    %2099 = vmatpush1.msra.mxu0 %v2087
    %2100 = vmatprep.subr.mxu0 0.0
    %2101 = vmatpush1.msra.mxu0 0.0
    %2102 = vmatprep.subr.mxu0 0.0
    %2103 = vmatpush1.msra.mxu0 0.0
    %2104 = vmatprep.subr.mxu0 0.0
    %2105 = vmatpush1.msra.mxu0 0.0
    %2106 = vmatprep.subr.mxu0 0.0
    %2107 = vmatpush1.msra.mxu0 0.0
    %2108 = vmatprep.subr.mxu0 0.0
    %2109 = vmatpush1.msra.mxu0 0.0
    %2110 = vmatprep.subr.mxu0 0.0
    %2111 = vmatpush1.msra.mxu0 0.0
    %2112 = vmatprep.subr.mxu0 0.0
    %2113 = vmatpush1.msra.mxu0 0.0
    %2114 = vmatprep.subr.mxu0 0.0
    %2115 = vmatpush1.msra.mxu0 0.0
    %2116 = vmatprep.subr.mxu0 0.0
    %2117 = vmatpush1.msra.mxu0 0.0
    %2118 = vmatprep.subr.mxu0 0.0
    %2119 = vmatpush1.msra.mxu0 0.0
    %2120 = vmatprep.subr.mxu0 0.0
    %2121 = vmatpush1.msra.mxu0 0.0
    %2122 = vmatprep.subr.mxu0 0.0
    %2123 = vmatpush1.msra.mxu0 0.0
    %2124 = vmatprep.subr.mxu0 0.0
    %2125 = vmatpush1.msra.mxu0 0.0
    %2126 = vmatprep.subr.mxu0 0.0
    %2127 = vmatpush1.msra.mxu0 0.0
    %2128 = vmatprep.subr.mxu0 0.0
    %2129 = vmatpush1.msra.mxu0 0.0
    %2130 = vmatprep.subr.mxu0 0.0
    %2131 = vmatpush1.msra.mxu0 0.0
    %2132 = vmatprep.subr.mxu0 0.0
    %2133 = vmatpush1.msra.mxu0 0.0
    %2134 = vmatprep.subr.mxu0 0.0
    %2135 = vmatpush1.msra.mxu0 0.0
    %2136 = vmatprep.subr.mxu0 0.0
    %2137 = vmatpush1.msra.mxu0 0.0
    %2138 = vmatprep.subr.mxu0 0.0
    %2139 = vmatpush1.msra.mxu0 0.0
    %2140 = vmatprep.subr.mxu0 0.0
    %2141 = vmatpush1.msra.mxu0 0.0
    %2142 = vmatprep.subr.mxu0 0.0
    %2143 = vmatpush1.msra.mxu0 0.0
    %2144 = vmatprep.subr.mxu0 0.0
    %2145 = vmatpush1.msra.mxu0 0.0
    %2146 = vmatprep.subr.mxu0 0.0
    %2147 = vmatpush1.msra.mxu0 0.0
    %2148 = vmatprep.subr.mxu0 0.0
    %2149 = vmatpush1.msra.mxu0 0.0
    %2150 = vmatprep.subr.mxu0 0.0
    %2151 = vmatpush1.msra.mxu0 0.0
    %2152 = vmatprep.subr.mxu0 0.0
    %2153 = vmatpush1.msra.mxu0 0.0
    %2154 = vmatprep.subr.mxu0 0.0
    %2155 = vmatpush1.msra.mxu0 0.0
    %2156 = vmatprep.subr.mxu0 0.0
    %2157 = vmatpush1.msra.mxu0 0.0
    %2158 = vmatprep.subr.mxu0 0.0
    %2159 = vmatpush1.msra.mxu0 0.0
    %2160 = vmatprep.mubr.f32.mxu0 0.0
    %2161 = vmatmul.mubr.f32.gmra.mrb[0].mxu0 %v2091
    %v2162 = vpop.f32.mrb[0].mxu0
    %v2163 = vadd.f32 0.0, %v2162
    %v2164 = vpop.f32.mrb[0].mxu0
    %2165 = vmatprep.mubr.f32.mxu0 0.0
    %2166 = vmatmul.mubr.f32.gmra.mrb[0].mxu0 %v2094
    %v2167 = vpop.f32.mrb[0].mxu0
    %v2168 = vadd.f32 0.0, %v2167
    %v2169 = vpop.f32.mrb[0].mxu0
    %2170 = vdwg.mxu0
    %2173 = vrot.lane.b32.xlu0 %v1624, 64
    %v2174 = vpop.permute.xlu0 %2173
    %2175 = vrot.lane.b32.xlu0 %v1625, 64
    %v2176 = vpop.permute.xlu0 %2175
    %v2180 = vsel %vm703, %v2076, 0
    %v2183 = vsel %vm703, %v2077, 0
    %2185 = vmatprep.subr.mxu0 0.0
    %2186 = vmatpush1.msra.mxu0 %v2174
    %2187 = vmatprep.subr.mxu0 0.0
    %2188 = vmatpush1.msra.mxu0 %v2176
    %2189 = vmatprep.subr.mxu0 0.0
    %2190 = vmatpush1.msra.mxu0 0.0
    %2191 = vmatprep.subr.mxu0 0.0
    %2192 = vmatpush1.msra.mxu0 0.0
    %2193 = vmatprep.subr.mxu0 0.0
    %2194 = vmatpush1.msra.mxu0 0.0
    %2195 = vmatprep.subr.mxu0 0.0
    %2196 = vmatpush1.msra.mxu0 0.0
    %2197 = vmatprep.subr.mxu0 0.0
    %2198 = vmatpush1.msra.mxu0 0.0
    %2199 = vmatprep.subr.mxu0 0.0
    %2200 = vmatpush1.msra.mxu0 0.0
    %2201 = vmatprep.subr.mxu0 0.0
    %2202 = vmatpush1.msra.mxu0 0.0
    %2203 = vmatprep.subr.mxu0 0.0
    %2204 = vmatpush1.msra.mxu0 0.0
    %2205 = vmatprep.subr.mxu0 0.0
    %2206 = vmatpush1.msra.mxu0 0.0
    %2207 = vmatprep.subr.mxu0 0.0
    %2208 = vmatpush1.msra.mxu0 0.0
    %2209 = vmatprep.subr.mxu0 0.0
    %2210 = vmatpush1.msra.mxu0 0.0
    %2211 = vmatprep.subr.mxu0 0.0
    %2212 = vmatpush1.msra.mxu0 0.0
    %2213 = vmatprep.subr.mxu0 0.0
    %2214 = vmatpush1.msra.mxu0 0.0
    %2215 = vmatprep.subr.mxu0 0.0
    %2216 = vmatpush1.msra.mxu0 0.0
    %2217 = vmatprep.subr.mxu0 0.0
    %2218 = vmatpush1.msra.mxu0 0.0
    %2219 = vmatprep.subr.mxu0 0.0
    %2220 = vmatpush1.msra.mxu0 0.0
    %2221 = vmatprep.subr.mxu0 0.0
    %2222 = vmatpush1.msra.mxu0 0.0
    %2223 = vmatprep.subr.mxu0 0.0
    %2224 = vmatpush1.msra.mxu0 0.0
    %2225 = vmatprep.subr.mxu0 0.0
    %2226 = vmatpush1.msra.mxu0 0.0
    %2227 = vmatprep.subr.mxu0 0.0
    %2228 = vmatpush1.msra.mxu0 0.0
    %2229 = vmatprep.subr.mxu0 0.0
    %2230 = vmatpush1.msra.mxu0 0.0
    %2231 = vmatprep.subr.mxu0 0.0
    %2232 = vmatpush1.msra.mxu0 0.0
    %2233 = vmatprep.subr.mxu0 0.0
    %2234 = vmatpush1.msra.mxu0 0.0
    %2235 = vmatprep.subr.mxu0 0.0
    %2236 = vmatpush1.msra.mxu0 0.0
    %2237 = vmatprep.subr.mxu0 0.0
    %2238 = vmatpush1.msra.mxu0 0.0
    %2239 = vmatprep.subr.mxu0 0.0
    %2240 = vmatpush1.msra.mxu0 0.0
    %2241 = vmatprep.subr.mxu0 0.0
    %2242 = vmatpush1.msra.mxu0 0.0
    %2243 = vmatprep.subr.mxu0 0.0
    %2244 = vmatpush1.msra.mxu0 0.0
    %2245 = vmatprep.subr.mxu0 0.0
    %2246 = vmatpush1.msra.mxu0 0.0
    %2247 = vmatprep.subr.mxu0 0.0
    %2248 = vmatpush1.msra.mxu0 0.0
    %2249 = vmatprep.mubr.f32.mxu0 0.0
    %2250 = vmatmul.mubr.f32.gmra.mrb[0].mxu0 %v2180
    %v2251 = vpop.f32.mrb[0].mxu0
    %v2252 = vadd.f32 0.0, %v2251
    %v2253 = vpop.f32.mrb[0].mxu0
    %2254 = vmatprep.mubr.f32.mxu0 0.0
    %2255 = vmatmul.mubr.f32.gmra.mrb[0].mxu0 %v2183
    %v2256 = vpop.f32.mrb[0].mxu0
    %v2257 = vadd.f32 0.0, %v2256
    %v2258 = vpop.f32.mrb[0].mxu0
    %2259 = vdwg.mxu0
    %2262 = vrot.lane.b32.xlu0 %v1626, 64
    %v2263 = vpop.permute.xlu0 %2262
    %2264 = vrot.lane.b32.xlu0 %v1627, 64
    %v2265 = vpop.permute.xlu0 %2264
    %v2269 = vsel %vm703, %v2078, 0
    %v2272 = vsel %vm703, %v2079, 0
    %2274 = vmatprep.subr.mxu0 0.0
    %2275 = vmatpush1.msra.mxu0 %v2263
    %2276 = vmatprep.subr.mxu0 0.0
    %2277 = vmatpush1.msra.mxu0 %v2265
    %2278 = vmatprep.subr.mxu0 0.0
    %2279 = vmatpush1.msra.mxu0 0.0
    %2280 = vmatprep.subr.mxu0 0.0
    %2281 = vmatpush1.msra.mxu0 0.0
    %2282 = vmatprep.subr.mxu0 0.0
    %2283 = vmatpush1.msra.mxu0 0.0
    %2284 = vmatprep.subr.mxu0 0.0
    %2285 = vmatpush1.msra.mxu0 0.0
    %2286 = vmatprep.subr.mxu0 0.0
    %2287 = vmatpush1.msra.mxu0 0.0
    %2288 = vmatprep.subr.mxu0 0.0
    %2289 = vmatpush1.msra.mxu0 0.0
    %2290 = vmatprep.subr.mxu0 0.0
    %2291 = vmatpush1.msra.mxu0 0.0
    %2292 = vmatprep.subr.mxu0 0.0
    %2293 = vmatpush1.msra.mxu0 0.0
    %2294 = vmatprep.subr.mxu0 0.0
    %2295 = vmatpush1.msra.mxu0 0.0
    %2296 = vmatprep.subr.mxu0 0.0
    %2297 = vmatpush1.msra.mxu0 0.0
    %2298 = vmatprep.subr.mxu0 0.0
    %2299 = vmatpush1.msra.mxu0 0.0
    %2300 = vmatprep.subr.mxu0 0.0
    %2301 = vmatpush1.msra.mxu0 0.0
    %2302 = vmatprep.subr.mxu0 0.0
    %2303 = vmatpush1.msra.mxu0 0.0
    %2304 = vmatprep.subr.mxu0 0.0
    %2305 = vmatpush1.msra.mxu0 0.0
    %2306 = vmatprep.subr.mxu0 0.0
    %2307 = vmatpush1.msra.mxu0 0.0
    %2308 = vmatprep.subr.mxu0 0.0
    %2309 = vmatpush1.msra.mxu0 0.0
    %2310 = vmatprep.subr.mxu0 0.0
    %2311 = vmatpush1.msra.mxu0 0.0
    %2312 = vmatprep.subr.mxu0 0.0
    %2313 = vmatpush1.msra.mxu0 0.0
    %2314 = vmatprep.subr.mxu0 0.0
    %2315 = vmatpush1.msra.mxu0 0.0
    %2316 = vmatprep.subr.mxu0 0.0
    %2317 = vmatpush1.msra.mxu0 0.0
    %2318 = vmatprep.subr.mxu0 0.0
    %2319 = vmatpush1.msra.mxu0 0.0
    %2320 = vmatprep.subr.mxu0 0.0
    %2321 = vmatpush1.msra.mxu0 0.0
    %2322 = vmatprep.subr.mxu0 0.0
    %2323 = vmatpush1.msra.mxu0 0.0
    %2324 = vmatprep.subr.mxu0 0.0
    %2325 = vmatpush1.msra.mxu0 0.0
    %2326 = vmatprep.subr.mxu0 0.0
    %2327 = vmatpush1.msra.mxu0 0.0
    %2328 = vmatprep.subr.mxu0 0.0
    %2329 = vmatpush1.msra.mxu0 0.0
    %2330 = vmatprep.subr.mxu0 0.0
    %2331 = vmatpush1.msra.mxu0 0.0
    %2332 = vmatprep.subr.mxu0 0.0
    %2333 = vmatpush1.msra.mxu0 0.0
    %2334 = vmatprep.subr.mxu0 0.0
    %2335 = vmatpush1.msra.mxu0 0.0
    %2336 = vmatprep.subr.mxu0 0.0
    %2337 = vmatpush1.msra.mxu0 0.0
    %2338 = vmatprep.mubr.f32.mxu0 0.0
    %2339 = vmatmul.mubr.f32.gmra.mrb[0].mxu0 %v2269
    %v2340 = vpop.f32.mrb[0].mxu0
    %v2341 = vadd.f32 0.0, %v2340
    %v2342 = vpop.f32.mrb[0].mxu0
    %2343 = vmatprep.mubr.f32.mxu0 0.0
    %2344 = vmatmul.mubr.f32.gmra.mrb[0].mxu0 %v2272
    %v2345 = vpop.f32.mrb[0].mxu0
    %v2346 = vadd.f32 0.0, %v2345
    %v2347 = vpop.f32.mrb[0].mxu0
    %2348 = vdwg.mxu0
    %2351 = vrot.lane.b32.xlu0 %v1628, 64
    %v2352 = vpop.permute.xlu0 %2351
    %2353 = vrot.lane.b32.xlu0 %v1629, 64
    %v2354 = vpop.permute.xlu0 %2353
    %v2358 = vsel %vm703, %v2080, 0
    %v2361 = vsel %vm703, %v2081, 0
    %2363 = vmatprep.subr.mxu0 0.0
    %2364 = vmatpush1.msra.mxu0 %v2352
    %2365 = vmatprep.subr.mxu0 0.0
    %2366 = vmatpush1.msra.mxu0 %v2354
    %2367 = vmatprep.subr.mxu0 0.0
    %2368 = vmatpush1.msra.mxu0 0.0
    %2369 = vmatprep.subr.mxu0 0.0
    %2370 = vmatpush1.msra.mxu0 0.0
    %2371 = vmatprep.subr.mxu0 0.0
    %2372 = vmatpush1.msra.mxu0 0.0
    %2373 = vmatprep.subr.mxu0 0.0
    %2374 = vmatpush1.msra.mxu0 0.0
    %2375 = vmatprep.subr.mxu0 0.0
    %2376 = vmatpush1.msra.mxu0 0.0
    %2377 = vmatprep.subr.mxu0 0.0
    %2378 = vmatpush1.msra.mxu0 0.0
    %2379 = vmatprep.subr.mxu0 0.0
    %2380 = vmatpush1.msra.mxu0 0.0
    %2381 = vmatprep.subr.mxu0 0.0
    %2382 = vmatpush1.msra.mxu0 0.0
    %2383 = vmatprep.subr.mxu0 0.0
    %2384 = vmatpush1.msra.mxu0 0.0
    %2385 = vmatprep.subr.mxu0 0.0
    %2386 = vmatpush1.msra.mxu0 0.0
    %2387 = vmatprep.subr.mxu0 0.0
    %2388 = vmatpush1.msra.mxu0 0.0
    %2389 = vmatprep.subr.mxu0 0.0
    %2390 = vmatpush1.msra.mxu0 0.0
    %2391 = vmatprep.subr.mxu0 0.0
    %2392 = vmatpush1.msra.mxu0 0.0
    %2393 = vmatprep.subr.mxu0 0.0
    %2394 = vmatpush1.msra.mxu0 0.0
    %2395 = vmatprep.subr.mxu0 0.0
    %2396 = vmatpush1.msra.mxu0 0.0
    %2397 = vmatprep.subr.mxu0 0.0
    %2398 = vmatpush1.msra.mxu0 0.0
    %2399 = vmatprep.subr.mxu0 0.0
    %2400 = vmatpush1.msra.mxu0 0.0
    %2401 = vmatprep.subr.mxu0 0.0
    %2402 = vmatpush1.msra.mxu0 0.0
    %2403 = vmatprep.subr.mxu0 0.0
    %2404 = vmatpush1.msra.mxu0 0.0
    %2405 = vmatprep.subr.mxu0 0.0
    %2406 = vmatpush1.msra.mxu0 0.0
    %2407 = vmatprep.subr.mxu0 0.0
    %2408 = vmatpush1.msra.mxu0 0.0
    %2409 = vmatprep.subr.mxu0 0.0
    %2410 = vmatpush1.msra.mxu0 0.0
    %2411 = vmatprep.subr.mxu0 0.0
    %2412 = vmatpush1.msra.mxu0 0.0
    %2413 = vmatprep.subr.mxu0 0.0
    %2414 = vmatpush1.msra.mxu0 0.0
    %2415 = vmatprep.subr.mxu0 0.0
    %2416 = vmatpush1.msra.mxu0 0.0
    %2417 = vmatprep.subr.mxu0 0.0
    %2418 = vmatpush1.msra.mxu0 0.0
    %2419 = vmatprep.subr.mxu0 0.0
    %2420 = vmatpush1.msra.mxu0 0.0
    %2421 = vmatprep.subr.mxu0 0.0
    %2422 = vmatpush1.msra.mxu0 0.0
    %2423 = vmatprep.subr.mxu0 0.0
    %2424 = vmatpush1.msra.mxu0 0.0
    %2425 = vmatprep.subr.mxu0 0.0
    %2426 = vmatpush1.msra.mxu0 0.0
    %2427 = vmatprep.mubr.f32.mxu0 0.0
    %2428 = vmatmul.mubr.f32.gmra.mrb[0].mxu0 %v2358
    %v2429 = vpop.f32.mrb[0].mxu0
    %v2430 = vadd.f32 0.0, %v2429
    %v2431 = vpop.f32.mrb[0].mxu0
    %2432 = vmatprep.mubr.f32.mxu0 0.0
    %2433 = vmatmul.mubr.f32.gmra.mrb[0].mxu0 %v2361
    %v2434 = vpop.f32.mrb[0].mxu0
    %v2435 = vadd.f32 0.0, %v2434
    %v2436 = vpop.f32.mrb[0].mxu0
    %2437 = vdwg.mxu0
    %v2438 = vadd.f32 %v2163, %v2252
    %v2439 = vadd.f32 %v2168, %v2257
    %v2440 = vadd.f32 %v2438, %v2341
    %v2441 = vadd.f32 %v2439, %v2346
    %v2442 = vadd.f32 %v2440, %v2430
    %v2443 = vadd.f32 %v2441, %v2435
    %v2444 = vlaneseq
    %v2445 = vshrl.u32 %v2444, 7
    %v2446 = vsub.s32 0, %v2445
    %v2447 = vrot.slane %v1502, %v2446
    %v2449 = vsel %vm177, %v2442, 0
    %v2452 = vsel %vm177, %v2443, 0
    %2454 = vmatprep.subr.mxu0 0.0
    %2455 = vmatpush1.msra.mxu0 %v1498
    %2456 = vmatprep.subr.mxu0 0.0
    %2457 = vmatpush1.msra.mxu0 %v1499
    %2458 = vmatprep.subr.mxu0 0.0
    %2459 = vmatpush1.msra.mxu0 %v1500
    %2460 = vmatprep.subr.mxu0 0.0
    %2461 = vmatpush1.msra.mxu0 %v1501
    %2462 = vmatprep.subr.mxu0 0.0
    %2463 = vmatpush1.msra.mxu0 0.0
    %2464 = vmatprep.subr.mxu0 0.0
    %2465 = vmatpush1.msra.mxu0 0.0
    %2466 = vmatprep.subr.mxu0 0.0
    %2467 = vmatpush1.msra.mxu0 0.0
    %2468 = vmatprep.subr.mxu0 0.0
    %2469 = vmatpush1.msra.mxu0 0.0
    %2470 = vmatprep.subr.mxu0 0.0
    %2471 = vmatpush1.msra.mxu0 0.0
    %2472 = vmatprep.subr.mxu0 0.0
    %2473 = vmatpush1.msra.mxu0 0.0
    %2474 = vmatprep.subr.mxu0 0.0
    %2475 = vmatpush1.msra.mxu0 0.0
    %2476 = vmatprep.subr.mxu0 0.0
    %2477 = vmatpush1.msra.mxu0 0.0
    %2478 = vmatprep.subr.mxu0 0.0
    %2479 = vmatpush1.msra.mxu0 0.0
    %2480 = vmatprep.subr.mxu0 0.0
    %2481 = vmatpush1.msra.mxu0 0.0
    %2482 = vmatprep.subr.mxu0 0.0
    %2483 = vmatpush1.msra.mxu0 0.0
    %2484 = vmatprep.subr.mxu0 0.0
    %2485 = vmatpush1.msra.mxu0 0.0
    %2486 = vmatprep.subr.mxu0 0.0
    %2487 = vmatpush1.msra.mxu0 0.0
    %2488 = vmatprep.subr.mxu0 0.0
    %2489 = vmatpush1.msra.mxu0 0.0
    %2490 = vmatprep.subr.mxu0 0.0
    %2491 = vmatpush1.msra.mxu0 0.0
    %2492 = vmatprep.subr.mxu0 0.0
    %2493 = vmatpush1.msra.mxu0 0.0
    %2494 = vmatprep.subr.mxu0 0.0
    %2495 = vmatpush1.msra.mxu0 0.0
    %2496 = vmatprep.subr.mxu0 0.0
    %2497 = vmatpush1.msra.mxu0 0.0
    %2498 = vmatprep.subr.mxu0 0.0
    %2499 = vmatpush1.msra.mxu0 0.0
    %2500 = vmatprep.subr.mxu0 0.0
    %2501 = vmatpush1.msra.mxu0 0.0
    %2502 = vmatprep.subr.mxu0 0.0
    %2503 = vmatpush1.msra.mxu0 0.0
    %2504 = vmatprep.subr.mxu0 0.0
    %2505 = vmatpush1.msra.mxu0 0.0
    %2506 = vmatprep.subr.mxu0 0.0
    %2507 = vmatpush1.msra.mxu0 0.0
    %2508 = vmatprep.subr.mxu0 0.0
    %2509 = vmatpush1.msra.mxu0 0.0
    %2510 = vmatprep.subr.mxu0 0.0
    %2511 = vmatpush1.msra.mxu0 0.0
    %2512 = vmatprep.subr.mxu0 0.0
    %2513 = vmatpush1.msra.mxu0 0.0
    %2514 = vmatprep.subr.mxu0 0.0
    %2515 = vmatpush1.msra.mxu0 0.0
    %2516 = vmatprep.subr.mxu0 0.0
    %2517 = vmatpush1.msra.mxu0 0.0
    %2518 = vmatprep.mubr.f32.mxu0 0.0
    %2519 = vmatmul.mubr.f32.gmra.mrb[0].mxu0 %v2449
    %v2520 = vpop.f32.mrb[0].mxu0
    %v2521 = vadd.f32 %v2447, %v2520
    %v2522 = vpop.f32.mrb[0].mxu0
    %2523 = vmatprep.mubr.f32.mxu0 0.0
    %2524 = vmatmul.mubr.f32.gmra.mrb[0].mxu0 %v2452
    %v2525 = vpop.f32.mrb[0].mxu0
    %v2526 = vadd.f32 %v2447, %v2525
    %v2527 = vpop.f32.mrb[0].mxu0
    %2528 = vdwg.mxu0
    %v2529 = vadd.f32 %v1491, %v2521
    %v2530 = vadd.f32 %v1492, %v2526
    %v2531 = vsel %vm177, %v2529, 0.0
    %2532 = vadd.xlane.f32.xlu0 %v2531
    %v2533 = vpop.xlane.xlu0 %2532
    %v2534 = vsel %vm177, %v2530, 0.0
    %2535 = vadd.xlane.f32.xlu0 %v2534
    %v2536 = vpop.xlane.xlu0 %2535
    %v2537 = vmul.f32 %v2533, %v1247
    %v2538 = vmul.f32 %v2536, %v1247
    %v2539 = vsub.f32 %v2529, %v2537
    %v2540 = vsub.f32 %v2530, %v2538
    %v2541 = vmul.f32 %v2539, %v2539
    %v2542 = vmul.f32 %v2540, %v2540
    %v2543 = vsel %vm177, %v2541, 0.0
    %2544 = vadd.xlane.f32.xlu0 %v2543
    %v2545 = vpop.xlane.xlu0 %2544
    %v2546 = vsel %vm177, %v2542, 0.0
    %2547 = vadd.xlane.f32.xlu0 %v2546
    %v2548 = vpop.xlane.xlu0 %2547
    %v2549 = vmul.f32 %v2545, %v1247
    %v2550 = vmul.f32 %v2548, %v1247
    %v2551 = vadd.f32 %v2549, 1e-05
    %v2552 = vadd.f32 %v2550, 1e-05
    %v2553 = vrsqrt.pop %v2551
    %v2554 = vrsqrt.pop %v2552
    %v2555 = vmul.f32 %v2539, %v2553
    %v2556 = vmul.f32 %v2540, %v2554
    %v2557 = vlaneseq
    %v2558 = vshrl.u32 %v2557, 7
    %v2559 = vsub.s32 0, %v2558
    %v2560 = vrot.slane %v1517, %v2559
    %v2561 = vmul.f32 %v2555, %v2560
    %v2562 = vmul.f32 %v2556, %v2560
    %v2563 = vlaneseq
    %v2564 = vshrl.u32 %v2563, 7
    %v2565 = vsub.s32 0, %v2564
    %v2566 = vrot.slane %v1518, %v2565
    %v2567 = vadd.f32 %v2561, %v2566
    %v2568 = vadd.f32 %v2562, %v2566
    %v2569 = vlaneseq
    %v2570 = vshrl.u32 %v2569, 7
    %v2571 = vsub.s32 0, %v2570
    %v2572 = vrot.slane %v1507, %v2571
    %v2574 = vsel %vm177, %v2567, 0
    %v2577 = vsel %vm177, %v2568, 0
    %2579 = vmatprep.subr.mxu0 0.0
    %2580 = vmatpush1.msra.mxu0 %v1503
    %2581 = vmatprep.subr.mxu0 0.0
    %2582 = vmatpush1.msra.mxu0 %v1504
    %2583 = vmatprep.subr.mxu0 0.0
    %2584 = vmatpush1.msra.mxu0 %v1505
    %2585 = vmatprep.subr.mxu0 0.0
    %2586 = vmatpush1.msra.mxu0 %v1506
    %2587 = vmatprep.subr.mxu0 0.0
    %2588 = vmatpush1.msra.mxu0 0.0
    %2589 = vmatprep.subr.mxu0 0.0
    %2590 = vmatpush1.msra.mxu0 0.0
    %2591 = vmatprep.subr.mxu0 0.0
    %2592 = vmatpush1.msra.mxu0 0.0
    %2593 = vmatprep.subr.mxu0 0.0
    %2594 = vmatpush1.msra.mxu0 0.0
    %2595 = vmatprep.subr.mxu0 0.0
    %2596 = vmatpush1.msra.mxu0 0.0
    %2597 = vmatprep.subr.mxu0 0.0
    %2598 = vmatpush1.msra.mxu0 0.0
    %2599 = vmatprep.subr.mxu0 0.0
    %2600 = vmatpush1.msra.mxu0 0.0
    %2601 = vmatprep.subr.mxu0 0.0
    %2602 = vmatpush1.msra.mxu0 0.0
    %2603 = vmatprep.subr.mxu0 0.0
    %2604 = vmatpush1.msra.mxu0 0.0
    %2605 = vmatprep.subr.mxu0 0.0
    %2606 = vmatpush1.msra.mxu0 0.0
    %2607 = vmatprep.subr.mxu0 0.0
    %2608 = vmatpush1.msra.mxu0 0.0
    %2609 = vmatprep.subr.mxu0 0.0
    %2610 = vmatpush1.msra.mxu0 0.0
    %2611 = vmatprep.subr.mxu0 0.0
    %2612 = vmatpush1.msra.mxu0 0.0
    %2613 = vmatprep.subr.mxu0 0.0
    %2614 = vmatpush1.msra.mxu0 0.0
    %2615 = vmatprep.subr.mxu0 0.0
    %2616 = vmatpush1.msra.mxu0 0.0
    %2617 = vmatprep.subr.mxu0 0.0
    %2618 = vmatpush1.msra.mxu0 0.0
    %2619 = vmatprep.subr.mxu0 0.0
    %2620 = vmatpush1.msra.mxu0 0.0
    %2621 = vmatprep.subr.mxu0 0.0
    %2622 = vmatpush1.msra.mxu0 0.0
    %2623 = vmatprep.subr.mxu0 0.0
    %2624 = vmatpush1.msra.mxu0 0.0
    %2625 = vmatprep.subr.mxu0 0.0
    %2626 = vmatpush1.msra.mxu0 0.0
    %2627 = vmatprep.subr.mxu0 0.0
    %2628 = vmatpush1.msra.mxu0 0.0
    %2629 = vmatprep.subr.mxu0 0.0
    %2630 = vmatpush1.msra.mxu0 0.0
    %2631 = vmatprep.subr.mxu0 0.0
    %2632 = vmatpush1.msra.mxu0 0.0
    %2633 = vmatprep.subr.mxu0 0.0
    %2634 = vmatpush1.msra.mxu0 0.0
    %2635 = vmatprep.subr.mxu0 0.0
    %2636 = vmatpush1.msra.mxu0 0.0
    %2637 = vmatprep.subr.mxu0 0.0
    %2638 = vmatpush1.msra.mxu0 0.0
    %2639 = vmatprep.subr.mxu0 0.0
    %2640 = vmatpush1.msra.mxu0 0.0
    %2641 = vmatprep.subr.mxu0 0.0
    %2642 = vmatpush1.msra.mxu0 0.0
    %2643 = vmatprep.mubr.f32.mxu0 0.0
    %2644 = vmatmul.mubr.f32.gmra.mrb[0].mxu0 %v2574
    %v2645 = vpop.f32.mrb[0].mxu0
    %v2646 = vadd.f32 %v2572, %v2645
    %v2647 = vpop.f32.mrb[0].mxu0
    %2648 = vmatprep.mubr.f32.mxu0 0.0
    %2649 = vmatmul.mubr.f32.gmra.mrb[0].mxu0 %v2577
    %v2650 = vpop.f32.mrb[0].mxu0
    %v2651 = vadd.f32 %v2572, %v2650
    %v2652 = vpop.f32.mrb[0].mxu0
    %2653 = vdwg.mxu0
    %v2654 = vmax.f32 %v2646, 0.0
    %v2655 = vmax.f32 %v2651, 0.0
    %v2656 = vlaneseq
    %v2657 = vshrl.u32 %v2656, 7
    %v2658 = vsub.s32 0, %v2657
    %v2659 = vrot.slane %v1516, %v2658
    %v2661 = vsel %vm1371, %v2654, 0
    %v2664 = vsel %vm1371, %v2655, 0
    %2666 = vmatprep.subr.mxu0 0.0
    %2667 = vmatpush1.msra.mxu0 %v1508
    %2668 = vmatprep.subr.mxu0 0.0
    %2669 = vmatpush1.msra.mxu0 %v1509
    %2670 = vmatprep.subr.mxu0 0.0
    %2671 = vmatpush1.msra.mxu0 %v1510
    %2672 = vmatprep.subr.mxu0 0.0
    %2673 = vmatpush1.msra.mxu0 %v1511
    %2674 = vmatprep.subr.mxu0 0.0
    %2675 = vmatpush1.msra.mxu0 %v1512
    %2676 = vmatprep.subr.mxu0 0.0
    %2677 = vmatpush1.msra.mxu0 %v1513
    %2678 = vmatprep.subr.mxu0 0.0
    %2679 = vmatpush1.msra.mxu0 %v1514
    %2680 = vmatprep.subr.mxu0 0.0
    %2681 = vmatpush1.msra.mxu0 %v1515
    %2682 = vmatprep.subr.mxu0 0.0
    %2683 = vmatpush1.msra.mxu0 0.0
    %2684 = vmatprep.subr.mxu0 0.0
    %2685 = vmatpush1.msra.mxu0 0.0
    %2686 = vmatprep.subr.mxu0 0.0
    %2687 = vmatpush1.msra.mxu0 0.0
    %2688 = vmatprep.subr.mxu0 0.0
    %2689 = vmatpush1.msra.mxu0 0.0
    %2690 = vmatprep.subr.mxu0 0.0
    %2691 = vmatpush1.msra.mxu0 0.0
    %2692 = vmatprep.subr.mxu0 0.0
    %2693 = vmatpush1.msra.mxu0 0.0
    %2694 = vmatprep.subr.mxu0 0.0
    %2695 = vmatpush1.msra.mxu0 0.0
    %2696 = vmatprep.subr.mxu0 0.0
    %2697 = vmatpush1.msra.mxu0 0.0
    %2698 = vmatprep.subr.mxu0 0.0
    %2699 = vmatpush1.msra.mxu0 0.0
    %2700 = vmatprep.subr.mxu0 0.0
    %2701 = vmatpush1.msra.mxu0 0.0
    %2702 = vmatprep.subr.mxu0 0.0
    %2703 = vmatpush1.msra.mxu0 0.0
    %2704 = vmatprep.subr.mxu0 0.0
    %2705 = vmatpush1.msra.mxu0 0.0
    %2706 = vmatprep.subr.mxu0 0.0
    %2707 = vmatpush1.msra.mxu0 0.0
    %2708 = vmatprep.subr.mxu0 0.0
    %2709 = vmatpush1.msra.mxu0 0.0
    %2710 = vmatprep.subr.mxu0 0.0
    %2711 = vmatpush1.msra.mxu0 0.0
    %2712 = vmatprep.subr.mxu0 0.0
    %2713 = vmatpush1.msra.mxu0 0.0
    %2714 = vmatprep.subr.mxu0 0.0
    %2715 = vmatpush1.msra.mxu0 0.0
    %2716 = vmatprep.subr.mxu0 0.0
    %2717 = vmatpush1.msra.mxu0 0.0
    %2718 = vmatprep.subr.mxu0 0.0
    %2719 = vmatpush1.msra.mxu0 0.0
    %2720 = vmatprep.subr.mxu0 0.0
    %2721 = vmatpush1.msra.mxu0 0.0
    %2722 = vmatprep.subr.mxu0 0.0
    %2723 = vmatpush1.msra.mxu0 0.0
    %2724 = vmatprep.subr.mxu0 0.0
    %2725 = vmatpush1.msra.mxu0 0.0
    %2726 = vmatprep.subr.mxu0 0.0
    %2727 = vmatpush1.msra.mxu0 0.0
    %2728 = vmatprep.subr.mxu0 0.0
    %2729 = vmatpush1.msra.mxu0 0.0
    %2730 = vmatprep.mubr.f32.mxu0 0.0
    %2731 = vmatmul.mubr.f32.gmra.mrb[0].mxu0 %v2661
    %v2732 = vpop.f32.mrb[0].mxu0
    %v2733 = vadd.f32 %v2659, %v2732
    %v2734 = vpop.f32.mrb[0].mxu0
    %2735 = vmatprep.mubr.f32.mxu0 0.0
    %2736 = vmatmul.mubr.f32.gmra.mrb[0].mxu0 %v2664
    %v2737 = vpop.f32.mrb[0].mxu0
    %v2738 = vadd.f32 %v2659, %v2737
    %v2739 = vpop.f32.mrb[0].mxu0
    %2740 = vdwg.mxu0
    %v2741 = vadd.f32 %v2567, %v2733
    %v2742 = vadd.f32 %v2568, %v2738
    %v2743 = vsel %vm177, %v2741, 0.0
    %2744 = vadd.xlane.f32.xlu0 %v2743
    %v2745 = vpop.xlane.xlu0 %2744
    %v2746 = vsel %vm177, %v2742, 0.0
    %2747 = vadd.xlane.f32.xlu0 %v2746
    %v2748 = vpop.xlane.xlu0 %2747
    %v2749 = vmul.f32 %v2745, %v1247
    %v2750 = vmul.f32 %v2748, %v1247
    %v2751 = vsub.f32 %v2741, %v2749
    %v2752 = vsub.f32 %v2742, %v2750
    %v2753 = vmul.f32 %v2751, %v2751
    %v2754 = vmul.f32 %v2752, %v2752
    %v2755 = vsel %vm177, %v2753, 0.0
    %2756 = vadd.xlane.f32.xlu0 %v2755
    %v2757 = vpop.xlane.xlu0 %2756
    %v2758 = vsel %vm177, %v2754, 0.0
    %2759 = vadd.xlane.f32.xlu0 %v2758
    %v2760 = vpop.xlane.xlu0 %2759
    %v2761 = vmul.f32 %v2757, %v1247
    %v2762 = vmul.f32 %v2760, %v1247
    %v2763 = vadd.f32 %v2761, 1e-05
    %v2764 = vadd.f32 %v2762, 1e-05
    %v2765 = vrsqrt.pop %v2763
    %v2766 = vrsqrt.pop %v2764
    %v2767 = vmul.f32 %v2751, %v2765
    %v2768 = vmul.f32 %v2752, %v2766
    %v2769 = vlaneseq
    %v2770 = vshrl.u32 %v2769, 7
    %v2771 = vsub.s32 0, %v2770
    %v2772 = vrot.slane %v1519, %v2771
    %v2773 = vmul.f32 %v2767, %v2772
    %v2774 = vmul.f32 %v2768, %v2772
    %v2775 = vlaneseq
    %v2776 = vshrl.u32 %v2775, 7
    %v2777 = vsub.s32 0, %v2776
    %v2778 = vrot.slane %v1520, %v2777
    %v2779 = vadd.f32 %v2773, %v2778
    %v2780 = vadd.f32 %v2774, %v2778
    %v2781 = vld [vmem:[#allocation2 + $0x2a0] sm:$0x1]
    %v2782 = vld [vmem:[#allocation2 + $0x2a8] sm:$0x1]
    %v2783 = vsel %vm177, %v2779, 0.0
    %2784 = vadd.xlane.f32.xlu0 %v2783
    %v2785 = vpop.xlane.xlu0 %2784
    %v2786 = vsel %vm177, %v2780, 0.0
    %2787 = vadd.xlane.f32.xlu0 %v2786
    %v2788 = vpop.xlane.xlu0 %2787
    %v2789 = vmul.f32 %v2785, %v1247
    %v2790 = vmul.f32 %v2788, %v1247
    %v2791 = vsub.f32 %v2779, %v2789
    %v2792 = vsub.f32 %v2780, %v2790
    %v2793 = vmul.f32 %v2791, %v2791
    %v2794 = vmul.f32 %v2792, %v2792
    %v2795 = vsel %vm177, %v2793, 0.0
    %2796 = vadd.xlane.f32.xlu0 %v2795
    %v2797 = vpop.xlane.xlu0 %2796
    %v2798 = vsel %vm177, %v2794, 0.0
    %2799 = vadd.xlane.f32.xlu0 %v2798
    %v2800 = vpop.xlane.xlu0 %2799
    %v2801 = vmul.f32 %v2797, %v1247
    %v2802 = vmul.f32 %v2800, %v1247
    %v2803 = vadd.f32 %v2801, 1e-05
    %v2804 = vadd.f32 %v2802, 1e-05
    %v2805 = vrsqrt.pop %v2803
    %v2806 = vrsqrt.pop %v2804
    %v2807 = vmul.f32 %v2791, %v2805
    %v2808 = vmul.f32 %v2792, %v2806
    %v2809 = vlaneseq
    %v2810 = vshrl.u32 %v2809, 7
    %v2811 = vsub.s32 0, %v2810
    %v2812 = vrot.slane %v2781, %v2811
    %v2813 = vmul.f32 %v2807, %v2812
    %v2814 = vmul.f32 %v2808, %v2812
    %v2815 = vlaneseq
    %v2816 = vshrl.u32 %v2815, 7
    %v2817 = vsub.s32 0, %v2816
    %v2818 = vrot.slane %v2782, %v2817
    %v2819 = vadd.f32 %v2813, %v2818
    %v2820 = vadd.f32 %v2814, %v2818
    %2821 = vst.msk [vmem:[#allocation5] sm:$0xff] %vm177, %v2819
    %2822 = vst.msk [vmem:[#allocation5 + $0x8] sm:$0xff] %vm177, %v2820
    // Predicated region
    $region14: #{encoder_forward.1} parent=1 // pred_check
      _
    $region15: #{encoder_forward.1} parent=1 // pred_check_branch
      %2824 = sbr.rel (0) target = $region17
    $region16: #{encoder_forward.1} parent=1 // pred_region
      %s2826 = ssub.s32 256, 256
      %2827 = vsyncadd [#allocation4], %s2826
      %s2828 = sshll.u32 [#allocation5], 4
      %s2829 = int_to_ptr.vmem [resolvable:$true] %s2828
      %2834 = dma.vmem_to_hbm [thread:$0]  %s2829, 256, %s2, [#allocation4], 128, 128, 8
    $region17: #{encoder_forward.1} parent=1 // pred_fallthru
      _
    // Predicated region
    $region18: #{encoder_forward.1} parent=1 // pred_check
      _
    $region19: #{encoder_forward.1} parent=1 // pred_check_branch
      %2836 = sbr.rel (0) target = $region21
    $region20: #{encoder_forward.1} parent=1 // pred_region
      %2837 = dma.done [#allocation4], 256
    $region21: #{encoder_forward.1} parent=1 // pred_fallthru
      _
    %2838 = vsyncpa [#allocation3], 1
    %2839 = vsyncpa [#allocation4], 1

</llo_original>
